<compile_context>
chip_gen: v5e
topology: v5e:2x2
jax: 0.10.0
libtpu: 0.0.40
codegen_flags: <defaults>
</compile_context>

<pallas_src>
import functools

import numpy as np
import jax
import jax.numpy as jnp
from jax.experimental import pallas as pl
from jax.experimental.pallas import tpu as pltpu

NEG_SLOPE = 0.01          # PyTorch nn.LeakyReLU default

# Fixed spatial geometry of the decoder: 7x7 -> 7x7 -> 14x14 -> 28x28.
_P1, _N1, _M1 = 9, 90, 63        # padded 9x9 grid (pitch 9), 7*9 pitched rows
_P3, _N3, _M3 = 16, 272, 224     # padded 16x16 grid (pitch 16), 14*16 rows
_HW_OUT = 28 * 28

# (output phase r, window offset d) -> ConvTranspose tap k, for k=4, s=2, p=1.
_KTAB = {(0, 0): 3, (0, 1): 1, (1, 1): 2, (1, 2): 0}


# ---------------------------------------------------------------------------
# Fused Pallas kernel (one program per batch element)
# ---------------------------------------------------------------------------
def _decoder_kernel(z_sm, wlin_ref, blin_ref, w1_ref, b1_ref, w2_ref, b2_ref,
                    w3_ref, b3_ref, g1_ref, g2_ref, g3_ref, o_ref,
                    *, z_dim, hf, out_c):
    f32 = jnp.float32
    b = pl.program_id(0)

    def leaky(x):
        return jnp.where(x >= 0, x, NEG_SLOPE * x)

    def conv(pad_t, w_ref, b_ref, pitch, m):
        # pad_t: (Cin, Npad) = channels x zero-padded flat pixels (row pitch
        # `pitch`). The 9 taps of a 3x3 window are 9 lane-shifted slabs; they
        # are concatenated along sublanes so the whole conv is ONE matmul with
        # K = 9*Cin instead of many tiny K=Cin matmuls.
        slabs = [pad_t[:, dy * pitch + dx: dy * pitch + dx + m]
                 for dy in range(3) for dx in range(3)]
        cols = jnp.concatenate(slabs, axis=0)                    # (9*Cin, m)
        return jnp.dot(w_ref[...], cols,
                       preferred_element_type=f32) + b_ref[...]  # (Cout, m)

    def scatter4(y, g_ref, cout):
        # Interleave the 4 sub-pixel phases into the next layer's zero-padded
        # flat layout with exact 0/1 scatter matrices (MXU matmuls; avoids
        # strided stores / minor-dim reshapes).  Rows with pitch-padding
        # garbage have all-zero scatter columns, so they are annihilated here.
        out = None
        for ph in range(4):
            t = jnp.dot(y[ph * cout:(ph + 1) * cout, :],
                        g_ref[ph].astype(f32), preferred_element_type=f32)
            out = t if out is None else out + t
        return out

    # ---- Linear + LeakyReLU, landing directly in conv1's padded layout ----
    acc = blin_ref[...]                                   # (4hf, 90), bias pre-scattered
    for k in range(z_dim):                                # VPU broadcast-FMA
        acc = acc + z_sm[b, k] * wlin_ref[k]
    pad1 = leaky(acc)                                     # padding stays exactly 0

    # ---- ConvT(4hf -> 2hf, k3, s1, p1) + LeakyReLU  (one K = 9*4hf matmul) ----
    y1 = leaky(conv(pad1, w1_ref, b1_ref, _P1, _M1))      # (2hf, 63)
    pad2 = jnp.dot(y1, g1_ref[...].astype(f32),
                   preferred_element_type=f32)            # (2hf, 90)

    # ---- ConvT(2hf -> hf, k4, s2, p1) + LeakyReLU  (sub-pixel, K = 9*2hf) ----
    y2 = leaky(conv(pad2, w2_ref, b2_ref, _P1, _M1))      # (4*hf, 63) phases (ry,rx,c)
    pad3 = scatter4(y2, g2_ref, hf)                       # (hf, 272)

    # ---- ConvT(hf -> out_c, k4, s2, p1) + Sigmoid (numerically stable) ----
    y3 = conv(pad3, w3_ref, b3_ref, _P3, _M3)             # (4*out_c, 224)
    e = jnp.exp(-jnp.abs(y3))
    y3 = jnp.where(y3 >= 0, 1.0 / (1.0 + e), e / (1.0 + e))
    o_ref[0, :, :] = scatter4(y3, g3_ref, out_c)          # (out_c, 784) lane-dense


# ---------------------------------------------------------------------------
# One-time weight packing (done at init; no runtime glue ops)
# ---------------------------------------------------------------------------
def _subpixel_weight(wt):
    """ConvTranspose2d(k=4, s=2, p=1) weight (Cin, Cout, 4, 4) -> a single
    (4*Cout, 9*Cin) matrix computing all 4 output phases from a 3x3 window over
    the un-dilated, zero-padded input.  Rows ordered (ry, rx, cout)."""
    cin, cout = wt.shape[0], wt.shape[1]
    wt = np.asarray(wt, np.float32)
    w = np.zeros((2, 2, cout, 3, 3, cin), np.float32)
    for (ry, dy), ky in _KTAB.items():
        for (rx, dx), kx in _KTAB.items():
            w[ry, rx, :, dy, dx, :] = wt[:, :, ky, kx].T
    return jnp.asarray(w.reshape(4 * cout, 9 * cin))


def _scatter_mats():
    """Constant 0/1 matrices placing each layer's (phase-major) output columns
    into the next layer's zero-padded flat pixel layout / the final image."""
    g1 = np.zeros((_M1, _N1), np.float32)                  # conv1 -> pad2
    for p in range(_M1):
        if p % _P1 < 7:
            g1[p, p + _P1 + 1] = 1.0

    g2 = np.zeros((4, _M1, _N3), np.float32)               # conv2 phases -> pad3
    for ry in range(2):
        for rx in range(2):
            for p in range(_M1):
                qy, qx = divmod(p, _P1)
                if qx < 7:
                    g2[2 * ry + rx, p,
                       (2 * qy + ry + 1) * _P3 + (2 * qx + rx + 1)] = 1.0

    g3 = np.zeros((4, _M3, _HW_OUT), np.float32)           # conv3 phases -> 28x28
    for ry in range(2):
        for rx in range(2):
            for p in range(_M3):
                qy, qx = divmod(p, _P3)
                if qx < 14:
                    g3[2 * ry + rx, p, (2 * qy + ry) * 28 + (2 * qx + rx)] = 1.0

    # 0/1 values are exact in bf16 -> halves HBM/VMEM bytes of the scatters.
    return (jnp.asarray(g1, jnp.bfloat16), jnp.asarray(g2, jnp.bfloat16),
            jnp.asarray(g3, jnp.bfloat16))


# ---------------------------------------------------------------------------
# Module
# ---------------------------------------------------------------------------
class CausalReservoirDecoderPallas:
    def __init__(self, z_dim, out_channels, num_filters, key):
        self.z_dim = z_dim
        self.out_channels = out_channels
        hf = num_filters
        self.hf = hf
        D = 4 * hf * 7 * 7
        ks = jax.random.split(key, 8)
        s = 0.1
        # Raw parameters (PyTorch conventions: Linear -> ConvTranspose2d x3).
        self.Wlin = (jax.random.normal(ks[0], (z_dim, D)) * s).astype(jnp.float32)
        self.blin = (jax.random.normal(ks[1], (D,)) * s).astype(jnp.float32)
        self.W1 = (jax.random.normal(ks[2], (4 * hf, 2 * hf, 3, 3)) * s).astype(jnp.float32)
        self.b1 = (jax.random.normal(ks[3], (2 * hf,)) * s).astype(jnp.float32)
        self.W2 = (jax.random.normal(ks[4], (2 * hf, hf, 4, 4)) * s).astype(jnp.float32)
        self.b2 = (jax.random.normal(ks[5], (hf,)) * s).astype(jnp.float32)
        self.W3 = (jax.random.normal(ks[6], (hf, out_channels, 4, 4)) * s).astype(jnp.float32)
        self.b3 = (jax.random.normal(ks[7], (out_channels,)) * s).astype(jnp.float32)
        self._pack()

    def _pack(self):
        hf, out_c, z_dim = self.hf, self.out_channels, self.z_dim
        c1 = 4 * hf

        # Linear weight/bias pre-scattered into the padded (C, 9x9) conv1
        # layout (zeros where conv1 expects zero padding).
        w = self.Wlin.reshape(z_dim, c1, 7, 7)
        wpad = jnp.zeros((z_dim, c1, 9, 9), jnp.float32).at[:, :, 1:8, 1:8].set(w)
        self.wlin_r = jnp.pad(wpad.reshape(z_dim, c1, 81),
                              ((0, 0), (0, 0), (0, _N1 - 81)))
        bpad = jnp.zeros((c1, 9, 9), jnp.float32).at[:, 1:8, 1:8].set(
            self.blin.reshape(c1, 7, 7))
        self.blin_r = jnp.pad(bpad.reshape(c1, 81), ((0, 0), (0, _N1 - 81)))

        # ConvT1 (k3,s1,p1) == conv with flipped kernel: one (2hf, 9*4hf) matrix.
        w1f = self.W1[:, :, ::-1, ::-1]                       # [ci, co, dy, dx]
        self.w1d = jnp.transpose(w1f, (1, 2, 3, 0)).reshape(2 * hf, 9 * c1)
        self.b1c = self.b1.reshape(2 * hf, 1)

        # ConvT2 / ConvT3 (k4,s2,p1): sub-pixel packed weights, biases per phase.
        self.w2d = _subpixel_weight(self.W2)                  # (4*hf, 9*2hf)
        self.b2c = jnp.tile(self.b2, 4).reshape(4 * hf, 1)
        self.w3d = _subpixel_weight(self.W3)                  # (4*out_c, 9*hf)
        self.b3c = jnp.tile(self.b3, 4).reshape(4 * out_c, 1)

        self.g1, self.g2, self.g3 = _scatter_mats()

    def __call__(self, z):
        B = z.shape[0]
        out_c, z_dim, hf = self.out_channels, self.z_dim, self.hf

        kernel = functools.partial(_decoder_kernel, z_dim=z_dim, hf=hf,
                                   out_c=out_c)

        def vmem_full(x):
            nd = x.ndim
            return pl.BlockSpec(x.shape, lambda b, _nd=nd: (0,) * _nd)

        weights = (self.wlin_r, self.blin_r, self.w1d, self.b1c, self.w2d,
                   self.b2c, self.w3d, self.b3c, self.g1, self.g2, self.g3)

        out = pl.pallas_call(
            kernel,
            out_shape=jax.ShapeDtypeStruct((B, out_c, _HW_OUT), jnp.float32),
            grid=(B,),                                  # batch-parallel (2 TCs on v7x)
            in_specs=[pl.BlockSpec(memory_space=pltpu.MemorySpace.SMEM)]  # z scalars
                     + [vmem_full(x) for x in weights],
            out_specs=pl.BlockSpec((1, out_c, _HW_OUT), lambda b: (b, 0, 0)),
            compiler_params=pltpu.CompilerParams(
                dimension_semantics=("parallel",),
                vmem_limit_bytes=48 * 1024 * 1024),
        )(z.astype(jnp.float32), *weights)

        return out.reshape(B, out_c, 28, 28)            # NCHW, matching PyTorch

    # pure-JAX reference (correctness check only)
    def reference(self, z):
        B = z.shape[0]
        hf = self.hf
        y = z.astype(jnp.float32) @ self.Wlin + self.blin
        y = jnp.where(y >= 0, y, NEG_SLOPE * y)
        x = y.reshape(B, 4 * hf, 7, 7).transpose(0, 2, 3, 1)

        def ct(x, wt, b, s, p, act):
            k = wt.shape[2]
            weq = jnp.transpose(wt[:, :, ::-1, ::-1], (2, 3, 0, 1))
            out = jax.lax.conv_general_dilated(
                x, weq, window_strides=(1, 1),
                padding=[(k - 1 - p, k - 1 - p)] * 2, lhs_dilation=(s, s),
                dimension_numbers=("NHWC", "HWIO", "NHWC"))
            out = out + b[None, None, None, :]
            if act == "leaky":
                return jnp.where(out >= 0, out, NEG_SLOPE * out)
            return jax.nn.sigmoid(out)

        x = ct(x, self.W1, self.b1, 1, 1, "leaky")
        x = ct(x, self.W2, self.b2, 2, 1, "leaky")
        x = ct(x, self.W3, self.b3, 2, 1, "sigmoid")
        return x.transpose(0, 3, 1, 2)


# ---------------------------------------------------------------------------
if __name__ == "__main__":
    key = jax.random.PRNGKey(0)
    k_param, k_z = jax.random.split(key)

    Z_DIM, OUT_CHANNELS, NUM_FILTERS, BATCH = 32, 4, 8, 2
    model = CausalReservoirDecoderPallas(Z_DIM, OUT_CHANNELS, NUM_FILTERS, k_param)

    z = jax.random.normal(k_z, (BATCH, Z_DIM), dtype=jnp.float32)

    out = jax.block_until_ready(model(z))
    assert out.shape == (BATCH, OUT_CHANNELS, 28, 28), out.shape

    ref = jax.block_until_ready(model.reference(z))
    err = float(jnp.max(jnp.abs(out - ref)))
    assert jnp.allclose(out, ref, rtol=1e-4, atol=1e-4), err

    print("KERNEL_OK")
</pallas_src>

<mosaic_0001>
module attributes {stable_mosaic.version = 11 : i64} {
  func.func @_decoder_kernel(%arg0: i32, %arg1: memref<2x32xf32, #tpu.memory_space<smem>>, %arg2: memref<32x32x90xf32, #tpu.memory_space<vmem>>, %arg3: memref<32x90xf32, #tpu.memory_space<vmem>>, %arg4: memref<16x288xf32, #tpu.memory_space<vmem>>, %arg5: memref<16x1xf32, #tpu.memory_space<vmem>>, %arg6: memref<32x144xf32, #tpu.memory_space<vmem>>, %arg7: memref<32x1xf32, #tpu.memory_space<vmem>>, %arg8: memref<16x72xf32, #tpu.memory_space<vmem>>, %arg9: memref<16x1xf32, #tpu.memory_space<vmem>>, %arg10: memref<63x90xbf16, #tpu.memory_space<vmem>>, %arg11: memref<4x63x272xbf16, #tpu.memory_space<vmem>>, %arg12: memref<4x224x784xbf16, #tpu.memory_space<vmem>>, %arg13: memref<1x4x784xf32, #tpu.memory_space<vmem>>) attributes {dimension_semantics = [#tpu.dimension_semantics<parallel>], iteration_bounds = array<i64: 2>, scalar_prefetch = 0 : i64, scratch_operands = 0 : i64, tpu.core_type = #tpu.core_type<tc>, window_params = [{transform_indices = @transform_0, window_bounds = array<i64: 2, 32>}, {pipeline_mode = #tpu.pipeline_mode<synchronous>, transform_indices = @transform_1, window_bounds = array<i64: 32, 32, 90>}, {pipeline_mode = #tpu.pipeline_mode<synchronous>, transform_indices = @transform_2, window_bounds = array<i64: 32, 90>}, {pipeline_mode = #tpu.pipeline_mode<synchronous>, transform_indices = @transform_3, window_bounds = array<i64: 16, 288>}, {pipeline_mode = #tpu.pipeline_mode<synchronous>, transform_indices = @transform_4, window_bounds = array<i64: 16, 1>}, {pipeline_mode = #tpu.pipeline_mode<synchronous>, transform_indices = @transform_5, window_bounds = array<i64: 32, 144>}, {pipeline_mode = #tpu.pipeline_mode<synchronous>, transform_indices = @transform_6, window_bounds = array<i64: 32, 1>}, {pipeline_mode = #tpu.pipeline_mode<synchronous>, transform_indices = @transform_7, window_bounds = array<i64: 16, 72>}, {pipeline_mode = #tpu.pipeline_mode<synchronous>, transform_indices = @transform_8, window_bounds = array<i64: 16, 1>}, {pipeline_mode = #tpu.pipeline_mode<synchronous>, transform_indices = @transform_9, window_bounds = array<i64: 63, 90>}, {pipeline_mode = #tpu.pipeline_mode<synchronous>, transform_indices = @transform_10, window_bounds = array<i64: 4, 63, 272>}, {pipeline_mode = #tpu.pipeline_mode<synchronous>, transform_indices = @transform_11, window_bounds = array<i64: 4, 224, 784>}, {transform_indices = @transform_12, window_bounds = array<i64: 1, 4, 784>}]} {
    %c0 = arith.constant 0 : index
    %c0_0 = arith.constant 0 : index
    %0 = vector.load %arg3[%c0, %c0_0] : memref<32x90xf32, #tpu.memory_space<vmem>>, vector<32x90xf32>
    %1 = arith.index_cast %arg0 : i32 to index
    %c0_1 = arith.constant 0 : index
    %2 = memref.load %arg1[%1, %c0_1] : memref<2x32xf32, #tpu.memory_space<smem>>
    %c0_2 = arith.constant 0 : index
    %c0_3 = arith.constant 0 : index
    %c0_4 = arith.constant 0 : index
    %3 = vector.load %arg2[%c0_2, %c0_3, %c0_4] : memref<32x32x90xf32, #tpu.memory_space<vmem>>, vector<1x32x90xf32>
    %4 = vector.shape_cast %3 : vector<1x32x90xf32> to vector<32x90xf32>
    %5 = vector.broadcast %2 : f32 to vector<32x90xf32>
    %6 = arith.mulf %5, %4 : vector<32x90xf32>
    %7 = arith.addf %0, %6 : vector<32x90xf32>
    %8 = arith.index_cast %arg0 : i32 to index
    %c1 = arith.constant 1 : index
    %9 = memref.load %arg1[%8, %c1] : memref<2x32xf32, #tpu.memory_space<smem>>
    %c1_5 = arith.constant 1 : index
    %c0_6 = arith.constant 0 : index
    %c0_7 = arith.constant 0 : index
    %10 = vector.load %arg2[%c1_5, %c0_6, %c0_7] : memref<32x32x90xf32, #tpu.memory_space<vmem>>, vector<1x32x90xf32>
    %11 = vector.shape_cast %10 : vector<1x32x90xf32> to vector<32x90xf32>
    %12 = vector.broadcast %9 : f32 to vector<32x90xf32>
    %13 = arith.mulf %12, %11 : vector<32x90xf32>
    %14 = arith.addf %7, %13 : vector<32x90xf32>
    %15 = arith.index_cast %arg0 : i32 to index
    %c2 = arith.constant 2 : index
    %16 = memref.load %arg1[%15, %c2] : memref<2x32xf32, #tpu.memory_space<smem>>
    %c2_8 = arith.constant 2 : index
    %c0_9 = arith.constant 0 : index
    %c0_10 = arith.constant 0 : index
    %17 = vector.load %arg2[%c2_8, %c0_9, %c0_10] : memref<32x32x90xf32, #tpu.memory_space<vmem>>, vector<1x32x90xf32>
    %18 = vector.shape_cast %17 : vector<1x32x90xf32> to vector<32x90xf32>
    %19 = vector.broadcast %16 : f32 to vector<32x90xf32>
    %20 = arith.mulf %19, %18 : vector<32x90xf32>
    %21 = arith.addf %14, %20 : vector<32x90xf32>
    %22 = arith.index_cast %arg0 : i32 to index
    %c3 = arith.constant 3 : index
    %23 = memref.load %arg1[%22, %c3] : memref<2x32xf32, #tpu.memory_space<smem>>
    %c3_11 = arith.constant 3 : index
    %c0_12 = arith.constant 0 : index
    %c0_13 = arith.constant 0 : index
    %24 = vector.load %arg2[%c3_11, %c0_12, %c0_13] : memref<32x32x90xf32, #tpu.memory_space<vmem>>, vector<1x32x90xf32>
    %25 = vector.shape_cast %24 : vector<1x32x90xf32> to vector<32x90xf32>
    %26 = vector.broadcast %23 : f32 to vector<32x90xf32>
    %27 = arith.mulf %26, %25 : vector<32x90xf32>
    %28 = arith.addf %21, %27 : vector<32x90xf32>
    %29 = arith.index_cast %arg0 : i32 to index
    %c4 = arith.constant 4 : index
    %30 = memref.load %arg1[%29, %c4] : memref<2x32xf32, #tpu.memory_space<smem>>
    %c4_14 = arith.constant 4 : index
    %c0_15 = arith.constant 0 : index
    %c0_16 = arith.constant 0 : index
    %31 = vector.load %arg2[%c4_14, %c0_15, %c0_16] : memref<32x32x90xf32, #tpu.memory_space<vmem>>, vector<1x32x90xf32>
    %32 = vector.shape_cast %31 : vector<1x32x90xf32> to vector<32x90xf32>
    %33 = vector.broadcast %30 : f32 to vector<32x90xf32>
    %34 = arith.mulf %33, %32 : vector<32x90xf32>
    %35 = arith.addf %28, %34 : vector<32x90xf32>
    %36 = arith.index_cast %arg0 : i32 to index
    %c5 = arith.constant 5 : index
    %37 = memref.load %arg1[%36, %c5] : memref<2x32xf32, #tpu.memory_space<smem>>
    %c5_17 = arith.constant 5 : index
    %c0_18 = arith.constant 0 : index
    %c0_19 = arith.constant 0 : index
    %38 = vector.load %arg2[%c5_17, %c0_18, %c0_19] : memref<32x32x90xf32, #tpu.memory_space<vmem>>, vector<1x32x90xf32>
    %39 = vector.shape_cast %38 : vector<1x32x90xf32> to vector<32x90xf32>
    %40 = vector.broadcast %37 : f32 to vector<32x90xf32>
    %41 = arith.mulf %40, %39 : vector<32x90xf32>
    %42 = arith.addf %35, %41 : vector<32x90xf32>
    %43 = arith.index_cast %arg0 : i32 to index
    %c6 = arith.constant 6 : index
    %44 = memref.load %arg1[%43, %c6] : memref<2x32xf32, #tpu.memory_space<smem>>
    %c6_20 = arith.constant 6 : index
    %c0_21 = arith.constant 0 : index
    %c0_22 = arith.constant 0 : index
    %45 = vector.load %arg2[%c6_20, %c0_21, %c0_22] : memref<32x32x90xf32, #tpu.memory_space<vmem>>, vector<1x32x90xf32>
    %46 = vector.shape_cast %45 : vector<1x32x90xf32> to vector<32x90xf32>
    %47 = vector.broadcast %44 : f32 to vector<32x90xf32>
    %48 = arith.mulf %47, %46 : vector<32x90xf32>
    %49 = arith.addf %42, %48 : vector<32x90xf32>
    %50 = arith.index_cast %arg0 : i32 to index
    %c7 = arith.constant 7 : index
    %51 = memref.load %arg1[%50, %c7] : memref<2x32xf32, #tpu.memory_space<smem>>
    %c7_23 = arith.constant 7 : index
    %c0_24 = arith.constant 0 : index
    %c0_25 = arith.constant 0 : index
    %52 = vector.load %arg2[%c7_23, %c0_24, %c0_25] : memref<32x32x90xf32, #tpu.memory_space<vmem>>, vector<1x32x90xf32>
    %53 = vector.shape_cast %52 : vector<1x32x90xf32> to vector<32x90xf32>
    %54 = vector.broadcast %51 : f32 to vector<32x90xf32>
    %55 = arith.mulf %54, %53 : vector<32x90xf32>
    %56 = arith.addf %49, %55 : vector<32x90xf32>
    %57 = arith.index_cast %arg0 : i32 to index
    %c8 = arith.constant 8 : index
    %58 = memref.load %arg1[%57, %c8] : memref<2x32xf32, #tpu.memory_space<smem>>
    %c8_26 = arith.constant 8 : index
    %c0_27 = arith.constant 0 : index
    %c0_28 = arith.constant 0 : index
    %59 = vector.load %arg2[%c8_26, %c0_27, %c0_28] : memref<32x32x90xf32, #tpu.memory_space<vmem>>, vector<1x32x90xf32>
    %60 = vector.shape_cast %59 : vector<1x32x90xf32> to vector<32x90xf32>
    %61 = vector.broadcast %58 : f32 to vector<32x90xf32>
    %62 = arith.mulf %61, %60 : vector<32x90xf32>
    %63 = arith.addf %56, %62 : vector<32x90xf32>
    %64 = arith.index_cast %arg0 : i32 to index
    %c9 = arith.constant 9 : index
    %65 = memref.load %arg1[%64, %c9] : memref<2x32xf32, #tpu.memory_space<smem>>
    %c9_29 = arith.constant 9 : index
    %c0_30 = arith.constant 0 : index
    %c0_31 = arith.constant 0 : index
    %66 = vector.load %arg2[%c9_29, %c0_30, %c0_31] : memref<32x32x90xf32, #tpu.memory_space<vmem>>, vector<1x32x90xf32>
    %67 = vector.shape_cast %66 : vector<1x32x90xf32> to vector<32x90xf32>
    %68 = vector.broadcast %65 : f32 to vector<32x90xf32>
    %69 = arith.mulf %68, %67 : vector<32x90xf32>
    %70 = arith.addf %63, %69 : vector<32x90xf32>
    %71 = arith.index_cast %arg0 : i32 to index
    %c10 = arith.constant 10 : index
    %72 = memref.load %arg1[%71, %c10] : memref<2x32xf32, #tpu.memory_space<smem>>
    %c10_32 = arith.constant 10 : index
    %c0_33 = arith.constant 0 : index
    %c0_34 = arith.constant 0 : index
    %73 = vector.load %arg2[%c10_32, %c0_33, %c0_34] : memref<32x32x90xf32, #tpu.memory_space<vmem>>, vector<1x32x90xf32>
    %74 = vector.shape_cast %73 : vector<1x32x90xf32> to vector<32x90xf32>
    %75 = vector.broadcast %72 : f32 to vector<32x90xf32>
    %76 = arith.mulf %75, %74 : vector<32x90xf32>
    %77 = arith.addf %70, %76 : vector<32x90xf32>
    %78 = arith.index_cast %arg0 : i32 to index
    %c11 = arith.constant 11 : index
    %79 = memref.load %arg1[%78, %c11] : memref<2x32xf32, #tpu.memory_space<smem>>
    %c11_35 = arith.constant 11 : index
    %c0_36 = arith.constant 0 : index
    %c0_37 = arith.constant 0 : index
    %80 = vector.load %arg2[%c11_35, %c0_36, %c0_37] : memref<32x32x90xf32, #tpu.memory_space<vmem>>, vector<1x32x90xf32>
    %81 = vector.shape_cast %80 : vector<1x32x90xf32> to vector<32x90xf32>
    %82 = vector.broadcast %79 : f32 to vector<32x90xf32>
    %83 = arith.mulf %82, %81 : vector<32x90xf32>
    %84 = arith.addf %77, %83 : vector<32x90xf32>
    %85 = arith.index_cast %arg0 : i32 to index
    %c12 = arith.constant 12 : index
    %86 = memref.load %arg1[%85, %c12] : memref<2x32xf32, #tpu.memory_space<smem>>
    %c12_38 = arith.constant 12 : index
    %c0_39 = arith.constant 0 : index
    %c0_40 = arith.constant 0 : index
    %87 = vector.load %arg2[%c12_38, %c0_39, %c0_40] : memref<32x32x90xf32, #tpu.memory_space<vmem>>, vector<1x32x90xf32>
    %88 = vector.shape_cast %87 : vector<1x32x90xf32> to vector<32x90xf32>
    %89 = vector.broadcast %86 : f32 to vector<32x90xf32>
    %90 = arith.mulf %89, %88 : vector<32x90xf32>
    %91 = arith.addf %84, %90 : vector<32x90xf32>
    %92 = arith.index_cast %arg0 : i32 to index
    %c13 = arith.constant 13 : index
    %93 = memref.load %arg1[%92, %c13] : memref<2x32xf32, #tpu.memory_space<smem>>
    %c13_41 = arith.constant 13 : index
    %c0_42 = arith.constant 0 : index
    %c0_43 = arith.constant 0 : index
    %94 = vector.load %arg2[%c13_41, %c0_42, %c0_43] : memref<32x32x90xf32, #tpu.memory_space<vmem>>, vector<1x32x90xf32>
    %95 = vector.shape_cast %94 : vector<1x32x90xf32> to vector<32x90xf32>
    %96 = vector.broadcast %93 : f32 to vector<32x90xf32>
    %97 = arith.mulf %96, %95 : vector<32x90xf32>
    %98 = arith.addf %91, %97 : vector<32x90xf32>
    %99 = arith.index_cast %arg0 : i32 to index
    %c14 = arith.constant 14 : index
    %100 = memref.load %arg1[%99, %c14] : memref<2x32xf32, #tpu.memory_space<smem>>
    %c14_44 = arith.constant 14 : index
    %c0_45 = arith.constant 0 : index
    %c0_46 = arith.constant 0 : index
    %101 = vector.load %arg2[%c14_44, %c0_45, %c0_46] : memref<32x32x90xf32, #tpu.memory_space<vmem>>, vector<1x32x90xf32>
    %102 = vector.shape_cast %101 : vector<1x32x90xf32> to vector<32x90xf32>
    %103 = vector.broadcast %100 : f32 to vector<32x90xf32>
    %104 = arith.mulf %103, %102 : vector<32x90xf32>
    %105 = arith.addf %98, %104 : vector<32x90xf32>
    %106 = arith.index_cast %arg0 : i32 to index
    %c15 = arith.constant 15 : index
    %107 = memref.load %arg1[%106, %c15] : memref<2x32xf32, #tpu.memory_space<smem>>
    %c15_47 = arith.constant 15 : index
    %c0_48 = arith.constant 0 : index
    %c0_49 = arith.constant 0 : index
    %108 = vector.load %arg2[%c15_47, %c0_48, %c0_49] : memref<32x32x90xf32, #tpu.memory_space<vmem>>, vector<1x32x90xf32>
    %109 = vector.shape_cast %108 : vector<1x32x90xf32> to vector<32x90xf32>
    %110 = vector.broadcast %107 : f32 to vector<32x90xf32>
    %111 = arith.mulf %110, %109 : vector<32x90xf32>
    %112 = arith.addf %105, %111 : vector<32x90xf32>
    %113 = arith.index_cast %arg0 : i32 to index
    %c16 = arith.constant 16 : index
    %114 = memref.load %arg1[%113, %c16] : memref<2x32xf32, #tpu.memory_space<smem>>
    %c16_50 = arith.constant 16 : index
    %c0_51 = arith.constant 0 : index
    %c0_52 = arith.constant 0 : index
    %115 = vector.load %arg2[%c16_50, %c0_51, %c0_52] : memref<32x32x90xf32, #tpu.memory_space<vmem>>, vector<1x32x90xf32>
    %116 = vector.shape_cast %115 : vector<1x32x90xf32> to vector<32x90xf32>
    %117 = vector.broadcast %114 : f32 to vector<32x90xf32>
    %118 = arith.mulf %117, %116 : vector<32x90xf32>
    %119 = arith.addf %112, %118 : vector<32x90xf32>
    %120 = arith.index_cast %arg0 : i32 to index
    %c17 = arith.constant 17 : index
    %121 = memref.load %arg1[%120, %c17] : memref<2x32xf32, #tpu.memory_space<smem>>
    %c17_53 = arith.constant 17 : index
    %c0_54 = arith.constant 0 : index
    %c0_55 = arith.constant 0 : index
    %122 = vector.load %arg2[%c17_53, %c0_54, %c0_55] : memref<32x32x90xf32, #tpu.memory_space<vmem>>, vector<1x32x90xf32>
    %123 = vector.shape_cast %122 : vector<1x32x90xf32> to vector<32x90xf32>
    %124 = vector.broadcast %121 : f32 to vector<32x90xf32>
    %125 = arith.mulf %124, %123 : vector<32x90xf32>
    %126 = arith.addf %119, %125 : vector<32x90xf32>
    %127 = arith.index_cast %arg0 : i32 to index
    %c18 = arith.constant 18 : index
    %128 = memref.load %arg1[%127, %c18] : memref<2x32xf32, #tpu.memory_space<smem>>
    %c18_56 = arith.constant 18 : index
    %c0_57 = arith.constant 0 : index
    %c0_58 = arith.constant 0 : index
    %129 = vector.load %arg2[%c18_56, %c0_57, %c0_58] : memref<32x32x90xf32, #tpu.memory_space<vmem>>, vector<1x32x90xf32>
    %130 = vector.shape_cast %129 : vector<1x32x90xf32> to vector<32x90xf32>
    %131 = vector.broadcast %128 : f32 to vector<32x90xf32>
    %132 = arith.mulf %131, %130 : vector<32x90xf32>
    %133 = arith.addf %126, %132 : vector<32x90xf32>
    %134 = arith.index_cast %arg0 : i32 to index
    %c19 = arith.constant 19 : index
    %135 = memref.load %arg1[%134, %c19] : memref<2x32xf32, #tpu.memory_space<smem>>
    %c19_59 = arith.constant 19 : index
    %c0_60 = arith.constant 0 : index
    %c0_61 = arith.constant 0 : index
    %136 = vector.load %arg2[%c19_59, %c0_60, %c0_61] : memref<32x32x90xf32, #tpu.memory_space<vmem>>, vector<1x32x90xf32>
    %137 = vector.shape_cast %136 : vector<1x32x90xf32> to vector<32x90xf32>
    %138 = vector.broadcast %135 : f32 to vector<32x90xf32>
    %139 = arith.mulf %138, %137 : vector<32x90xf32>
    %140 = arith.addf %133, %139 : vector<32x90xf32>
    %141 = arith.index_cast %arg0 : i32 to index
    %c20 = arith.constant 20 : index
    %142 = memref.load %arg1[%141, %c20] : memref<2x32xf32, #tpu.memory_space<smem>>
    %c20_62 = arith.constant 20 : index
    %c0_63 = arith.constant 0 : index
    %c0_64 = arith.constant 0 : index
    %143 = vector.load %arg2[%c20_62, %c0_63, %c0_64] : memref<32x32x90xf32, #tpu.memory_space<vmem>>, vector<1x32x90xf32>
    %144 = vector.shape_cast %143 : vector<1x32x90xf32> to vector<32x90xf32>
    %145 = vector.broadcast %142 : f32 to vector<32x90xf32>
    %146 = arith.mulf %145, %144 : vector<32x90xf32>
    %147 = arith.addf %140, %146 : vector<32x90xf32>
    %148 = arith.index_cast %arg0 : i32 to index
    %c21 = arith.constant 21 : index
    %149 = memref.load %arg1[%148, %c21] : memref<2x32xf32, #tpu.memory_space<smem>>
    %c21_65 = arith.constant 21 : index
    %c0_66 = arith.constant 0 : index
    %c0_67 = arith.constant 0 : index
    %150 = vector.load %arg2[%c21_65, %c0_66, %c0_67] : memref<32x32x90xf32, #tpu.memory_space<vmem>>, vector<1x32x90xf32>
    %151 = vector.shape_cast %150 : vector<1x32x90xf32> to vector<32x90xf32>
    %152 = vector.broadcast %149 : f32 to vector<32x90xf32>
    %153 = arith.mulf %152, %151 : vector<32x90xf32>
    %154 = arith.addf %147, %153 : vector<32x90xf32>
    %155 = arith.index_cast %arg0 : i32 to index
    %c22 = arith.constant 22 : index
    %156 = memref.load %arg1[%155, %c22] : memref<2x32xf32, #tpu.memory_space<smem>>
    %c22_68 = arith.constant 22 : index
    %c0_69 = arith.constant 0 : index
    %c0_70 = arith.constant 0 : index
    %157 = vector.load %arg2[%c22_68, %c0_69, %c0_70] : memref<32x32x90xf32, #tpu.memory_space<vmem>>, vector<1x32x90xf32>
    %158 = vector.shape_cast %157 : vector<1x32x90xf32> to vector<32x90xf32>
    %159 = vector.broadcast %156 : f32 to vector<32x90xf32>
    %160 = arith.mulf %159, %158 : vector<32x90xf32>
    %161 = arith.addf %154, %160 : vector<32x90xf32>
    %162 = arith.index_cast %arg0 : i32 to index
    %c23 = arith.constant 23 : index
    %163 = memref.load %arg1[%162, %c23] : memref<2x32xf32, #tpu.memory_space<smem>>
    %c23_71 = arith.constant 23 : index
    %c0_72 = arith.constant 0 : index
    %c0_73 = arith.constant 0 : index
    %164 = vector.load %arg2[%c23_71, %c0_72, %c0_73] : memref<32x32x90xf32, #tpu.memory_space<vmem>>, vector<1x32x90xf32>
    %165 = vector.shape_cast %164 : vector<1x32x90xf32> to vector<32x90xf32>
    %166 = vector.broadcast %163 : f32 to vector<32x90xf32>
    %167 = arith.mulf %166, %165 : vector<32x90xf32>
    %168 = arith.addf %161, %167 : vector<32x90xf32>
    %169 = arith.index_cast %arg0 : i32 to index
    %c24 = arith.constant 24 : index
    %170 = memref.load %arg1[%169, %c24] : memref<2x32xf32, #tpu.memory_space<smem>>
    %c24_74 = arith.constant 24 : index
    %c0_75 = arith.constant 0 : index
    %c0_76 = arith.constant 0 : index
    %171 = vector.load %arg2[%c24_74, %c0_75, %c0_76] : memref<32x32x90xf32, #tpu.memory_space<vmem>>, vector<1x32x90xf32>
    %172 = vector.shape_cast %171 : vector<1x32x90xf32> to vector<32x90xf32>
    %173 = vector.broadcast %170 : f32 to vector<32x90xf32>
    %174 = arith.mulf %173, %172 : vector<32x90xf32>
    %175 = arith.addf %168, %174 : vector<32x90xf32>
    %176 = arith.index_cast %arg0 : i32 to index
    %c25 = arith.constant 25 : index
    %177 = memref.load %arg1[%176, %c25] : memref<2x32xf32, #tpu.memory_space<smem>>
    %c25_77 = arith.constant 25 : index
    %c0_78 = arith.constant 0 : index
    %c0_79 = arith.constant 0 : index
    %178 = vector.load %arg2[%c25_77, %c0_78, %c0_79] : memref<32x32x90xf32, #tpu.memory_space<vmem>>, vector<1x32x90xf32>
    %179 = vector.shape_cast %178 : vector<1x32x90xf32> to vector<32x90xf32>
    %180 = vector.broadcast %177 : f32 to vector<32x90xf32>
    %181 = arith.mulf %180, %179 : vector<32x90xf32>
    %182 = arith.addf %175, %181 : vector<32x90xf32>
    %183 = arith.index_cast %arg0 : i32 to index
    %c26 = arith.constant 26 : index
    %184 = memref.load %arg1[%183, %c26] : memref<2x32xf32, #tpu.memory_space<smem>>
    %c26_80 = arith.constant 26 : index
    %c0_81 = arith.constant 0 : index
    %c0_82 = arith.constant 0 : index
    %185 = vector.load %arg2[%c26_80, %c0_81, %c0_82] : memref<32x32x90xf32, #tpu.memory_space<vmem>>, vector<1x32x90xf32>
    %186 = vector.shape_cast %185 : vector<1x32x90xf32> to vector<32x90xf32>
    %187 = vector.broadcast %184 : f32 to vector<32x90xf32>
    %188 = arith.mulf %187, %186 : vector<32x90xf32>
    %189 = arith.addf %182, %188 : vector<32x90xf32>
    %190 = arith.index_cast %arg0 : i32 to index
    %c27 = arith.constant 27 : index
    %191 = memref.load %arg1[%190, %c27] : memref<2x32xf32, #tpu.memory_space<smem>>
    %c27_83 = arith.constant 27 : index
    %c0_84 = arith.constant 0 : index
    %c0_85 = arith.constant 0 : index
    %192 = vector.load %arg2[%c27_83, %c0_84, %c0_85] : memref<32x32x90xf32, #tpu.memory_space<vmem>>, vector<1x32x90xf32>
    %193 = vector.shape_cast %192 : vector<1x32x90xf32> to vector<32x90xf32>
    %194 = vector.broadcast %191 : f32 to vector<32x90xf32>
    %195 = arith.mulf %194, %193 : vector<32x90xf32>
    %196 = arith.addf %189, %195 : vector<32x90xf32>
    %197 = arith.index_cast %arg0 : i32 to index
    %c28 = arith.constant 28 : index
    %198 = memref.load %arg1[%197, %c28] : memref<2x32xf32, #tpu.memory_space<smem>>
    %c28_86 = arith.constant 28 : index
    %c0_87 = arith.constant 0 : index
    %c0_88 = arith.constant 0 : index
    %199 = vector.load %arg2[%c28_86, %c0_87, %c0_88] : memref<32x32x90xf32, #tpu.memory_space<vmem>>, vector<1x32x90xf32>
    %200 = vector.shape_cast %199 : vector<1x32x90xf32> to vector<32x90xf32>
    %201 = vector.broadcast %198 : f32 to vector<32x90xf32>
    %202 = arith.mulf %201, %200 : vector<32x90xf32>
    %203 = arith.addf %196, %202 : vector<32x90xf32>
    %204 = arith.index_cast %arg0 : i32 to index
    %c29 = arith.constant 29 : index
    %205 = memref.load %arg1[%204, %c29] : memref<2x32xf32, #tpu.memory_space<smem>>
    %c29_89 = arith.constant 29 : index
    %c0_90 = arith.constant 0 : index
    %c0_91 = arith.constant 0 : index
    %206 = vector.load %arg2[%c29_89, %c0_90, %c0_91] : memref<32x32x90xf32, #tpu.memory_space<vmem>>, vector<1x32x90xf32>
    %207 = vector.shape_cast %206 : vector<1x32x90xf32> to vector<32x90xf32>
    %208 = vector.broadcast %205 : f32 to vector<32x90xf32>
    %209 = arith.mulf %208, %207 : vector<32x90xf32>
    %210 = arith.addf %203, %209 : vector<32x90xf32>
    %211 = arith.index_cast %arg0 : i32 to index
    %c30 = arith.constant 30 : index
    %212 = memref.load %arg1[%211, %c30] : memref<2x32xf32, #tpu.memory_space<smem>>
    %c30_92 = arith.constant 30 : index
    %c0_93 = arith.constant 0 : index
    %c0_94 = arith.constant 0 : index
    %213 = vector.load %arg2[%c30_92, %c0_93, %c0_94] : memref<32x32x90xf32, #tpu.memory_space<vmem>>, vector<1x32x90xf32>
    %214 = vector.shape_cast %213 : vector<1x32x90xf32> to vector<32x90xf32>
    %215 = vector.broadcast %212 : f32 to vector<32x90xf32>
    %216 = arith.mulf %215, %214 : vector<32x90xf32>
    %217 = arith.addf %210, %216 : vector<32x90xf32>
    %218 = arith.index_cast %arg0 : i32 to index
    %c31 = arith.constant 31 : index
    %219 = memref.load %arg1[%218, %c31] : memref<2x32xf32, #tpu.memory_space<smem>>
    %c31_95 = arith.constant 31 : index
    %c0_96 = arith.constant 0 : index
    %c0_97 = arith.constant 0 : index
    %220 = vector.load %arg2[%c31_95, %c0_96, %c0_97] : memref<32x32x90xf32, #tpu.memory_space<vmem>>, vector<1x32x90xf32>
    %221 = vector.shape_cast %220 : vector<1x32x90xf32> to vector<32x90xf32>
    %222 = vector.broadcast %219 : f32 to vector<32x90xf32>
    %223 = arith.mulf %222, %221 : vector<32x90xf32>
    %224 = arith.addf %217, %223 : vector<32x90xf32>
    %cst = arith.constant 0.000000e+00 : f32
    %225 = vector.broadcast %cst : f32 to vector<32x90xf32>
    %226 = arith.cmpf oge, %224, %225 : vector<32x90xf32>
    %cst_98 = arith.constant 0.00999999977 : f32
    %227 = vector.broadcast %cst_98 : f32 to vector<32x90xf32>
    %228 = arith.mulf %227, %224 : vector<32x90xf32>
    %229 = arith.select %226, %224, %228 : vector<32x90xi1>, vector<32x90xf32>
    %230 = vector.extract_strided_slice %229 {offsets = [0, 0], sizes = [32, 63], strides = [1, 1]} : vector<32x90xf32> to vector<32x63xf32>
    %231 = vector.extract_strided_slice %229 {offsets = [0, 1], sizes = [32, 63], strides = [1, 1]} : vector<32x90xf32> to vector<32x63xf32>
    %232 = vector.extract_strided_slice %229 {offsets = [0, 2], sizes = [32, 63], strides = [1, 1]} : vector<32x90xf32> to vector<32x63xf32>
    %233 = vector.extract_strided_slice %229 {offsets = [0, 9], sizes = [32, 63], strides = [1, 1]} : vector<32x90xf32> to vector<32x63xf32>
    %234 = vector.extract_strided_slice %229 {offsets = [0, 10], sizes = [32, 63], strides = [1, 1]} : vector<32x90xf32> to vector<32x63xf32>
    %235 = vector.extract_strided_slice %229 {offsets = [0, 11], sizes = [32, 63], strides = [1, 1]} : vector<32x90xf32> to vector<32x63xf32>
    %236 = vector.extract_strided_slice %229 {offsets = [0, 18], sizes = [32, 63], strides = [1, 1]} : vector<32x90xf32> to vector<32x63xf32>
    %237 = vector.extract_strided_slice %229 {offsets = [0, 19], sizes = [32, 63], strides = [1, 1]} : vector<32x90xf32> to vector<32x63xf32>
    %238 = vector.extract_strided_slice %229 {offsets = [0, 20], sizes = [32, 63], strides = [1, 1]} : vector<32x90xf32> to vector<32x63xf32>
    %239 = tpu.concatenate %230, %231, %232, %233, %234, %235, %236, %237, %238 in 0 : vector<32x63xf32>, vector<32x63xf32>, vector<32x63xf32>, vector<32x63xf32>, vector<32x63xf32>, vector<32x63xf32>, vector<32x63xf32>, vector<32x63xf32>, vector<32x63xf32> -> vector<288x63xf32>
    %c0_99 = arith.constant 0 : index
    %c0_100 = arith.constant 0 : index
    %240 = vector.load %arg4[%c0_99, %c0_100] : memref<16x288xf32, #tpu.memory_space<vmem>>, vector<16x288xf32>
    %cst_101 = arith.constant dense<0.000000e+00> : vector<16x63xf32>
    %241 = tpu.matmul %240, %239, %cst_101 {dimension_numbers = #tpu.dot_dimension_numbers<[1], [0], [0], [1], [0, 0, 1, 1], [], []>} : vector<16x288xf32>, vector<288x63xf32>, vector<16x63xf32> -> vector<16x63xf32>
    %c0_102 = arith.constant 0 : index
    %c0_103 = arith.constant 0 : index
    %242 = vector.load %arg5[%c0_102, %c0_103] : memref<16x1xf32, #tpu.memory_space<vmem>>, vector<16x1xf32>
    %243 = vector.broadcast %242 : vector<16x1xf32> to vector<16x63xf32>
    %244 = arith.addf %241, %243 : vector<16x63xf32>
    %cst_104 = arith.constant 0.000000e+00 : f32
    %245 = vector.broadcast %cst_104 : f32 to vector<16x63xf32>
    %246 = arith.cmpf oge, %244, %245 : vector<16x63xf32>
    %cst_105 = arith.constant 0.00999999977 : f32
    %247 = vector.broadcast %cst_105 : f32 to vector<16x63xf32>
    %248 = arith.mulf %247, %244 : vector<16x63xf32>
    %249 = arith.select %246, %244, %248 : vector<16x63xi1>, vector<16x63xf32>
    %c0_106 = arith.constant 0 : index
    %c0_107 = arith.constant 0 : index
    %250 = vector.load %arg10[%c0_106, %c0_107] : memref<63x90xbf16, #tpu.memory_space<vmem>>, vector<63x90xbf16>
    %251 = arith.extf %250 : vector<63x90xbf16> to vector<63x90xf32>
    %cst_108 = arith.constant dense<0.000000e+00> : vector<16x90xf32>
    %252 = tpu.matmul %249, %251, %cst_108 {dimension_numbers = #tpu.dot_dimension_numbers<[1], [0], [0], [1], [0, 0, 1, 1], [], []>} : vector<16x63xf32>, vector<63x90xf32>, vector<16x90xf32> -> vector<16x90xf32>
    %253 = vector.extract_strided_slice %252 {offsets = [0, 0], sizes = [16, 63], strides = [1, 1]} : vector<16x90xf32> to vector<16x63xf32>
    %254 = vector.extract_strided_slice %252 {offsets = [0, 1], sizes = [16, 63], strides = [1, 1]} : vector<16x90xf32> to vector<16x63xf32>
    %255 = vector.extract_strided_slice %252 {offsets = [0, 2], sizes = [16, 63], strides = [1, 1]} : vector<16x90xf32> to vector<16x63xf32>
    %256 = vector.extract_strided_slice %252 {offsets = [0, 9], sizes = [16, 63], strides = [1, 1]} : vector<16x90xf32> to vector<16x63xf32>
    %257 = vector.extract_strided_slice %252 {offsets = [0, 10], sizes = [16, 63], strides = [1, 1]} : vector<16x90xf32> to vector<16x63xf32>
    %258 = vector.extract_strided_slice %252 {offsets = [0, 11], sizes = [16, 63], strides = [1, 1]} : vector<16x90xf32> to vector<16x63xf32>
    %259 = vector.extract_strided_slice %252 {offsets = [0, 18], sizes = [16, 63], strides = [1, 1]} : vector<16x90xf32> to vector<16x63xf32>
    %260 = vector.extract_strided_slice %252 {offsets = [0, 19], sizes = [16, 63], strides = [1, 1]} : vector<16x90xf32> to vector<16x63xf32>
    %261 = vector.extract_strided_slice %252 {offsets = [0, 20], sizes = [16, 63], strides = [1, 1]} : vector<16x90xf32> to vector<16x63xf32>
    %262 = tpu.concatenate %253, %254, %255, %256, %257, %258, %259, %260, %261 in 0 : vector<16x63xf32>, vector<16x63xf32>, vector<16x63xf32>, vector<16x63xf32>, vector<16x63xf32>, vector<16x63xf32>, vector<16x63xf32>, vector<16x63xf32>, vector<16x63xf32> -> vector<144x63xf32>
    %c0_109 = arith.constant 0 : index
    %c0_110 = arith.constant 0 : index
    %263 = vector.load %arg6[%c0_109, %c0_110] : memref<32x144xf32, #tpu.memory_space<vmem>>, vector<32x144xf32>
    %cst_111 = arith.constant dense<0.000000e+00> : vector<32x63xf32>
    %264 = tpu.matmul %263, %262, %cst_111 {dimension_numbers = #tpu.dot_dimension_numbers<[1], [0], [0], [1], [0, 0, 1, 1], [], []>} : vector<32x144xf32>, vector<144x63xf32>, vector<32x63xf32> -> vector<32x63xf32>
    %c0_112 = arith.constant 0 : index
    %c0_113 = arith.constant 0 : index
    %265 = vector.load %arg7[%c0_112, %c0_113] : memref<32x1xf32, #tpu.memory_space<vmem>>, vector<32x1xf32>
    %266 = vector.broadcast %265 : vector<32x1xf32> to vector<32x63xf32>
    %267 = arith.addf %264, %266 : vector<32x63xf32>
    %cst_114 = arith.constant 0.000000e+00 : f32
    %268 = vector.broadcast %cst_114 : f32 to vector<32x63xf32>
    %269 = arith.cmpf oge, %267, %268 : vector<32x63xf32>
    %cst_115 = arith.constant 0.00999999977 : f32
    %270 = vector.broadcast %cst_115 : f32 to vector<32x63xf32>
    %271 = arith.mulf %270, %267 : vector<32x63xf32>
    %272 = arith.select %269, %267, %271 : vector<32x63xi1>, vector<32x63xf32>
    %273 = vector.extract_strided_slice %272 {offsets = [0, 0], sizes = [8, 63], strides = [1, 1]} : vector<32x63xf32> to vector<8x63xf32>
    %c0_116 = arith.constant 0 : index
    %c0_117 = arith.constant 0 : index
    %c0_118 = arith.constant 0 : index
    %274 = vector.load %arg11[%c0_116, %c0_117, %c0_118] : memref<4x63x272xbf16, #tpu.memory_space<vmem>>, vector<1x63x272xbf16>
    %275 = vector.shape_cast %274 : vector<1x63x272xbf16> to vector<63x272xbf16>
    %276 = arith.extf %275 : vector<63x272xbf16> to vector<63x272xf32>
    %cst_119 = arith.constant dense<0.000000e+00> : vector<8x272xf32>
    %277 = tpu.matmul %273, %276, %cst_119 {dimension_numbers = #tpu.dot_dimension_numbers<[1], [0], [0], [1], [0, 0, 1, 1], [], []>} : vector<8x63xf32>, vector<63x272xf32>, vector<8x272xf32> -> vector<8x272xf32>
    %278 = vector.extract_strided_slice %272 {offsets = [8, 0], sizes = [8, 63], strides = [1, 1]} : vector<32x63xf32> to vector<8x63xf32>
    %c1_120 = arith.constant 1 : index
    %c0_121 = arith.constant 0 : index
    %c0_122 = arith.constant 0 : index
    %279 = vector.load %arg11[%c1_120, %c0_121, %c0_122] : memref<4x63x272xbf16, #tpu.memory_space<vmem>>, vector<1x63x272xbf16>
    %280 = vector.shape_cast %279 : vector<1x63x272xbf16> to vector<63x272xbf16>
    %281 = arith.extf %280 : vector<63x272xbf16> to vector<63x272xf32>
    %cst_123 = arith.constant dense<0.000000e+00> : vector<8x272xf32>
    %282 = tpu.matmul %278, %281, %cst_123 {dimension_numbers = #tpu.dot_dimension_numbers<[1], [0], [0], [1], [0, 0, 1, 1], [], []>} : vector<8x63xf32>, vector<63x272xf32>, vector<8x272xf32> -> vector<8x272xf32>
    %283 = arith.addf %277, %282 : vector<8x272xf32>
    %284 = vector.extract_strided_slice %272 {offsets = [16, 0], sizes = [8, 63], strides = [1, 1]} : vector<32x63xf32> to vector<8x63xf32>
    %c2_124 = arith.constant 2 : index
    %c0_125 = arith.constant 0 : index
    %c0_126 = arith.constant 0 : index
    %285 = vector.load %arg11[%c2_124, %c0_125, %c0_126] : memref<4x63x272xbf16, #tpu.memory_space<vmem>>, vector<1x63x272xbf16>
    %286 = vector.shape_cast %285 : vector<1x63x272xbf16> to vector<63x272xbf16>
    %287 = arith.extf %286 : vector<63x272xbf16> to vector<63x272xf32>
    %cst_127 = arith.constant dense<0.000000e+00> : vector<8x272xf32>
    %288 = tpu.matmul %284, %287, %cst_127 {dimension_numbers = #tpu.dot_dimension_numbers<[1], [0], [0], [1], [0, 0, 1, 1], [], []>} : vector<8x63xf32>, vector<63x272xf32>, vector<8x272xf32> -> vector<8x272xf32>
    %289 = arith.addf %283, %288 : vector<8x272xf32>
    %290 = vector.extract_strided_slice %272 {offsets = [24, 0], sizes = [8, 63], strides = [1, 1]} : vector<32x63xf32> to vector<8x63xf32>
    %c3_128 = arith.constant 3 : index
    %c0_129 = arith.constant 0 : index
    %c0_130 = arith.constant 0 : index
    %291 = vector.load %arg11[%c3_128, %c0_129, %c0_130] : memref<4x63x272xbf16, #tpu.memory_space<vmem>>, vector<1x63x272xbf16>
    %292 = vector.shape_cast %291 : vector<1x63x272xbf16> to vector<63x272xbf16>
    %293 = arith.extf %292 : vector<63x272xbf16> to vector<63x272xf32>
    %cst_131 = arith.constant dense<0.000000e+00> : vector<8x272xf32>
    %294 = tpu.matmul %290, %293, %cst_131 {dimension_numbers = #tpu.dot_dimension_numbers<[1], [0], [0], [1], [0, 0, 1, 1], [], []>} : vector<8x63xf32>, vector<63x272xf32>, vector<8x272xf32> -> vector<8x272xf32>
    %295 = arith.addf %289, %294 : vector<8x272xf32>
    %296 = vector.extract_strided_slice %295 {offsets = [0, 0], sizes = [8, 224], strides = [1, 1]} : vector<8x272xf32> to vector<8x224xf32>
    %297 = vector.extract_strided_slice %295 {offsets = [0, 1], sizes = [8, 224], strides = [1, 1]} : vector<8x272xf32> to vector<8x224xf32>
    %298 = vector.extract_strided_slice %295 {offsets = [0, 2], sizes = [8, 224], strides = [1, 1]} : vector<8x272xf32> to vector<8x224xf32>
    %299 = vector.extract_strided_slice %295 {offsets = [0, 16], sizes = [8, 224], strides = [1, 1]} : vector<8x272xf32> to vector<8x224xf32>
    %300 = vector.extract_strided_slice %295 {offsets = [0, 17], sizes = [8, 224], strides = [1, 1]} : vector<8x272xf32> to vector<8x224xf32>
    %301 = vector.extract_strided_slice %295 {offsets = [0, 18], sizes = [8, 224], strides = [1, 1]} : vector<8x272xf32> to vector<8x224xf32>
    %302 = vector.extract_strided_slice %295 {offsets = [0, 32], sizes = [8, 224], strides = [1, 1]} : vector<8x272xf32> to vector<8x224xf32>
    %303 = vector.extract_strided_slice %295 {offsets = [0, 33], sizes = [8, 224], strides = [1, 1]} : vector<8x272xf32> to vector<8x224xf32>
    %304 = vector.extract_strided_slice %295 {offsets = [0, 34], sizes = [8, 224], strides = [1, 1]} : vector<8x272xf32> to vector<8x224xf32>
    %305 = tpu.concatenate %296, %297, %298, %299, %300, %301, %302, %303, %304 in 0 : vector<8x224xf32>, vector<8x224xf32>, vector<8x224xf32>, vector<8x224xf32>, vector<8x224xf32>, vector<8x224xf32>, vector<8x224xf32>, vector<8x224xf32>, vector<8x224xf32> -> vector<72x224xf32>
    %c0_132 = arith.constant 0 : index
    %c0_133 = arith.constant 0 : index
    %306 = vector.load %arg8[%c0_132, %c0_133] : memref<16x72xf32, #tpu.memory_space<vmem>>, vector<16x72xf32>
    %cst_134 = arith.constant dense<0.000000e+00> : vector<16x224xf32>
    %307 = tpu.matmul %306, %305, %cst_134 {dimension_numbers = #tpu.dot_dimension_numbers<[1], [0], [0], [1], [0, 0, 1, 1], [], []>} : vector<16x72xf32>, vector<72x224xf32>, vector<16x224xf32> -> vector<16x224xf32>
    %c0_135 = arith.constant 0 : index
    %c0_136 = arith.constant 0 : index
    %308 = vector.load %arg9[%c0_135, %c0_136] : memref<16x1xf32, #tpu.memory_space<vmem>>, vector<16x1xf32>
    %309 = vector.broadcast %308 : vector<16x1xf32> to vector<16x224xf32>
    %310 = arith.addf %307, %309 : vector<16x224xf32>
    %311 = math.absf %310 : vector<16x224xf32>
    %cst_137 = arith.constant 0.000000e+00 : f32
    %312 = vector.broadcast %cst_137 : f32 to vector<16x224xf32>
    %313 = arith.subf %312, %311 : vector<16x224xf32>
    %314 = math.exp %313 : vector<16x224xf32>
    %cst_138 = arith.constant 0.000000e+00 : f32
    %315 = vector.broadcast %cst_138 : f32 to vector<16x224xf32>
    %316 = arith.cmpf oge, %310, %315 : vector<16x224xf32>
    %cst_139 = arith.constant 1.000000e+00 : f32
    %317 = vector.broadcast %cst_139 : f32 to vector<16x224xf32>
    %318 = arith.addf %317, %314 : vector<16x224xf32>
    %cst_140 = arith.constant 1.000000e+00 : f32
    %319 = vector.broadcast %cst_140 : f32 to vector<16x224xf32>
    %320 = arith.divf %319, %318 : vector<16x224xf32>
    %cst_141 = arith.constant 1.000000e+00 : f32
    %321 = vector.broadcast %cst_141 : f32 to vector<16x224xf32>
    %322 = arith.addf %321, %314 : vector<16x224xf32>
    %323 = arith.divf %314, %322 : vector<16x224xf32>
    %324 = arith.select %316, %320, %323 : vector<16x224xi1>, vector<16x224xf32>
    %325 = vector.extract_strided_slice %324 {offsets = [0, 0], sizes = [4, 224], strides = [1, 1]} : vector<16x224xf32> to vector<4x224xf32>
    %c0_142 = arith.constant 0 : index
    %c0_143 = arith.constant 0 : index
    %c0_144 = arith.constant 0 : index
    %326 = vector.load %arg12[%c0_142, %c0_143, %c0_144] : memref<4x224x784xbf16, #tpu.memory_space<vmem>>, vector<1x224x784xbf16>
    %327 = vector.shape_cast %326 : vector<1x224x784xbf16> to vector<224x784xbf16>
    %328 = arith.extf %327 : vector<224x784xbf16> to vector<224x784xf32>
    %cst_145 = arith.constant dense<0.000000e+00> : vector<4x784xf32>
    %329 = tpu.matmul %325, %328, %cst_145 {dimension_numbers = #tpu.dot_dimension_numbers<[1], [0], [0], [1], [0, 0, 1, 1], [], []>} : vector<4x224xf32>, vector<224x784xf32>, vector<4x784xf32> -> vector<4x784xf32>
    %330 = vector.extract_strided_slice %324 {offsets = [4, 0], sizes = [4, 224], strides = [1, 1]} : vector<16x224xf32> to vector<4x224xf32>
    %c1_146 = arith.constant 1 : index
    %c0_147 = arith.constant 0 : index
    %c0_148 = arith.constant 0 : index
    %331 = vector.load %arg12[%c1_146, %c0_147, %c0_148] : memref<4x224x784xbf16, #tpu.memory_space<vmem>>, vector<1x224x784xbf16>
    %332 = vector.shape_cast %331 : vector<1x224x784xbf16> to vector<224x784xbf16>
    %333 = arith.extf %332 : vector<224x784xbf16> to vector<224x784xf32>
    %cst_149 = arith.constant dense<0.000000e+00> : vector<4x784xf32>
    %334 = tpu.matmul %330, %333, %cst_149 {dimension_numbers = #tpu.dot_dimension_numbers<[1], [0], [0], [1], [0, 0, 1, 1], [], []>} : vector<4x224xf32>, vector<224x784xf32>, vector<4x784xf32> -> vector<4x784xf32>
    %335 = arith.addf %329, %334 : vector<4x784xf32>
    %336 = vector.extract_strided_slice %324 {offsets = [8, 0], sizes = [4, 224], strides = [1, 1]} : vector<16x224xf32> to vector<4x224xf32>
    %c2_150 = arith.constant 2 : index
    %c0_151 = arith.constant 0 : index
    %c0_152 = arith.constant 0 : index
    %337 = vector.load %arg12[%c2_150, %c0_151, %c0_152] : memref<4x224x784xbf16, #tpu.memory_space<vmem>>, vector<1x224x784xbf16>
    %338 = vector.shape_cast %337 : vector<1x224x784xbf16> to vector<224x784xbf16>
    %339 = arith.extf %338 : vector<224x784xbf16> to vector<224x784xf32>
    %cst_153 = arith.constant dense<0.000000e+00> : vector<4x784xf32>
    %340 = tpu.matmul %336, %339, %cst_153 {dimension_numbers = #tpu.dot_dimension_numbers<[1], [0], [0], [1], [0, 0, 1, 1], [], []>} : vector<4x224xf32>, vector<224x784xf32>, vector<4x784xf32> -> vector<4x784xf32>
    %341 = arith.addf %335, %340 : vector<4x784xf32>
    %342 = vector.extract_strided_slice %324 {offsets = [12, 0], sizes = [4, 224], strides = [1, 1]} : vector<16x224xf32> to vector<4x224xf32>
    %c3_154 = arith.constant 3 : index
    %c0_155 = arith.constant 0 : index
    %c0_156 = arith.constant 0 : index
    %343 = vector.load %arg12[%c3_154, %c0_155, %c0_156] : memref<4x224x784xbf16, #tpu.memory_space<vmem>>, vector<1x224x784xbf16>
    %344 = vector.shape_cast %343 : vector<1x224x784xbf16> to vector<224x784xbf16>
    %345 = arith.extf %344 : vector<224x784xbf16> to vector<224x784xf32>
    %cst_157 = arith.constant dense<0.000000e+00> : vector<4x784xf32>
    %346 = tpu.matmul %342, %345, %cst_157 {dimension_numbers = #tpu.dot_dimension_numbers<[1], [0], [0], [1], [0, 0, 1, 1], [], []>} : vector<4x224xf32>, vector<224x784xf32>, vector<4x784xf32> -> vector<4x784xf32>
    %347 = arith.addf %341, %346 : vector<4x784xf32>
    %c0_158 = arith.constant 0 : index
    %c0_159 = arith.constant 0 : index
    %c0_160 = arith.constant 0 : index
    %348 = vector.load %arg13[%c0_158, %c0_159, %c0_160] : memref<1x4x784xf32, #tpu.memory_space<vmem>>, vector<1x4x784xf32>
    %349 = vector.shape_cast %348 : vector<1x4x784xf32> to vector<4x784xf32>
    %350 = vector.shape_cast %347 : vector<4x784xf32> to vector<1x4x784xf32>
    tpu.vector_store %arg13[%c0_158, %c0_159, %c0_160], %350 {strides = array<i32>} : memref<1x4x784xf32, #tpu.memory_space<vmem>>, vector<1x4x784xf32>,
    return
  }
  func.func @transform_0(%arg0: i32) -> (i32, i32) {
    %c0_i32 = arith.constant 0 : i32
    %c0_i32_0 = arith.constant 0 : i32
    %c0_i32_1 = arith.constant 0 : i32
    return %c0_i32, %c0_i32_0 : i32, i32
  }
  func.func @transform_1(%arg0: i32) -> (i32, i32, i32) {
    %c0_i32 = arith.constant 0 : i32
    %c0_i32_0 = arith.constant 0 : i32
    %c0_i32_1 = arith.constant 0 : i32
    %c0_i32_2 = arith.constant 0 : i32
    return %c0_i32, %c0_i32_0, %c0_i32_1 : i32, i32, i32
  }
  func.func @transform_2(%arg0: i32) -> (i32, i32) {
    %c0_i32 = arith.constant 0 : i32
    %c0_i32_0 = arith.constant 0 : i32
    %c0_i32_1 = arith.constant 0 : i32
    return %c0_i32, %c0_i32_0 : i32, i32
  }
  func.func @transform_3(%arg0: i32) -> (i32, i32) {
    %c0_i32 = arith.constant 0 : i32
    %c0_i32_0 = arith.constant 0 : i32
    %c0_i32_1 = arith.constant 0 : i32
    return %c0_i32, %c0_i32_0 : i32, i32
  }
  func.func @transform_4(%arg0: i32) -> (i32, i32) {
    %c0_i32 = arith.constant 0 : i32
    %c0_i32_0 = arith.constant 0 : i32
    %c0_i32_1 = arith.constant 0 : i32
    return %c0_i32, %c0_i32_0 : i32, i32
  }
  func.func @transform_5(%arg0: i32) -> (i32, i32) {
    %c0_i32 = arith.constant 0 : i32
    %c0_i32_0 = arith.constant 0 : i32
    %c0_i32_1 = arith.constant 0 : i32
    return %c0_i32, %c0_i32_0 : i32, i32
  }
  func.func @transform_6(%arg0: i32) -> (i32, i32) {
    %c0_i32 = arith.constant 0 : i32
    %c0_i32_0 = arith.constant 0 : i32
    %c0_i32_1 = arith.constant 0 : i32
    return %c0_i32, %c0_i32_0 : i32, i32
  }
  func.func @transform_7(%arg0: i32) -> (i32, i32) {
    %c0_i32 = arith.constant 0 : i32
    %c0_i32_0 = arith.constant 0 : i32
    %c0_i32_1 = arith.constant 0 : i32
    return %c0_i32, %c0_i32_0 : i32, i32
  }
  func.func @transform_8(%arg0: i32) -> (i32, i32) {
    %c0_i32 = arith.constant 0 : i32
    %c0_i32_0 = arith.constant 0 : i32
    %c0_i32_1 = arith.constant 0 : i32
    return %c0_i32, %c0_i32_0 : i32, i32
  }
  func.func @transform_9(%arg0: i32) -> (i32, i32) {
    %c0_i32 = arith.constant 0 : i32
    %c0_i32_0 = arith.constant 0 : i32
    %c0_i32_1 = arith.constant 0 : i32
    return %c0_i32, %c0_i32_0 : i32, i32
  }
  func.func @transform_10(%arg0: i32) -> (i32, i32, i32) {
    %c0_i32 = arith.constant 0 : i32
    %c0_i32_0 = arith.constant 0 : i32
    %c0_i32_1 = arith.constant 0 : i32
    %c0_i32_2 = arith.constant 0 : i32
    return %c0_i32, %c0_i32_0, %c0_i32_1 : i32, i32, i32
  }
  func.func @transform_11(%arg0: i32) -> (i32, i32, i32) {
    %c0_i32 = arith.constant 0 : i32
    %c0_i32_0 = arith.constant 0 : i32
    %c0_i32_1 = arith.constant 0 : i32
    %c0_i32_2 = arith.constant 0 : i32
    return %c0_i32, %c0_i32_0, %c0_i32_1 : i32, i32, i32
  }
  func.func @transform_12(%arg0: i32) -> (i32, i32, i32) {
    %c0_i32 = arith.constant 0 : i32
    %c0_i32_0 = arith.constant 0 : i32
    %c0_i32_1 = arith.constant 0 : i32
    return %arg0, %c0_i32, %c0_i32_0 : i32, i32, i32
  }
}

</mosaic_0001>

<llo_original>
// kernel: tpu_custom_call.1
$region0: #{tpu_custom_call.1}
  #allocation0 [shape = 'u32[]', space=smem, size = 0x4, offset = 0x4, fixed_abs, tag = 'smem constant byte address 0x4 - core index']
  #allocation1 [shape = 'u32[72,128]{1,0:T(1,128)}', space=vmem, size = 0x9000, scoped, tag = 'internal scratch']
  %s0 = inlined_call_operand.hbm [shape: f32[2,32], index: 0, kind: input, shape index: {}]
  %s1 = inlined_call_operand.hbm [shape: f32[32,32,90], index: 1, kind: input, shape index: {}]
  %s2 = inlined_call_operand.hbm [shape: f32[32,90], index: 2, kind: input, shape index: {}]
  %s3 = inlined_call_operand.hbm [shape: f32[16,288], index: 3, kind: input, shape index: {}]
  %s4 = inlined_call_operand.vmem [shape: f32[16,1], index: 4, kind: input, shape index: {}]
  %s5 = inlined_call_operand.hbm [shape: f32[32,144], index: 5, kind: input, shape index: {}]
  %s6 = inlined_call_operand.vmem [shape: f32[32,1], index: 6, kind: input, shape index: {}]
  %s7 = inlined_call_operand.hbm [shape: f32[16,72], index: 7, kind: input, shape index: {}]
  %s8 = inlined_call_operand.vmem [shape: f32[16,1], index: 8, kind: input, shape index: {}]
  %s9 = inlined_call_operand.hbm [shape: bf16[63,90], index: 9, kind: input, shape index: {}]
  %s10 = inlined_call_operand.vmem [shape: bf16[4,63,272], index: 10, kind: input, shape index: {}]
  %s11 = inlined_call_operand.hbm [shape: bf16[4,224,784], index: 11, kind: input, shape index: {}]
  %s12 = inlined_call_operand.hbm [shape: f32[2,4,784], index: 12, kind: output, shape index: {}]
  %s13 = sld [smem:[#allocation0]]
  $region113: #{tpu_custom_call.1} parent=0
    _
  %s15 = ssub.s32 1, %s13
  %s16 = scalar_select 0, %s15, %s13
  $region1: #{tpu_custom_call.1} parent=0
    #allocation2 [shape = 'u8[1024]{0}', space=smem, size = 0x400, scoped, tag = 'input window, operand 0, single buffered']
    #allocation3 [shape = 's32[2]{0}', space=sflag, size = 0x8, scoped, tag = 'scoped memory for tpu_custom_call.1']
    #allocation4 [shape = 's32[2]{0}', space=sflag, size = 0x8, scoped, tag = 'scoped memory for tpu_custom_call.1']
    #allocation5 [shape = 's32[2]{0}', space=sflag, size = 0x8, scoped, tag = 'scoped memory for tpu_custom_call.1']
    #allocation6 [shape = 'u8[524288]{0}', space=vmem, size = 0x80000, scoped, tag = 'input window, operand 1, single buffered']
    #allocation7 [shape = 'u8[16384]{0}', space=vmem, size = 0x4000, scoped, tag = 'input window, operand 2, single buffered']
    #allocation8 [shape = 's32[1]{0}', space=sflag, size = 0x4, scoped, tag = 'scoped memory for tpu_custom_call.1']
    #allocation9 [shape = 'u8[24576]{0}', space=vmem, size = 0x6000, scoped, tag = 'input window, operand 3, single buffered']
    #allocation10 [shape = 'u8[32768]{0}', space=vmem, size = 0x8000, scoped, tag = 'input window, operand 5, single buffered']
    #allocation11 [shape = 's32[1]{0}', space=sflag, size = 0x4, scoped, tag = 'scoped memory for tpu_custom_call.1']
    #allocation12 [shape = 'u8[8192]{0}', space=vmem, size = 0x2000, scoped, tag = 'input window, operand 7, single buffered']
    #allocation13 [shape = 'u8[16384]{0}', space=vmem, size = 0x4000, scoped, tag = 'input window, operand 9, single buffered']
    #allocation14 [shape = 's32[1]{0}', space=sflag, size = 0x4, scoped, tag = 'scoped memory for tpu_custom_call.1']
    #allocation15 [shape = 'u8[1605632]{0}', space=vmem, size = 0x188000, scoped, tag = 'input window, operand 11, single buffered']
    #allocation16 [shape = 'u8[28672]{0}', space=vmem, size = 0x7000, scoped, tag = 'output window, operand 0']
    %17 = vsyncpa [#allocation5], 0
    %18 = vsyncpa [#allocation3], 0
    %19 = vsyncpa [#allocation8], 0
    %20 = vsyncpa [#allocation11], 0
    %21 = vsyncpa [#allocation14], 0
    %22 = vsyncpa [#allocation4], 0
    %s23 = scalar_lea.sflag [#allocation4], 1
    %24 = vsyncpa %s23, 0
    loop: start=0, step=1, limit=4
    $region2: #{tpu_custom_call.1} parent=1 // loop_pre_header
      _
    $region3: #{tpu_custom_call.1} parent=1 // loop_header
      %s26 = sphi 0, %s30
      %p27 = scmp.ge.s32.totalorder %s26, 4
      %s34 = sphi 0, %s34
      %s36 = sphi 0, %s34
      %s37 = sphi 0, %s36
      %s51 = sphi 0, %s37
      %s55 = sphi 0, %s55
      %s57 = sphi 0, %s55
      %s58 = sphi 0, %s57
      %s72 = sphi 0, %s58
      %s76 = sphi 0, %s76
      %s78 = sphi 0, %s76
      %s79 = sphi 0, %s78
      %s93 = sphi 0, %s79
      %s97 = sphi 0, %s97
      %s99 = sphi 0, %s97
      %s100 = sphi 0, %s99
      %s114 = sphi 0, %s100
      %s118 = sphi 0, %s118
      %s120 = sphi 0, %s118
      %s121 = sphi 0, %s120
      %s135 = sphi 0, %s121
      %s139 = sphi 0, %s139
      %s141 = sphi 0, %s139
      %s142 = sphi 0, %s141
      %s156 = sphi 0, %s142
      %s160 = sphi 0, %s160
      %s162 = sphi 0, %s160
      %s163 = sphi 0, %s162
      %s177 = sphi 0, %s163
      %s181 = sphi 0, %s181
      %s183 = sphi 0, %s181
      %s184 = sphi 0, %s183
      %s198 = sphi 0, %s184
      %s202 = sphi 0, %s202
      %s204 = sphi 0, %s202
      %s205 = sphi 0, %s204
      %s219 = sphi 0, %s205
      %s223 = sphi 0, %s223
      %s225 = sphi 0, %s223
      %s226 = sphi 0, %s225
      %s240 = sphi 0, %s226
      %s244 = sphi 0, %s244
      %s246 = sphi 0, %s244
      %s247 = sphi 0, %s246
      %s261 = sphi 0, %s247
      %s265 = sphi 0, %s265
      %s267 = sphi 0, %s265
      %s268 = sphi 0, %s267
      %s282 = sphi 0, %s268
      %s288 = sphi 0, %s290
      %s291 = sphi 0, %s288
      %s292 = sphi 0, %s291
      %s308 = sphi 0, %s292
    $region4: #{tpu_custom_call.1} parent=1 // loop_header_branch
      %29 = sbr.rel (%p27) target = $region8
    $region5: #{tpu_custom_call.1} parent=1 // loop_body
      %s31 = ssub.s32 %s26, 1
      %s32 = ssub.s32 %s26, 2
      %s33 = sadd.s32 %s26, 1
      %s35 = sadd.s32 %s34, 1
      %p38 = scmp.eq.s32.totalorder %s26, 1
      %p39 = scmp.ne.s32.totalorder %s34, %s36
      %p40 = scmp.eq.s32.totalorder %s26, 0
      %p41 = por %p39, %p40
      %p42 = scmp.ne.s32.totalorder %s34, %s36
      %p43 = scmp.eq.s32.totalorder %s31, 1
      %p44 = por %p42, %p43
      %p45 = scmp.ne.s32.totalorder %s36, %s37
      %p46 = scmp.eq.s32.totalorder %s31, 0
      %p47 = por %p45, %p46
      %p48 = scmp.ne.s32.totalorder %s36, %s37
      %p49 = scmp.eq.s32.totalorder %s32, 1
      %p50 = por %p48, %p49
      %p52 = scmp.ne.s32.totalorder %s37, %s51
      %p53 = scmp.eq.s32.totalorder %s32, 0
      %p54 = por %p52, %p53
      %s56 = sadd.s32 %s55, 1
      %p59 = scmp.eq.s32.totalorder %s26, 1
      %p60 = scmp.ne.s32.totalorder %s55, %s57
      %p61 = scmp.eq.s32.totalorder %s26, 0
      %p62 = por %p60, %p61
      %p63 = scmp.ne.s32.totalorder %s55, %s57
      %p64 = scmp.eq.s32.totalorder %s31, 1
      %p65 = por %p63, %p64
      %p66 = scmp.ne.s32.totalorder %s57, %s58
      %p67 = scmp.eq.s32.totalorder %s31, 0
      %p68 = por %p66, %p67
      %p69 = scmp.ne.s32.totalorder %s57, %s58
      %p70 = scmp.eq.s32.totalorder %s32, 1
      %p71 = por %p69, %p70
      %p73 = scmp.ne.s32.totalorder %s58, %s72
      %p74 = scmp.eq.s32.totalorder %s32, 0
      %p75 = por %p73, %p74
      %s77 = sadd.s32 %s76, 1
      %p80 = scmp.eq.s32.totalorder %s26, 1
      %p81 = scmp.ne.s32.totalorder %s76, %s78
      %p82 = scmp.eq.s32.totalorder %s26, 0
      %p83 = por %p81, %p82
      %p84 = scmp.ne.s32.totalorder %s76, %s78
      %p85 = scmp.eq.s32.totalorder %s31, 1
      %p86 = por %p84, %p85
      %p87 = scmp.ne.s32.totalorder %s78, %s79
      %p88 = scmp.eq.s32.totalorder %s31, 0
      %p89 = por %p87, %p88
      %p90 = scmp.ne.s32.totalorder %s78, %s79
      %p91 = scmp.eq.s32.totalorder %s32, 1
      %p92 = por %p90, %p91
      %p94 = scmp.ne.s32.totalorder %s79, %s93
      %p95 = scmp.eq.s32.totalorder %s32, 0
      %p96 = por %p94, %p95
      %s98 = sadd.s32 %s97, 1
      %p101 = scmp.eq.s32.totalorder %s26, 1
      %p102 = scmp.ne.s32.totalorder %s97, %s99
      %p103 = scmp.eq.s32.totalorder %s26, 0
      %p104 = por %p102, %p103
      %p105 = scmp.ne.s32.totalorder %s97, %s99
      %p106 = scmp.eq.s32.totalorder %s31, 1
      %p107 = por %p105, %p106
      %p108 = scmp.ne.s32.totalorder %s99, %s100
      %p109 = scmp.eq.s32.totalorder %s31, 0
      %p110 = por %p108, %p109
      %p111 = scmp.ne.s32.totalorder %s99, %s100
      %p112 = scmp.eq.s32.totalorder %s32, 1
      %p113 = por %p111, %p112
      %p115 = scmp.ne.s32.totalorder %s100, %s114
      %p116 = scmp.eq.s32.totalorder %s32, 0
      %p117 = por %p115, %p116
      %s119 = sadd.s32 %s118, 1
      %p122 = scmp.eq.s32.totalorder %s26, 1
      %p123 = scmp.ne.s32.totalorder %s118, %s120
      %p124 = scmp.eq.s32.totalorder %s26, 0
      %p125 = por %p123, %p124
      %p126 = scmp.ne.s32.totalorder %s118, %s120
      %p127 = scmp.eq.s32.totalorder %s31, 1
      %p128 = por %p126, %p127
      %p129 = scmp.ne.s32.totalorder %s120, %s121
      %p130 = scmp.eq.s32.totalorder %s31, 0
      %p131 = por %p129, %p130
      %p132 = scmp.ne.s32.totalorder %s120, %s121
      %p133 = scmp.eq.s32.totalorder %s32, 1
      %p134 = por %p132, %p133
      %p136 = scmp.ne.s32.totalorder %s121, %s135
      %p137 = scmp.eq.s32.totalorder %s32, 0
      %p138 = por %p136, %p137
      %s140 = sadd.s32 %s139, 1
      %p143 = scmp.eq.s32.totalorder %s26, 1
      %p144 = scmp.ne.s32.totalorder %s139, %s141
      %p145 = scmp.eq.s32.totalorder %s26, 0
      %p146 = por %p144, %p145
      %p147 = scmp.ne.s32.totalorder %s139, %s141
      %p148 = scmp.eq.s32.totalorder %s31, 1
      %p149 = por %p147, %p148
      %p150 = scmp.ne.s32.totalorder %s141, %s142
      %p151 = scmp.eq.s32.totalorder %s31, 0
      %p152 = por %p150, %p151
      %p153 = scmp.ne.s32.totalorder %s141, %s142
      %p154 = scmp.eq.s32.totalorder %s32, 1
      %p155 = por %p153, %p154
      %p157 = scmp.ne.s32.totalorder %s142, %s156
      %p158 = scmp.eq.s32.totalorder %s32, 0
      %p159 = por %p157, %p158
      %s161 = sadd.s32 %s160, 1
      %p164 = scmp.eq.s32.totalorder %s26, 1
      %p165 = scmp.ne.s32.totalorder %s160, %s162
      %p166 = scmp.eq.s32.totalorder %s26, 0
      %p167 = por %p165, %p166
      %p168 = scmp.ne.s32.totalorder %s160, %s162
      %p169 = scmp.eq.s32.totalorder %s31, 1
      %p170 = por %p168, %p169
      %p171 = scmp.ne.s32.totalorder %s162, %s163
      %p172 = scmp.eq.s32.totalorder %s31, 0
      %p173 = por %p171, %p172
      %p174 = scmp.ne.s32.totalorder %s162, %s163
      %p175 = scmp.eq.s32.totalorder %s32, 1
      %p176 = por %p174, %p175
      %p178 = scmp.ne.s32.totalorder %s163, %s177
      %p179 = scmp.eq.s32.totalorder %s32, 0
      %p180 = por %p178, %p179
      %s182 = sadd.s32 %s181, 1
      %p185 = scmp.eq.s32.totalorder %s26, 1
      %p186 = scmp.ne.s32.totalorder %s181, %s183
      %p187 = scmp.eq.s32.totalorder %s26, 0
      %p188 = por %p186, %p187
      %p189 = scmp.ne.s32.totalorder %s181, %s183
      %p190 = scmp.eq.s32.totalorder %s31, 1
      %p191 = por %p189, %p190
      %p192 = scmp.ne.s32.totalorder %s183, %s184
      %p193 = scmp.eq.s32.totalorder %s31, 0
      %p194 = por %p192, %p193
      %p195 = scmp.ne.s32.totalorder %s183, %s184
      %p196 = scmp.eq.s32.totalorder %s32, 1
      %p197 = por %p195, %p196
      %p199 = scmp.ne.s32.totalorder %s184, %s198
      %p200 = scmp.eq.s32.totalorder %s32, 0
      %p201 = por %p199, %p200
      %s203 = sadd.s32 %s202, 1
      %p206 = scmp.eq.s32.totalorder %s26, 1
      %p207 = scmp.ne.s32.totalorder %s202, %s204
      %p208 = scmp.eq.s32.totalorder %s26, 0
      %p209 = por %p207, %p208
      %p210 = scmp.ne.s32.totalorder %s202, %s204
      %p211 = scmp.eq.s32.totalorder %s31, 1
      %p212 = por %p210, %p211
      %p213 = scmp.ne.s32.totalorder %s204, %s205
      %p214 = scmp.eq.s32.totalorder %s31, 0
      %p215 = por %p213, %p214
      %p216 = scmp.ne.s32.totalorder %s204, %s205
      %p217 = scmp.eq.s32.totalorder %s32, 1
      %p218 = por %p216, %p217
      %p220 = scmp.ne.s32.totalorder %s205, %s219
      %p221 = scmp.eq.s32.totalorder %s32, 0
      %p222 = por %p220, %p221
      %s224 = sadd.s32 %s223, 1
      %p227 = scmp.eq.s32.totalorder %s26, 1
      %p228 = scmp.ne.s32.totalorder %s223, %s225
      %p229 = scmp.eq.s32.totalorder %s26, 0
      %p230 = por %p228, %p229
      %p231 = scmp.ne.s32.totalorder %s223, %s225
      %p232 = scmp.eq.s32.totalorder %s31, 1
      %p233 = por %p231, %p232
      %p234 = scmp.ne.s32.totalorder %s225, %s226
      %p235 = scmp.eq.s32.totalorder %s31, 0
      %p236 = por %p234, %p235
      %p237 = scmp.ne.s32.totalorder %s225, %s226
      %p238 = scmp.eq.s32.totalorder %s32, 1
      %p239 = por %p237, %p238
      %p241 = scmp.ne.s32.totalorder %s226, %s240
      %p242 = scmp.eq.s32.totalorder %s32, 0
      %p243 = por %p241, %p242
      %s245 = sadd.s32 %s244, 1
      %p248 = scmp.eq.s32.totalorder %s26, 1
      %p249 = scmp.ne.s32.totalorder %s244, %s246
      %p250 = scmp.eq.s32.totalorder %s26, 0
      %p251 = por %p249, %p250
      %p252 = scmp.ne.s32.totalorder %s244, %s246
      %p253 = scmp.eq.s32.totalorder %s31, 1
      %p254 = por %p252, %p253
      %p255 = scmp.ne.s32.totalorder %s246, %s247
      %p256 = scmp.eq.s32.totalorder %s31, 0
      %p257 = por %p255, %p256
      %p258 = scmp.ne.s32.totalorder %s246, %s247
      %p259 = scmp.eq.s32.totalorder %s32, 1
      %p260 = por %p258, %p259
      %p262 = scmp.ne.s32.totalorder %s247, %s261
      %p263 = scmp.eq.s32.totalorder %s32, 0
      %p264 = por %p262, %p263
      %s266 = sadd.s32 %s265, 1
      %p269 = scmp.eq.s32.totalorder %s26, 1
      %p270 = scmp.ne.s32.totalorder %s265, %s267
      %p271 = scmp.eq.s32.totalorder %s26, 0
      %p272 = por %p270, %p271
      %p273 = scmp.ne.s32.totalorder %s265, %s267
      %p274 = scmp.eq.s32.totalorder %s31, 1
      %p275 = por %p273, %p274
      %p276 = scmp.ne.s32.totalorder %s267, %s268
      %p277 = scmp.eq.s32.totalorder %s31, 0
      %p278 = por %p276, %p277
      %p279 = scmp.ne.s32.totalorder %s267, %s268
      %p280 = scmp.eq.s32.totalorder %s32, 1
      %p281 = por %p279, %p280
      %p283 = scmp.ne.s32.totalorder %s268, %s282
      %p284 = scmp.eq.s32.totalorder %s32, 0
      %p285 = por %p283, %p284
      %s286 = ssub.s32 %s26, %s33
      %p287 = scmp.eq.s32.totalorder %s286, 0
      %s289 = sadd.s32 %s288, 1
      %s290 = scalar_select %p287, %s288, %s289
      %p293 = pneg %p287
      %p294 = scmp.eq.s32.totalorder %s26, 1
      %p295 = por %p293, %p294
      %p296 = scmp.ne.s32.totalorder %s288, %s291
      %p297 = scmp.eq.s32.totalorder %s26, 0
      %p298 = por %p296, %p297
      %p299 = scmp.ne.s32.totalorder %s288, %s291
      %p300 = scmp.eq.s32.totalorder %s31, 1
      %p301 = por %p299, %p300
      %p302 = scmp.ne.s32.totalorder %s291, %s292
      %p303 = scmp.eq.s32.totalorder %s31, 0
      %p304 = por %p302, %p303
      %p305 = scmp.ne.s32.totalorder %s291, %s292
      %p306 = scmp.eq.s32.totalorder %s32, 1
      %p307 = por %p305, %p306
      %p309 = scmp.ne.s32.totalorder %s292, %s308
      %p310 = scmp.eq.s32.totalorder %s32, 0
      %p311 = por %p309, %p310
      %p312 = scmp.le.s32.totalorder 1, %s26
      %p313 = scmp.lt.s32.totalorder %s26, 3
      %p314 = pnand %p312, %p313
      %p315 = pneg %p314
      // Predicated region
      $region9: #{tpu_custom_call.1} parent=5 // pred_check
        _
      $region10: #{tpu_custom_call.1} parent=5 // pred_check_branch
        %317 = sbr.rel (%p314) target = $region12
      $region11: #{tpu_custom_call.1} parent=5 // pred_region
        %s318 = ssub.s32 %s26, 1
        // Predicated region
        $region13: #{tpu_custom_call.1} parent=11 // pred_check
          %p319 = pneg %p47
        $region14: #{tpu_custom_call.1} parent=11 // pred_check_branch
          %321 = sbr.rel (%p319) target = $region16
        $region15: #{tpu_custom_call.1} parent=11 // pred_region
          %323 = vsyncadd [#allocation5], 0
          %s325 = sshll.u32 %s0, 4
          %s326 = int_to_ptr.hbm [resolvable:$true] %s325
          %328 = dma.hbm_to_smem %s326, 32, [#allocation2], [#allocation5]
        $region16: #{tpu_custom_call.1} parent=11 // pred_fallthru
          _
        // Predicated region
        $region17: #{tpu_custom_call.1} parent=11 // pred_check
          %p329 = pneg %p68
        $region18: #{tpu_custom_call.1} parent=11 // pred_check_branch
          %331 = sbr.rel (%p329) target = $region20
        $region19: #{tpu_custom_call.1} parent=11 // pred_region
          %333 = vsyncadd [#allocation3], 0
          %s334 = sshll.u32 %s1, 4
          %s335 = int_to_ptr.hbm [resolvable:$true] %s334
          %s336 = sshll.u32 [#allocation6], 4
          %s337 = int_to_ptr.vmem [resolvable:$true] %s336
          %342 = dma.hbm_to_vmem [thread:$0]  %s335, 16384, %s337, [#allocation3], 128, 128, 8
        $region20: #{tpu_custom_call.1} parent=11 // pred_fallthru
          _
        // Predicated region
        $region21: #{tpu_custom_call.1} parent=11 // pred_check
          %p343 = pneg %p89
        $region22: #{tpu_custom_call.1} parent=11 // pred_check_branch
          %345 = sbr.rel (%p343) target = $region24
        $region23: #{tpu_custom_call.1} parent=11 // pred_region
          %347 = vsyncadd [#allocation8], 0
          %s348 = sshll.u32 %s2, 4
          %s349 = int_to_ptr.hbm [resolvable:$true] %s348
          %s350 = sshll.u32 [#allocation7], 4
          %s351 = int_to_ptr.vmem [resolvable:$true] %s350
          %356 = dma.hbm_to_vmem [thread:$0]  %s349, 512, %s351, [#allocation8], 128, 128, 8
        $region24: #{tpu_custom_call.1} parent=11 // pred_fallthru
          _
        // Predicated region
        $region25: #{tpu_custom_call.1} parent=11 // pred_check
          %p357 = pneg %p110
        $region26: #{tpu_custom_call.1} parent=11 // pred_check_branch
          %359 = sbr.rel (%p357) target = $region28
        $region27: #{tpu_custom_call.1} parent=11 // pred_region
          %361 = vsyncadd [#allocation8], 0
          %s362 = sshll.u32 %s3, 4
          %s363 = int_to_ptr.hbm [resolvable:$true] %s362
          %s364 = sshll.u32 [#allocation9], 4
          %s365 = int_to_ptr.vmem [resolvable:$true] %s364
          %370 = dma.hbm_to_vmem [thread:$0]  %s363, 768, %s365, [#allocation8], 384, 384, 24
        $region28: #{tpu_custom_call.1} parent=11 // pred_fallthru
          _
        // Predicated region
        $region29: #{tpu_custom_call.1} parent=11 // pred_check
          %p371 = pneg %p131
        $region30: #{tpu_custom_call.1} parent=11 // pred_check_branch
          %373 = sbr.rel (%p371) target = $region32
        $region31: #{tpu_custom_call.1} parent=11 // pred_region
          _
        $region32: #{tpu_custom_call.1} parent=11 // pred_fallthru
          _
        // Predicated region
        $region33: #{tpu_custom_call.1} parent=11 // pred_check
          %p374 = pneg %p152
        $region34: #{tpu_custom_call.1} parent=11 // pred_check_branch
          %376 = sbr.rel (%p374) target = $region36
        $region35: #{tpu_custom_call.1} parent=11 // pred_region
          %378 = vsyncadd [#allocation11], 0
          %s379 = sshll.u32 %s5, 4
          %s380 = int_to_ptr.hbm [resolvable:$true] %s379
          %s381 = sshll.u32 [#allocation10], 4
          %s382 = int_to_ptr.vmem [resolvable:$true] %s381
          %387 = dma.hbm_to_vmem [thread:$0]  %s380, 1024, %s382, [#allocation11], 256, 256, 16
        $region36: #{tpu_custom_call.1} parent=11 // pred_fallthru
          _
        // Predicated region
        $region37: #{tpu_custom_call.1} parent=11 // pred_check
          %p388 = pneg %p173
        $region38: #{tpu_custom_call.1} parent=11 // pred_check_branch
          %390 = sbr.rel (%p388) target = $region40
        $region39: #{tpu_custom_call.1} parent=11 // pred_region
          _
        $region40: #{tpu_custom_call.1} parent=11 // pred_fallthru
          _
        // Predicated region
        $region41: #{tpu_custom_call.1} parent=11 // pred_check
          %p391 = pneg %p194
        $region42: #{tpu_custom_call.1} parent=11 // pred_check_branch
          %393 = sbr.rel (%p391) target = $region44
        $region43: #{tpu_custom_call.1} parent=11 // pred_region
          %395 = vsyncadd [#allocation11], 0
          %s396 = sshll.u32 %s7, 4
          %s397 = int_to_ptr.hbm [resolvable:$true] %s396
          %s398 = sshll.u32 [#allocation12], 4
          %s399 = int_to_ptr.vmem [resolvable:$true] %s398
          %404 = dma.hbm_to_vmem [thread:$0]  %s397, 256, %s399, [#allocation11], 128, 128, 8
        $region44: #{tpu_custom_call.1} parent=11 // pred_fallthru
          _
        // Predicated region
        $region45: #{tpu_custom_call.1} parent=11 // pred_check
          %p405 = pneg %p215
        $region46: #{tpu_custom_call.1} parent=11 // pred_check_branch
          %407 = sbr.rel (%p405) target = $region48
        $region47: #{tpu_custom_call.1} parent=11 // pred_region
          _
        $region48: #{tpu_custom_call.1} parent=11 // pred_fallthru
          _
        // Predicated region
        $region49: #{tpu_custom_call.1} parent=11 // pred_check
          %p408 = pneg %p236
        $region50: #{tpu_custom_call.1} parent=11 // pred_check_branch
          %410 = sbr.rel (%p408) target = $region52
        $region51: #{tpu_custom_call.1} parent=11 // pred_region
          %412 = vsyncadd [#allocation14], 0
          %s413 = sshll.u32 %s9, 4
          %s414 = int_to_ptr.hbm [resolvable:$true] %s413
          %s415 = sshll.u32 [#allocation13], 4
          %s416 = int_to_ptr.vmem [resolvable:$true] %s415
          %421 = dma.hbm_to_vmem [thread:$0]  %s414, 512, %s416, [#allocation14], 64, 64, 4
        $region52: #{tpu_custom_call.1} parent=11 // pred_fallthru
          _
        // Predicated region
        $region53: #{tpu_custom_call.1} parent=11 // pred_check
          %p422 = pneg %p257
        $region54: #{tpu_custom_call.1} parent=11 // pred_check_branch
          %424 = sbr.rel (%p422) target = $region56
        $region55: #{tpu_custom_call.1} parent=11 // pred_region
          _
        $region56: #{tpu_custom_call.1} parent=11 // pred_fallthru
          _
        // Predicated region
        $region57: #{tpu_custom_call.1} parent=11 // pred_check
          %p425 = pneg %p278
        $region58: #{tpu_custom_call.1} parent=11 // pred_check_branch
          %427 = sbr.rel (%p425) target = $region60
        $region59: #{tpu_custom_call.1} parent=11 // pred_region
          %429 = vsyncadd [#allocation14], 0
          %s430 = sshll.u32 %s11, 4
          %s431 = int_to_ptr.hbm [resolvable:$true] %s430
          %s432 = sshll.u32 [#allocation15], 4
          %s433 = int_to_ptr.vmem [resolvable:$true] %s432
          %438 = dma.hbm_to_vmem [thread:$0]  %s431, 50176, %s433, [#allocation14], 448, 448, 28
        $region60: #{tpu_custom_call.1} parent=11 // pred_fallthru
          _
      $region12: #{tpu_custom_call.1} parent=5 // pred_fallthru
        _
      %p439 = scmp.lt.s32.totalorder %s26, 2
      // Predicated region
      $region61: #{tpu_custom_call.1} parent=5 // pred_check
        %p440 = pneg %p439
      $region62: #{tpu_custom_call.1} parent=5 // pred_check_branch
        %442 = sbr.rel (%p440) target = $region64
      $region63: #{tpu_custom_call.1} parent=5 // pred_region
        _
      $region64: #{tpu_custom_call.1} parent=5 // pred_fallthru
        _
      %p443 = scmp.le.s32.totalorder 1, %s26
      %p444 = scmp.lt.s32.totalorder %s26, 3
      %p445 = pnand %p443, %p444
      %p446 = pneg %p445
      // Predicated region
      $region65: #{tpu_custom_call.1} parent=5 // pred_check
        _
      $region66: #{tpu_custom_call.1} parent=5 // pred_check_branch
        %448 = sbr.rel (%p445) target = $region68
      $region67: #{tpu_custom_call.1} parent=5 // pred_region
        %s449 = ssub.s32 %s26, 1
        // Predicated region
        $region69: #{tpu_custom_call.1} parent=67 // pred_check
          %p450 = pneg %p47
        $region70: #{tpu_custom_call.1} parent=67 // pred_check_branch
          %452 = sbr.rel (%p450) target = $region72
        $region71: #{tpu_custom_call.1} parent=67 // pred_region
          %454 = dma.done [#allocation5], 32
        $region72: #{tpu_custom_call.1} parent=67 // pred_fallthru
          _
        // Predicated region
        $region73: #{tpu_custom_call.1} parent=67 // pred_check
          %p455 = pneg %p68
        $region74: #{tpu_custom_call.1} parent=67 // pred_check_branch
          %457 = sbr.rel (%p455) target = $region76
        $region75: #{tpu_custom_call.1} parent=67 // pred_region
          %459 = dma.done [#allocation3], 16384
        $region76: #{tpu_custom_call.1} parent=67 // pred_fallthru
          _
        // Predicated region
        $region77: #{tpu_custom_call.1} parent=67 // pred_check
          %p460 = pneg %p89
        $region78: #{tpu_custom_call.1} parent=67 // pred_check_branch
          %462 = sbr.rel (%p460) target = $region80
        $region79: #{tpu_custom_call.1} parent=67 // pred_region
          %464 = dma.done [#allocation8], 512
        $region80: #{tpu_custom_call.1} parent=67 // pred_fallthru
          _
        // Predicated region
        $region81: #{tpu_custom_call.1} parent=67 // pred_check
          %p465 = pneg %p110
        $region82: #{tpu_custom_call.1} parent=67 // pred_check_branch
          %467 = sbr.rel (%p465) target = $region84
        $region83: #{tpu_custom_call.1} parent=67 // pred_region
          %469 = dma.done [#allocation8], 768
        $region84: #{tpu_custom_call.1} parent=67 // pred_fallthru
          _
        // Predicated region
        $region85: #{tpu_custom_call.1} parent=67 // pred_check
          %p470 = pneg %p152
        $region86: #{tpu_custom_call.1} parent=67 // pred_check_branch
          %472 = sbr.rel (%p470) target = $region88
        $region87: #{tpu_custom_call.1} parent=67 // pred_region
          %474 = dma.done [#allocation11], 1024
        $region88: #{tpu_custom_call.1} parent=67 // pred_fallthru
          _
        // Predicated region
        $region89: #{tpu_custom_call.1} parent=67 // pred_check
          %p475 = pneg %p194
        $region90: #{tpu_custom_call.1} parent=67 // pred_check_branch
          %477 = sbr.rel (%p475) target = $region92
        $region91: #{tpu_custom_call.1} parent=67 // pred_region
          %479 = dma.done [#allocation11], 256
        $region92: #{tpu_custom_call.1} parent=67 // pred_fallthru
          _
        // Predicated region
        $region93: #{tpu_custom_call.1} parent=67 // pred_check
          %p480 = pneg %p236
        $region94: #{tpu_custom_call.1} parent=67 // pred_check_branch
          %482 = sbr.rel (%p480) target = $region96
        $region95: #{tpu_custom_call.1} parent=67 // pred_region
          %484 = dma.done [#allocation14], 512
        $region96: #{tpu_custom_call.1} parent=67 // pred_fallthru
          _
        // Predicated region
        $region97: #{tpu_custom_call.1} parent=67 // pred_check
          %p485 = pneg %p278
        $region98: #{tpu_custom_call.1} parent=67 // pred_check_branch
          %487 = sbr.rel (%p485) target = $region100
        $region99: #{tpu_custom_call.1} parent=67 // pred_region
          %489 = dma.done [#allocation14], 50176
        $region100: #{tpu_custom_call.1} parent=67 // pred_fallthru
          _
        %490 = sfence
        %p491 = pneg %p47
        %p492 = pneg %p44
        %p493 = pneg %p68
        %p494 = pneg %p65
        %p495 = pneg %p89
        %p496 = pneg %p86
        %p497 = pneg %p110
        %p498 = pneg %p107
        %p499 = pneg %p131
        %p500 = pneg %p128
        %p501 = pneg %p152
        %p502 = pneg %p149
        %p503 = pneg %p173
        %p504 = pneg %p170
        %p505 = pneg %p194
        %p506 = pneg %p191
        %p507 = pneg %p215
        %p508 = pneg %p212
        %p509 = pneg %p236
        %p510 = pneg %p233
        %p511 = pneg %p257
        %p512 = pneg %p254
        %p513 = pneg %p278
        %p514 = pneg %p275
        %p515 = pneg %p304
        %p516 = pneg %p301
        %s517 = sand.u32 %s291, 1
        %s518 = scalar_lea.sflag [#allocation4], %s517
        %s519 = sand.u32 %s291, 1
        %s520 = smul.addr %s519, 28
        %s521 = scalar_lea.vmem [#allocation16], %s520
        %v522 = vld [vmem:[#allocation7] sm:$0xff]
        %v523 = vld [vmem:[#allocation7 + $0x8] sm:$0xff]
        %v524 = vld [vmem:[#allocation7 + $0x10] sm:$0xff]
        %v525 = vld [vmem:[#allocation7 + $0x18] sm:$0xff]
        %s526 = smul.u32 %s31, 128
        %s527 = sld [smem:[#allocation2 + %s526]]
        %v528 = vld [vmem:[#allocation6] sm:$0xff]
        %v529 = vld [vmem:[#allocation6 + $0x8] sm:$0xff]
        %v530 = vld [vmem:[#allocation6 + $0x10] sm:$0xff]
        %v531 = vld [vmem:[#allocation6 + $0x18] sm:$0xff]
        %v532 = vstv %s527
        %v533 = vmul.f32 %v532, %v528
        %v534 = vmul.f32 %v532, %v529
        %v535 = vmul.f32 %v532, %v530
        %v536 = vmul.f32 %v532, %v531
        %v537 = vadd.f32 %v522, %v533
        %v538 = vadd.f32 %v523, %v534
        %v539 = vadd.f32 %v524, %v535
        %v540 = vadd.f32 %v525, %v536
        %s541 = sadd.s32 %s526, 1
        %s542 = sld [smem:[#allocation2 + %s541]]
        %s543 = scalar_lea.vmem [#allocation6], 32
        %v544 = vld [vmem:[%s543] sm:$0xff]
        %v545 = vld [vmem:[%s543 + $0x8] sm:$0xff]
        %v546 = vld [vmem:[%s543 + $0x10] sm:$0xff]
        %v547 = vld [vmem:[%s543 + $0x18] sm:$0xff]
        %v548 = vstv %s542
        %v549 = vmul.f32 %v548, %v544
        %v550 = vmul.f32 %v548, %v545
        %v551 = vmul.f32 %v548, %v546
        %v552 = vmul.f32 %v548, %v547
        %v553 = vadd.f32 %v537, %v549
        %v554 = vadd.f32 %v538, %v550
        %v555 = vadd.f32 %v539, %v551
        %v556 = vadd.f32 %v540, %v552
        %s557 = sadd.s32 %s526, 2
        %s558 = sld [smem:[#allocation2 + %s557]]
        %s559 = scalar_lea.vmem [#allocation6], 64
        %v560 = vld [vmem:[%s559] sm:$0xff]
        %v561 = vld [vmem:[%s559 + $0x8] sm:$0xff]
        %v562 = vld [vmem:[%s559 + $0x10] sm:$0xff]
        %v563 = vld [vmem:[%s559 + $0x18] sm:$0xff]
        %v564 = vstv %s558
        %v565 = vmul.f32 %v564, %v560
        %v566 = vmul.f32 %v564, %v561
        %v567 = vmul.f32 %v564, %v562
        %v568 = vmul.f32 %v564, %v563
        %v569 = vadd.f32 %v553, %v565
        %v570 = vadd.f32 %v554, %v566
        %v571 = vadd.f32 %v555, %v567
        %v572 = vadd.f32 %v556, %v568
        %s573 = sadd.s32 %s526, 3
        %s574 = sld [smem:[#allocation2 + %s573]]
        %s575 = scalar_lea.vmem [#allocation6], 96
        %v576 = vld [vmem:[%s575] sm:$0xff]
        %v577 = vld [vmem:[%s575 + $0x8] sm:$0xff]
        %v578 = vld [vmem:[%s575 + $0x10] sm:$0xff]
        %v579 = vld [vmem:[%s575 + $0x18] sm:$0xff]
        %v580 = vstv %s574
        %v581 = vmul.f32 %v580, %v576
        %v582 = vmul.f32 %v580, %v577
        %v583 = vmul.f32 %v580, %v578
        %v584 = vmul.f32 %v580, %v579
        %v585 = vadd.f32 %v569, %v581
        %v586 = vadd.f32 %v570, %v582
        %v587 = vadd.f32 %v571, %v583
        %v588 = vadd.f32 %v572, %v584
        %s589 = sadd.s32 %s526, 4
        %s590 = sld [smem:[#allocation2 + %s589]]
        %s591 = scalar_lea.vmem [#allocation6], 128
        %v592 = vld [vmem:[%s591] sm:$0xff]
        %v593 = vld [vmem:[%s591 + $0x8] sm:$0xff]
        %v594 = vld [vmem:[%s591 + $0x10] sm:$0xff]
        %v595 = vld [vmem:[%s591 + $0x18] sm:$0xff]
        %v596 = vstv %s590
        %v597 = vmul.f32 %v596, %v592
        %v598 = vmul.f32 %v596, %v593
        %v599 = vmul.f32 %v596, %v594
        %v600 = vmul.f32 %v596, %v595
        %v601 = vadd.f32 %v585, %v597
        %v602 = vadd.f32 %v586, %v598
        %v603 = vadd.f32 %v587, %v599
        %v604 = vadd.f32 %v588, %v600
        %s605 = sadd.s32 %s526, 5
        %s606 = sld [smem:[#allocation2 + %s605]]
        %s607 = scalar_lea.vmem [#allocation6], 160
        %v608 = vld [vmem:[%s607] sm:$0xff]
        %v609 = vld [vmem:[%s607 + $0x8] sm:$0xff]
        %v610 = vld [vmem:[%s607 + $0x10] sm:$0xff]
        %v611 = vld [vmem:[%s607 + $0x18] sm:$0xff]
        %v612 = vstv %s606
        %v613 = vmul.f32 %v612, %v608
        %v614 = vmul.f32 %v612, %v609
        %v615 = vmul.f32 %v612, %v610
        %v616 = vmul.f32 %v612, %v611
        %v617 = vadd.f32 %v601, %v613
        %v618 = vadd.f32 %v602, %v614
        %v619 = vadd.f32 %v603, %v615
        %v620 = vadd.f32 %v604, %v616
        %s621 = sadd.s32 %s526, 6
        %s622 = sld [smem:[#allocation2 + %s621]]
        %s623 = scalar_lea.vmem [#allocation6], 192
        %v624 = vld [vmem:[%s623] sm:$0xff]
        %v625 = vld [vmem:[%s623 + $0x8] sm:$0xff]
        %v626 = vld [vmem:[%s623 + $0x10] sm:$0xff]
        %v627 = vld [vmem:[%s623 + $0x18] sm:$0xff]
        %v628 = vstv %s622
        %v629 = vmul.f32 %v628, %v624
        %v630 = vmul.f32 %v628, %v625
        %v631 = vmul.f32 %v628, %v626
        %v632 = vmul.f32 %v628, %v627
        %v633 = vadd.f32 %v617, %v629
        %v634 = vadd.f32 %v618, %v630
        %v635 = vadd.f32 %v619, %v631
        %v636 = vadd.f32 %v620, %v632
        %s637 = sadd.s32 %s526, 7
        %s638 = sld [smem:[#allocation2 + %s637]]
        %s639 = scalar_lea.vmem [#allocation6], 224
        %v640 = vld [vmem:[%s639] sm:$0xff]
        %v641 = vld [vmem:[%s639 + $0x8] sm:$0xff]
        %v642 = vld [vmem:[%s639 + $0x10] sm:$0xff]
        %v643 = vld [vmem:[%s639 + $0x18] sm:$0xff]
        %v644 = vstv %s638
        %v645 = vmul.f32 %v644, %v640
        %v646 = vmul.f32 %v644, %v641
        %v647 = vmul.f32 %v644, %v642
        %v648 = vmul.f32 %v644, %v643
        %v649 = vadd.f32 %v633, %v645
        %v650 = vadd.f32 %v634, %v646
        %v651 = vadd.f32 %v635, %v647
        %v652 = vadd.f32 %v636, %v648
        %s653 = sadd.s32 %s526, 8
        %s654 = sld [smem:[#allocation2 + %s653]]
        %s655 = scalar_lea.vmem [#allocation6], 256
        %v656 = vld [vmem:[%s655] sm:$0xff]
        %v657 = vld [vmem:[%s655 + $0x8] sm:$0xff]
        %v658 = vld [vmem:[%s655 + $0x10] sm:$0xff]
        %v659 = vld [vmem:[%s655 + $0x18] sm:$0xff]
        %v660 = vstv %s654
        %v661 = vmul.f32 %v660, %v656
        %v662 = vmul.f32 %v660, %v657
        %v663 = vmul.f32 %v660, %v658
        %v664 = vmul.f32 %v660, %v659
        %v665 = vadd.f32 %v649, %v661
        %v666 = vadd.f32 %v650, %v662
        %v667 = vadd.f32 %v651, %v663
        %v668 = vadd.f32 %v652, %v664
        %s669 = sadd.s32 %s526, 9
        %s670 = sld [smem:[#allocation2 + %s669]]
        %s671 = scalar_lea.vmem [#allocation6], 288
        %v672 = vld [vmem:[%s671] sm:$0xff]
        %v673 = vld [vmem:[%s671 + $0x8] sm:$0xff]
        %v674 = vld [vmem:[%s671 + $0x10] sm:$0xff]
        %v675 = vld [vmem:[%s671 + $0x18] sm:$0xff]
        %v676 = vstv %s670
        %v677 = vmul.f32 %v676, %v672
        %v678 = vmul.f32 %v676, %v673
        %v679 = vmul.f32 %v676, %v674
        %v680 = vmul.f32 %v676, %v675
        %v681 = vadd.f32 %v665, %v677
        %v682 = vadd.f32 %v666, %v678
        %v683 = vadd.f32 %v667, %v679
        %v684 = vadd.f32 %v668, %v680
        %s685 = sadd.s32 %s526, 10
        %s686 = sld [smem:[#allocation2 + %s685]]
        %s687 = scalar_lea.vmem [#allocation6], 320
        %v688 = vld [vmem:[%s687] sm:$0xff]
        %v689 = vld [vmem:[%s687 + $0x8] sm:$0xff]
        %v690 = vld [vmem:[%s687 + $0x10] sm:$0xff]
        %v691 = vld [vmem:[%s687 + $0x18] sm:$0xff]
        %v692 = vstv %s686
        %v693 = vmul.f32 %v692, %v688
        %v694 = vmul.f32 %v692, %v689
        %v695 = vmul.f32 %v692, %v690
        %v696 = vmul.f32 %v692, %v691
        %v697 = vadd.f32 %v681, %v693
        %v698 = vadd.f32 %v682, %v694
        %v699 = vadd.f32 %v683, %v695
        %v700 = vadd.f32 %v684, %v696
        %s701 = sadd.s32 %s526, 11
        %s702 = sld [smem:[#allocation2 + %s701]]
        %s703 = scalar_lea.vmem [#allocation6], 352
        %v704 = vld [vmem:[%s703] sm:$0xff]
        %v705 = vld [vmem:[%s703 + $0x8] sm:$0xff]
        %v706 = vld [vmem:[%s703 + $0x10] sm:$0xff]
        %v707 = vld [vmem:[%s703 + $0x18] sm:$0xff]
        %v708 = vstv %s702
        %v709 = vmul.f32 %v708, %v704
        %v710 = vmul.f32 %v708, %v705
        %v711 = vmul.f32 %v708, %v706
        %v712 = vmul.f32 %v708, %v707
        %v713 = vadd.f32 %v697, %v709
        %v714 = vadd.f32 %v698, %v710
        %v715 = vadd.f32 %v699, %v711
        %v716 = vadd.f32 %v700, %v712
        %s717 = sadd.s32 %s526, 12
        %s718 = sld [smem:[#allocation2 + %s717]]
        %s719 = scalar_lea.vmem [#allocation6], 384
        %v720 = vld [vmem:[%s719] sm:$0xff]
        %v721 = vld [vmem:[%s719 + $0x8] sm:$0xff]
        %v722 = vld [vmem:[%s719 + $0x10] sm:$0xff]
        %v723 = vld [vmem:[%s719 + $0x18] sm:$0xff]
        %v724 = vstv %s718
        %v725 = vmul.f32 %v724, %v720
        %v726 = vmul.f32 %v724, %v721
        %v727 = vmul.f32 %v724, %v722
        %v728 = vmul.f32 %v724, %v723
        %v729 = vadd.f32 %v713, %v725
        %v730 = vadd.f32 %v714, %v726
        %v731 = vadd.f32 %v715, %v727
        %v732 = vadd.f32 %v716, %v728
        %s733 = sadd.s32 %s526, 13
        %s734 = sld [smem:[#allocation2 + %s733]]
        %s735 = scalar_lea.vmem [#allocation6], 416
        %v736 = vld [vmem:[%s735] sm:$0xff]
        %v737 = vld [vmem:[%s735 + $0x8] sm:$0xff]
        %v738 = vld [vmem:[%s735 + $0x10] sm:$0xff]
        %v739 = vld [vmem:[%s735 + $0x18] sm:$0xff]
        %v740 = vstv %s734
        %v741 = vmul.f32 %v740, %v736
        %v742 = vmul.f32 %v740, %v737
        %v743 = vmul.f32 %v740, %v738
        %v744 = vmul.f32 %v740, %v739
        %v745 = vadd.f32 %v729, %v741
        %v746 = vadd.f32 %v730, %v742
        %v747 = vadd.f32 %v731, %v743
        %v748 = vadd.f32 %v732, %v744
        %s749 = sadd.s32 %s526, 14
        %s750 = sld [smem:[#allocation2 + %s749]]
        %s751 = scalar_lea.vmem [#allocation6], 448
        %v752 = vld [vmem:[%s751] sm:$0xff]
        %v753 = vld [vmem:[%s751 + $0x8] sm:$0xff]
        %v754 = vld [vmem:[%s751 + $0x10] sm:$0xff]
        %v755 = vld [vmem:[%s751 + $0x18] sm:$0xff]
        %v756 = vstv %s750
        %v757 = vmul.f32 %v756, %v752
        %v758 = vmul.f32 %v756, %v753
        %v759 = vmul.f32 %v756, %v754
        %v760 = vmul.f32 %v756, %v755
        %v761 = vadd.f32 %v745, %v757
        %v762 = vadd.f32 %v746, %v758
        %v763 = vadd.f32 %v747, %v759
        %v764 = vadd.f32 %v748, %v760
        %s765 = sadd.s32 %s526, 15
        %s766 = sld [smem:[#allocation2 + %s765]]
        %s767 = scalar_lea.vmem [#allocation6], 480
        %v768 = vld [vmem:[%s767] sm:$0xff]
        %v769 = vld [vmem:[%s767 + $0x8] sm:$0xff]
        %v770 = vld [vmem:[%s767 + $0x10] sm:$0xff]
        %v771 = vld [vmem:[%s767 + $0x18] sm:$0xff]
        %v772 = vstv %s766
        %v773 = vmul.f32 %v772, %v768
        %v774 = vmul.f32 %v772, %v769
        %v775 = vmul.f32 %v772, %v770
        %v776 = vmul.f32 %v772, %v771
        %v777 = vadd.f32 %v761, %v773
        %v778 = vadd.f32 %v762, %v774
        %v779 = vadd.f32 %v763, %v775
        %v780 = vadd.f32 %v764, %v776
        %s781 = sadd.s32 %s526, 16
        %s782 = sld [smem:[#allocation2 + %s781]]
        %s783 = scalar_lea.vmem [#allocation6], 512
        %v784 = vld [vmem:[%s783] sm:$0xff]
        %v785 = vld [vmem:[%s783 + $0x8] sm:$0xff]
        %v786 = vld [vmem:[%s783 + $0x10] sm:$0xff]
        %v787 = vld [vmem:[%s783 + $0x18] sm:$0xff]
        %v788 = vstv %s782
        %v789 = vmul.f32 %v788, %v784
        %v790 = vmul.f32 %v788, %v785
        %v791 = vmul.f32 %v788, %v786
        %v792 = vmul.f32 %v788, %v787
        %v793 = vadd.f32 %v777, %v789
        %v794 = vadd.f32 %v778, %v790
        %v795 = vadd.f32 %v779, %v791
        %v796 = vadd.f32 %v780, %v792
        %s797 = sadd.s32 %s526, 17
        %s798 = sld [smem:[#allocation2 + %s797]]
        %s799 = scalar_lea.vmem [#allocation6], 544
        %v800 = vld [vmem:[%s799] sm:$0xff]
        %v801 = vld [vmem:[%s799 + $0x8] sm:$0xff]
        %v802 = vld [vmem:[%s799 + $0x10] sm:$0xff]
        %v803 = vld [vmem:[%s799 + $0x18] sm:$0xff]
        %v804 = vstv %s798
        %v805 = vmul.f32 %v804, %v800
        %v806 = vmul.f32 %v804, %v801
        %v807 = vmul.f32 %v804, %v802
        %v808 = vmul.f32 %v804, %v803
        %v809 = vadd.f32 %v793, %v805
        %v810 = vadd.f32 %v794, %v806
        %v811 = vadd.f32 %v795, %v807
        %v812 = vadd.f32 %v796, %v808
        %s813 = sadd.s32 %s526, 18
        %s814 = sld [smem:[#allocation2 + %s813]]
        %s815 = scalar_lea.vmem [#allocation6], 576
        %v816 = vld [vmem:[%s815] sm:$0xff]
        %v817 = vld [vmem:[%s815 + $0x8] sm:$0xff]
        %v818 = vld [vmem:[%s815 + $0x10] sm:$0xff]
        %v819 = vld [vmem:[%s815 + $0x18] sm:$0xff]
        %v820 = vstv %s814
        %v821 = vmul.f32 %v820, %v816
        %v822 = vmul.f32 %v820, %v817
        %v823 = vmul.f32 %v820, %v818
        %v824 = vmul.f32 %v820, %v819
        %v825 = vadd.f32 %v809, %v821
        %v826 = vadd.f32 %v810, %v822
        %v827 = vadd.f32 %v811, %v823
        %v828 = vadd.f32 %v812, %v824
        %s829 = sadd.s32 %s526, 19
        %s830 = sld [smem:[#allocation2 + %s829]]
        %s831 = scalar_lea.vmem [#allocation6], 608
        %v832 = vld [vmem:[%s831] sm:$0xff]
        %v833 = vld [vmem:[%s831 + $0x8] sm:$0xff]
        %v834 = vld [vmem:[%s831 + $0x10] sm:$0xff]
        %v835 = vld [vmem:[%s831 + $0x18] sm:$0xff]
        %v836 = vstv %s830
        %v837 = vmul.f32 %v836, %v832
        %v838 = vmul.f32 %v836, %v833
        %v839 = vmul.f32 %v836, %v834
        %v840 = vmul.f32 %v836, %v835
        %v841 = vadd.f32 %v825, %v837
        %v842 = vadd.f32 %v826, %v838
        %v843 = vadd.f32 %v827, %v839
        %v844 = vadd.f32 %v828, %v840
        %s845 = sadd.s32 %s526, 20
        %s846 = sld [smem:[#allocation2 + %s845]]
        %s847 = scalar_lea.vmem [#allocation6], 640
        %v848 = vld [vmem:[%s847] sm:$0xff]
        %v849 = vld [vmem:[%s847 + $0x8] sm:$0xff]
        %v850 = vld [vmem:[%s847 + $0x10] sm:$0xff]
        %v851 = vld [vmem:[%s847 + $0x18] sm:$0xff]
        %v852 = vstv %s846
        %v853 = vmul.f32 %v852, %v848
        %v854 = vmul.f32 %v852, %v849
        %v855 = vmul.f32 %v852, %v850
        %v856 = vmul.f32 %v852, %v851
        %v857 = vadd.f32 %v841, %v853
        %v858 = vadd.f32 %v842, %v854
        %v859 = vadd.f32 %v843, %v855
        %v860 = vadd.f32 %v844, %v856
        %s861 = sadd.s32 %s526, 21
        %s862 = sld [smem:[#allocation2 + %s861]]
        %s863 = scalar_lea.vmem [#allocation6], 672
        %v864 = vld [vmem:[%s863] sm:$0xff]
        %v865 = vld [vmem:[%s863 + $0x8] sm:$0xff]
        %v866 = vld [vmem:[%s863 + $0x10] sm:$0xff]
        %v867 = vld [vmem:[%s863 + $0x18] sm:$0xff]
        %v868 = vstv %s862
        %v869 = vmul.f32 %v868, %v864
        %v870 = vmul.f32 %v868, %v865
        %v871 = vmul.f32 %v868, %v866
        %v872 = vmul.f32 %v868, %v867
        %v873 = vadd.f32 %v857, %v869
        %v874 = vadd.f32 %v858, %v870
        %v875 = vadd.f32 %v859, %v871
        %v876 = vadd.f32 %v860, %v872
        %s877 = sadd.s32 %s526, 22
        %s878 = sld [smem:[#allocation2 + %s877]]
        %s879 = scalar_lea.vmem [#allocation6], 704
        %v880 = vld [vmem:[%s879] sm:$0xff]
        %v881 = vld [vmem:[%s879 + $0x8] sm:$0xff]
        %v882 = vld [vmem:[%s879 + $0x10] sm:$0xff]
        %v883 = vld [vmem:[%s879 + $0x18] sm:$0xff]
        %v884 = vstv %s878
        %v885 = vmul.f32 %v884, %v880
        %v886 = vmul.f32 %v884, %v881
        %v887 = vmul.f32 %v884, %v882
        %v888 = vmul.f32 %v884, %v883
        %v889 = vadd.f32 %v873, %v885
        %v890 = vadd.f32 %v874, %v886
        %v891 = vadd.f32 %v875, %v887
        %v892 = vadd.f32 %v876, %v888
        %s893 = sadd.s32 %s526, 23
        %s894 = sld [smem:[#allocation2 + %s893]]
        %s895 = scalar_lea.vmem [#allocation6], 736
        %v896 = vld [vmem:[%s895] sm:$0xff]
        %v897 = vld [vmem:[%s895 + $0x8] sm:$0xff]
        %v898 = vld [vmem:[%s895 + $0x10] sm:$0xff]
        %v899 = vld [vmem:[%s895 + $0x18] sm:$0xff]
        %v900 = vstv %s894
        %v901 = vmul.f32 %v900, %v896
        %v902 = vmul.f32 %v900, %v897
        %v903 = vmul.f32 %v900, %v898
        %v904 = vmul.f32 %v900, %v899
        %v905 = vadd.f32 %v889, %v901
        %v906 = vadd.f32 %v890, %v902
        %v907 = vadd.f32 %v891, %v903
        %v908 = vadd.f32 %v892, %v904
        %s909 = sadd.s32 %s526, 24
        %s910 = sld [smem:[#allocation2 + %s909]]
        %s911 = scalar_lea.vmem [#allocation6], 768
        %v912 = vld [vmem:[%s911] sm:$0xff]
        %v913 = vld [vmem:[%s911 + $0x8] sm:$0xff]
        %v914 = vld [vmem:[%s911 + $0x10] sm:$0xff]
        %v915 = vld [vmem:[%s911 + $0x18] sm:$0xff]
        %v916 = vstv %s910
        %v917 = vmul.f32 %v916, %v912
        %v918 = vmul.f32 %v916, %v913
        %v919 = vmul.f32 %v916, %v914
        %v920 = vmul.f32 %v916, %v915
        %v921 = vadd.f32 %v905, %v917
        %v922 = vadd.f32 %v906, %v918
        %v923 = vadd.f32 %v907, %v919
        %v924 = vadd.f32 %v908, %v920
        %s925 = sadd.s32 %s526, 25
        %s926 = sld [smem:[#allocation2 + %s925]]
        %s927 = scalar_lea.vmem [#allocation6], 800
        %v928 = vld [vmem:[%s927] sm:$0xff]
        %v929 = vld [vmem:[%s927 + $0x8] sm:$0xff]
        %v930 = vld [vmem:[%s927 + $0x10] sm:$0xff]
        %v931 = vld [vmem:[%s927 + $0x18] sm:$0xff]
        %v932 = vstv %s926
        %v933 = vmul.f32 %v932, %v928
        %v934 = vmul.f32 %v932, %v929
        %v935 = vmul.f32 %v932, %v930
        %v936 = vmul.f32 %v932, %v931
        %v937 = vadd.f32 %v921, %v933
        %v938 = vadd.f32 %v922, %v934
        %v939 = vadd.f32 %v923, %v935
        %v940 = vadd.f32 %v924, %v936
        %s941 = sadd.s32 %s526, 26
        %s942 = sld [smem:[#allocation2 + %s941]]
        %s943 = scalar_lea.vmem [#allocation6], 832
        %v944 = vld [vmem:[%s943] sm:$0xff]
        %v945 = vld [vmem:[%s943 + $0x8] sm:$0xff]
        %v946 = vld [vmem:[%s943 + $0x10] sm:$0xff]
        %v947 = vld [vmem:[%s943 + $0x18] sm:$0xff]
        %v948 = vstv %s942
        %v949 = vmul.f32 %v948, %v944
        %v950 = vmul.f32 %v948, %v945
        %v951 = vmul.f32 %v948, %v946
        %v952 = vmul.f32 %v948, %v947
        %v953 = vadd.f32 %v937, %v949
        %v954 = vadd.f32 %v938, %v950
        %v955 = vadd.f32 %v939, %v951
        %v956 = vadd.f32 %v940, %v952
        %s957 = sadd.s32 %s526, 27
        %s958 = sld [smem:[#allocation2 + %s957]]
        %s959 = scalar_lea.vmem [#allocation6], 864
        %v960 = vld [vmem:[%s959] sm:$0xff]
        %v961 = vld [vmem:[%s959 + $0x8] sm:$0xff]
        %v962 = vld [vmem:[%s959 + $0x10] sm:$0xff]
        %v963 = vld [vmem:[%s959 + $0x18] sm:$0xff]
        %v964 = vstv %s958
        %v965 = vmul.f32 %v964, %v960
        %v966 = vmul.f32 %v964, %v961
        %v967 = vmul.f32 %v964, %v962
        %v968 = vmul.f32 %v964, %v963
        %v969 = vadd.f32 %v953, %v965
        %v970 = vadd.f32 %v954, %v966
        %v971 = vadd.f32 %v955, %v967
        %v972 = vadd.f32 %v956, %v968
        %s973 = sadd.s32 %s526, 28
        %s974 = sld [smem:[#allocation2 + %s973]]
        %s975 = scalar_lea.vmem [#allocation6], 896
        %v976 = vld [vmem:[%s975] sm:$0xff]
        %v977 = vld [vmem:[%s975 + $0x8] sm:$0xff]
        %v978 = vld [vmem:[%s975 + $0x10] sm:$0xff]
        %v979 = vld [vmem:[%s975 + $0x18] sm:$0xff]
        %v980 = vstv %s974
        %v981 = vmul.f32 %v980, %v976
        %v982 = vmul.f32 %v980, %v977
        %v983 = vmul.f32 %v980, %v978
        %v984 = vmul.f32 %v980, %v979
        %v985 = vadd.f32 %v969, %v981
        %v986 = vadd.f32 %v970, %v982
        %v987 = vadd.f32 %v971, %v983
        %v988 = vadd.f32 %v972, %v984
        %s989 = sadd.s32 %s526, 29
        %s990 = sld [smem:[#allocation2 + %s989]]
        %s991 = scalar_lea.vmem [#allocation6], 928
        %v992 = vld [vmem:[%s991] sm:$0xff]
        %v993 = vld [vmem:[%s991 + $0x8] sm:$0xff]
        %v994 = vld [vmem:[%s991 + $0x10] sm:$0xff]
        %v995 = vld [vmem:[%s991 + $0x18] sm:$0xff]
        %v996 = vstv %s990
        %v997 = vmul.f32 %v996, %v992
        %v998 = vmul.f32 %v996, %v993
        %v999 = vmul.f32 %v996, %v994
        %v1000 = vmul.f32 %v996, %v995
        %v1001 = vadd.f32 %v985, %v997
        %v1002 = vadd.f32 %v986, %v998
        %v1003 = vadd.f32 %v987, %v999
        %v1004 = vadd.f32 %v988, %v1000
        %s1005 = sadd.s32 %s526, 30
        %s1006 = sld [smem:[#allocation2 + %s1005]]
        %s1007 = scalar_lea.vmem [#allocation6], 960
        %v1008 = vld [vmem:[%s1007] sm:$0xff]
        %v1009 = vld [vmem:[%s1007 + $0x8] sm:$0xff]
        %v1010 = vld [vmem:[%s1007 + $0x10] sm:$0xff]
        %v1011 = vld [vmem:[%s1007 + $0x18] sm:$0xff]
        %v1012 = vstv %s1006
        %v1013 = vmul.f32 %v1012, %v1008
        %v1014 = vmul.f32 %v1012, %v1009
        %v1015 = vmul.f32 %v1012, %v1010
        %v1016 = vmul.f32 %v1012, %v1011
        %v1017 = vadd.f32 %v1001, %v1013
        %v1018 = vadd.f32 %v1002, %v1014
        %v1019 = vadd.f32 %v1003, %v1015
        %v1020 = vadd.f32 %v1004, %v1016
        %s1021 = sadd.s32 %s526, 31
        %s1022 = sld [smem:[#allocation2 + %s1021]]
        %s1023 = scalar_lea.vmem [#allocation6], 992
        %v1024 = vld [vmem:[%s1023] sm:$0xff]
        %v1025 = vld [vmem:[%s1023 + $0x8] sm:$0xff]
        %v1026 = vld [vmem:[%s1023 + $0x10] sm:$0xff]
        %v1027 = vld [vmem:[%s1023 + $0x18] sm:$0xff]
        %v1028 = vstv %s1022
        %v1029 = vmul.f32 %v1028, %v1024
        %v1030 = vmul.f32 %v1028, %v1025
        %v1031 = vmul.f32 %v1028, %v1026
        %v1032 = vmul.f32 %v1028, %v1027
        %v1033 = vadd.f32 %v1017, %v1029
        %v1034 = vadd.f32 %v1018, %v1030
        %v1035 = vadd.f32 %v1019, %v1031
        %v1036 = vadd.f32 %v1020, %v1032
        %vm1037 = vcmp.ge.f32.partialorder %v1033, 0.0
        %vm1038 = vcmp.ge.f32.partialorder %v1034, 0.0
        %vm1039 = vcmp.ge.f32.partialorder %v1035, 0.0
        %vm1040 = vcmp.ge.f32.partialorder %v1036, 0.0
        %v1041 = vmul.f32 %v1033, 0.01
        %v1042 = vmul.f32 %v1034, 0.01
        %v1043 = vmul.f32 %v1035, 0.01
        %v1044 = vmul.f32 %v1036, 0.01
        %v1045 = vsel %vm1037, %v1033, %v1041
        %v1046 = vsel %vm1038, %v1034, %v1042
        %v1047 = vsel %vm1039, %v1035, %v1043
        %v1048 = vsel %vm1040, %v1036, %v1044
        %1053 = vrot.lane.b32.xlu0 %v1045, 127
        %v1054 = vpop.permute.xlu0 %1053
        %1055 = vrot.lane.b32.xlu0 %v1046, 127
        %v1056 = vpop.permute.xlu0 %1055
        %1057 = vrot.lane.b32.xlu0 %v1047, 127
        %v1058 = vpop.permute.xlu0 %1057
        %1059 = vrot.lane.b32.xlu0 %v1048, 127
        %v1060 = vpop.permute.xlu0 %1059
        %1065 = vrot.lane.b32.xlu0 %v1045, 126
        %v1066 = vpop.permute.xlu0 %1065
        %1067 = vrot.lane.b32.xlu0 %v1046, 126
        %v1068 = vpop.permute.xlu0 %1067
        %1069 = vrot.lane.b32.xlu0 %v1047, 126
        %v1070 = vpop.permute.xlu0 %1069
        %1071 = vrot.lane.b32.xlu0 %v1048, 126
        %v1072 = vpop.permute.xlu0 %1071
        %1077 = vrot.lane.b32.xlu0 %v1045, 119
        %v1078 = vpop.permute.xlu0 %1077
        %1079 = vrot.lane.b32.xlu0 %v1046, 119
        %v1080 = vpop.permute.xlu0 %1079
        %1081 = vrot.lane.b32.xlu0 %v1047, 119
        %v1082 = vpop.permute.xlu0 %1081
        %1083 = vrot.lane.b32.xlu0 %v1048, 119
        %v1084 = vpop.permute.xlu0 %1083
        %1089 = vrot.lane.b32.xlu0 %v1045, 118
        %v1090 = vpop.permute.xlu0 %1089
        %1091 = vrot.lane.b32.xlu0 %v1046, 118
        %v1092 = vpop.permute.xlu0 %1091
        %1093 = vrot.lane.b32.xlu0 %v1047, 118
        %v1094 = vpop.permute.xlu0 %1093
        %1095 = vrot.lane.b32.xlu0 %v1048, 118
        %v1096 = vpop.permute.xlu0 %1095
        %1101 = vrot.lane.b32.xlu0 %v1045, 117
        %v1102 = vpop.permute.xlu0 %1101
        %1103 = vrot.lane.b32.xlu0 %v1046, 117
        %v1104 = vpop.permute.xlu0 %1103
        %1105 = vrot.lane.b32.xlu0 %v1047, 117
        %v1106 = vpop.permute.xlu0 %1105
        %1107 = vrot.lane.b32.xlu0 %v1048, 117
        %v1108 = vpop.permute.xlu0 %1107
        %1113 = vrot.lane.b32.xlu0 %v1045, 110
        %v1114 = vpop.permute.xlu0 %1113
        %1115 = vrot.lane.b32.xlu0 %v1046, 110
        %v1116 = vpop.permute.xlu0 %1115
        %1117 = vrot.lane.b32.xlu0 %v1047, 110
        %v1118 = vpop.permute.xlu0 %1117
        %1119 = vrot.lane.b32.xlu0 %v1048, 110
        %v1120 = vpop.permute.xlu0 %1119
        %1125 = vrot.lane.b32.xlu0 %v1045, 109
        %v1126 = vpop.permute.xlu0 %1125
        %1127 = vrot.lane.b32.xlu0 %v1046, 109
        %v1128 = vpop.permute.xlu0 %1127
        %1129 = vrot.lane.b32.xlu0 %v1047, 109
        %v1130 = vpop.permute.xlu0 %1129
        %1131 = vrot.lane.b32.xlu0 %v1048, 109
        %v1132 = vpop.permute.xlu0 %1131
        %1137 = vrot.lane.b32.xlu0 %v1045, 108
        %v1138 = vpop.permute.xlu0 %1137
        %1139 = vrot.lane.b32.xlu0 %v1046, 108
        %v1140 = vpop.permute.xlu0 %1139
        %1141 = vrot.lane.b32.xlu0 %v1047, 108
        %v1142 = vpop.permute.xlu0 %1141
        %1143 = vrot.lane.b32.xlu0 %v1048, 108
        %v1144 = vpop.permute.xlu0 %1143
        %v1149 = vld [vmem:[#allocation9] sm:$0xff]
        %v1150 = vld [vmem:[#allocation9 + $0x8] sm:$0xff]
        %v1151 = vld [vmem:[#allocation9 + $0x10] sm:$0xff]
        %v1152 = vld [vmem:[#allocation9 + $0x18] sm:$0xff]
        %v1153 = vld [vmem:[#allocation9 + $0x20] sm:$0xff]
        %v1154 = vld [vmem:[#allocation9 + $0x28] sm:$0xff]
        %v1155 = vld [vmem:[%s4] sm:$0xff]
        %v1156 = vld [vmem:[%s4 + $0x8] sm:$0xff]
        %1158 = vset.pattern.permute.xlu0 0
        %1159 = vperm.xlu0 %1158, %v1155
        %v1160 = vpop.permute.xlu0 %1159
        %1163 = vset.pattern.permute.xlu0 0
        %1164 = vperm.xlu0 %1163, %v1156
        %v1165 = vpop.permute.xlu0 %1164
        %vm1167 = vcmask 261120
        %v1169 = vsel %vm1167, %v1151, 0
        %v1172 = vsel %vm1167, %v1154, 0
        %1174 = vmatpush.msra.mxu0 %v1084
        %1175 = vmatpush.msra.mxu0 %v1082
        %1176 = vmatpush.msra.mxu0 %v1080
        %1177 = vmatpush.msra.mxu0 %v1078
        %1178 = vmatpush.msra.mxu0 %v1072
        %1179 = vmatpush.msra.mxu0 %v1070
        %1180 = vmatpush.msra.mxu0 %v1068
        %1181 = vmatpush.msra.mxu0 %v1066
        %1182 = vmatpush.msra.mxu0 %v1060
        %1183 = vmatpush.msra.mxu0 %v1058
        %1184 = vmatpush.msra.mxu0 %v1056
        %1185 = vmatpush.msra.mxu0 %v1054
        %1186 = vmatpush.msra.mxu0 %v1048
        %1187 = vmatpush.msra.mxu0 %v1047
        %1188 = vmatpush.msra.mxu0 %v1046
        %1189 = vmatpush.msra.mxu0 %v1045
        %1190 = vmatmul.f32.gmra.mxu0 %v1149
        %v1191 = vpop.f32.mrf.mxu0
        %v1192 = vadd.f32 %v1160, %v1191
        %1193 = vmatmul.f32.gmra.mxu0 %v1152
        %v1194 = vpop.f32.mrf.mxu0
        %v1195 = vadd.f32 %v1165, %v1194
        %1196 = vdwg.mxu0
        %1197 = vmatpush.msra.mxu0 %v1132
        %1198 = vmatpush.msra.mxu0 %v1130
        %1199 = vmatpush.msra.mxu0 %v1128
        %1200 = vmatpush.msra.mxu0 %v1126
        %1201 = vmatpush.msra.mxu0 %v1120
        %1202 = vmatpush.msra.mxu0 %v1118
        %1203 = vmatpush.msra.mxu0 %v1116
        %1204 = vmatpush.msra.mxu0 %v1114
        %1205 = vmatpush.msra.mxu0 %v1108
        %1206 = vmatpush.msra.mxu0 %v1106
        %1207 = vmatpush.msra.mxu0 %v1104
        %1208 = vmatpush.msra.mxu0 %v1102
        %1209 = vmatpush.msra.mxu0 %v1096
        %1210 = vmatpush.msra.mxu0 %v1094
        %1211 = vmatpush.msra.mxu0 %v1092
        %1212 = vmatpush.msra.mxu0 %v1090
        %1213 = vmatmul.f32.gmra.mxu0 %v1150
        %v1214 = vpop.f32.mrf.mxu0
        %v1215 = vadd.f32 %v1192, %v1214
        %1216 = vmatmul.f32.gmra.mxu0 %v1153
        %v1217 = vpop.f32.mrf.mxu0
        %v1218 = vadd.f32 %v1195, %v1217
        %1219 = vdwg.mxu0
        %1220 = vmatpush.msra.mxu0 0.0
        %1221 = vmatpush.msra.mxu0 0.0
        %1222 = vmatpush.msra.mxu0 0.0
        %1223 = vmatpush.msra.mxu0 0.0
        %1224 = vmatpush.msra.mxu0 0.0
        %1225 = vmatpush.msra.mxu0 0.0
        %1226 = vmatpush.msra.mxu0 0.0
        %1227 = vmatpush.msra.mxu0 0.0
        %1228 = vmatpush.msra.mxu0 0.0
        %1229 = vmatpush.msra.mxu0 0.0
        %1230 = vmatpush.msra.mxu0 0.0
        %1231 = vmatpush.msra.mxu0 0.0
        %1232 = vmatpush.msra.mxu0 %v1144
        %1233 = vmatpush.msra.mxu0 %v1142
        %1234 = vmatpush.msra.mxu0 %v1140
        %1235 = vmatpush.msra.mxu0 %v1138
        %1236 = vmatmul.f32.gmra.mxu0 %v1169
        %v1237 = vpop.f32.mrf.mxu0
        %v1238 = vadd.f32 %v1215, %v1237
        %1239 = vmatmul.f32.gmra.mxu0 %v1172
        %v1240 = vpop.f32.mrf.mxu0
        %v1241 = vadd.f32 %v1218, %v1240
        %1242 = vdwg.mxu0
        %vm1243 = vcmp.ge.f32.partialorder %v1238, 0.0
        %vm1244 = vcmp.ge.f32.partialorder %v1241, 0.0
        %v1245 = vmul.f32 %v1238, 0.01
        %v1246 = vmul.f32 %v1241, 0.01
        %v1247 = vsel %vm1243, %v1238, %v1245
        %v1248 = vsel %vm1244, %v1241, %v1246
        %v1249 = vld [vmem:[#allocation13] sm:$0xf]
        %v1250 = vld [vmem:[#allocation13 + $0x4] sm:$0xf]
        %v1251 = vld [vmem:[#allocation13 + $0x8] sm:$0xf]
        %v1252 = vld [vmem:[#allocation13 + $0xc] sm:$0xf]
        %v1253 = vld [vmem:[#allocation13 + $0x10] sm:$0xf]
        %v1254 = vld [vmem:[#allocation13 + $0x14] sm:$0xf]
        %v1255 = vld [vmem:[#allocation13 + $0x18] sm:$0xf]
        %v1256 = vld [vmem:[#allocation13 + $0x1c] sm:$0xf]
        %v1257 = vunpack.c.l.bf16 %v1249
        %v1258 = vunpack.c.l.bf16 %v1250
        %v1259 = vunpack.c.l.bf16 %v1251
        %v1260 = vunpack.c.l.bf16 %v1252
        %v1261 = vunpack.c.l.bf16 %v1253
        %v1262 = vunpack.c.l.bf16 %v1254
        %v1263 = vunpack.c.l.bf16 %v1255
        %v1264 = vunpack.c.l.bf16 %v1256
        %vm1265 = vcmask 515072
        %v1267 = vsel %vm1265, %v1247, 0
        %v1270 = vsel %vm1265, %v1248, 0
        %vm1272 = vcmask 1046528
        %v1274 = vsel %vm1272, %v1264, 0
        %1276 = vmatpush.msra.mxu0 0.0
        %1277 = vmatpush.msra.mxu0 0.0
        %1278 = vmatpush.msra.mxu0 0.0
        %1279 = vmatpush.msra.mxu0 0.0
        %1280 = vmatpush.msra.mxu0 0.0
        %1281 = vmatpush.msra.mxu0 0.0
        %1282 = vmatpush.msra.mxu0 0.0
        %1283 = vmatpush.msra.mxu0 0.0
        %1284 = vmatpush.msra.mxu0 %v1274
        %1285 = vmatpush.msra.mxu0 %v1263
        %1286 = vmatpush.msra.mxu0 %v1262
        %1287 = vmatpush.msra.mxu0 %v1261
        %1288 = vmatpush.msra.mxu0 %v1260
        %1289 = vmatpush.msra.mxu0 %v1259
        %1290 = vmatpush.msra.mxu0 %v1258
        %1291 = vmatpush.msra.mxu0 %v1257
        %1292 = vmatmul.f32.gmra.mxu0 %v1267
        %v1293 = vpop.f32.mrf.mxu0
        %v1294 = vadd.f32 0.0, %v1293
        %1295 = vmatmul.f32.gmra.mxu0 %v1270
        %v1296 = vpop.f32.mrf.mxu0
        %v1297 = vadd.f32 0.0, %v1296
        %1298 = vdwg.mxu0
        %1301 = vrot.lane.b32.xlu0 %v1294, 127
        %v1302 = vpop.permute.xlu0 %1301
        %1303 = vrot.lane.b32.xlu0 %v1297, 127
        %v1304 = vpop.permute.xlu0 %1303
        %1307 = vrot.lane.b32.xlu0 %v1294, 126
        %v1308 = vpop.permute.xlu0 %1307
        %1309 = vrot.lane.b32.xlu0 %v1297, 126
        %v1310 = vpop.permute.xlu0 %1309
        %1313 = vrot.lane.b32.xlu0 %v1294, 119
        %v1314 = vpop.permute.xlu0 %1313
        %1315 = vrot.lane.b32.xlu0 %v1297, 119
        %v1316 = vpop.permute.xlu0 %1315
        %1319 = vrot.lane.b32.xlu0 %v1294, 118
        %v1320 = vpop.permute.xlu0 %1319
        %1321 = vrot.lane.b32.xlu0 %v1297, 118
        %v1322 = vpop.permute.xlu0 %1321
        %1325 = vrot.lane.b32.xlu0 %v1294, 117
        %v1326 = vpop.permute.xlu0 %1325
        %1327 = vrot.lane.b32.xlu0 %v1297, 117
        %v1328 = vpop.permute.xlu0 %1327
        %1331 = vrot.lane.b32.xlu0 %v1294, 110
        %v1332 = vpop.permute.xlu0 %1331
        %1333 = vrot.lane.b32.xlu0 %v1297, 110
        %v1334 = vpop.permute.xlu0 %1333
        %1337 = vrot.lane.b32.xlu0 %v1294, 109
        %v1338 = vpop.permute.xlu0 %1337
        %1339 = vrot.lane.b32.xlu0 %v1297, 109
        %v1340 = vpop.permute.xlu0 %1339
        %1343 = vrot.lane.b32.xlu0 %v1294, 108
        %v1344 = vpop.permute.xlu0 %1343
        %1345 = vrot.lane.b32.xlu0 %v1297, 108
        %v1346 = vpop.permute.xlu0 %1345
        %v1349 = vld [vmem:[#allocation10] sm:$0xff]
        %v1350 = vld [vmem:[#allocation10 + $0x8] sm:$0xff]
        %v1351 = vld [vmem:[#allocation10 + $0x10] sm:$0xff]
        %v1352 = vld [vmem:[#allocation10 + $0x18] sm:$0xff]
        %v1353 = vld [vmem:[#allocation10 + $0x20] sm:$0xff]
        %v1354 = vld [vmem:[#allocation10 + $0x28] sm:$0xff]
        %v1355 = vld [vmem:[#allocation10 + $0x30] sm:$0xff]
        %v1356 = vld [vmem:[#allocation10 + $0x38] sm:$0xff]
        %v1357 = vld [vmem:[%s6] sm:$0xff]
        %v1358 = vld [vmem:[%s6 + $0x8] sm:$0xff]
        %v1359 = vld [vmem:[%s6 + $0x10] sm:$0xff]
        %v1360 = vld [vmem:[%s6 + $0x18] sm:$0xff]
        %1362 = vset.pattern.permute.xlu0 0
        %1363 = vperm.xlu0 %1362, %v1357
        %v1364 = vpop.permute.xlu0 %1363
        %1367 = vset.pattern.permute.xlu0 0
        %1368 = vperm.xlu0 %1367, %v1358
        %v1369 = vpop.permute.xlu0 %1368
        %1372 = vset.pattern.permute.xlu0 0
        %1373 = vperm.xlu0 %1372, %v1359
        %v1374 = vpop.permute.xlu0 %1373
        %1377 = vset.pattern.permute.xlu0 0
        %1378 = vperm.xlu0 %1377, %v1360
        %v1379 = vpop.permute.xlu0 %1378
        %vm1381 = vcmask 130048
        %v1383 = vsel %vm1381, %v1350, 0
        %v1386 = vsel %vm1381, %v1352, 0
        %v1389 = vsel %vm1381, %v1354, 0
        %v1392 = vsel %vm1381, %v1356, 0
        %1394 = vmatpush.msra.mxu0 %v1340
        %1395 = vmatpush.msra.mxu0 %v1338
        %1396 = vmatpush.msra.mxu0 %v1334
        %1397 = vmatpush.msra.mxu0 %v1332
        %1398 = vmatpush.msra.mxu0 %v1328
        %1399 = vmatpush.msra.mxu0 %v1326
        %1400 = vmatpush.msra.mxu0 %v1322
        %1401 = vmatpush.msra.mxu0 %v1320
        %1402 = vmatpush.msra.mxu0 %v1316
        %1403 = vmatpush.msra.mxu0 %v1314
        %1404 = vmatpush.msra.mxu0 %v1310
        %1405 = vmatpush.msra.mxu0 %v1308
        %1406 = vmatpush.msra.mxu0 %v1304
        %1407 = vmatpush.msra.mxu0 %v1302
        %1408 = vmatpush.msra.mxu0 %v1297
        %1409 = vmatpush.msra.mxu0 %v1294
        %1410 = vmatmul.f32.gmra.mxu0 %v1349
        %v1411 = vpop.f32.mrf.mxu0
        %v1412 = vadd.f32 %v1364, %v1411
        %1413 = vmatmul.f32.gmra.mxu0 %v1351
        %v1414 = vpop.f32.mrf.mxu0
        %v1415 = vadd.f32 %v1369, %v1414
        %1416 = vmatmul.f32.gmra.mxu0 %v1353
        %v1417 = vpop.f32.mrf.mxu0
        %v1418 = vadd.f32 %v1374, %v1417
        %1419 = vmatmul.f32.gmra.mxu0 %v1355
        %v1420 = vpop.f32.mrf.mxu0
        %v1421 = vadd.f32 %v1379, %v1420
        %1422 = vdwg.mxu0
        %1423 = vmatpush.msra.mxu0 0.0
        %1424 = vmatpush.msra.mxu0 0.0
        %1425 = vmatpush.msra.mxu0 0.0
        %1426 = vmatpush.msra.mxu0 0.0
        %1427 = vmatpush.msra.mxu0 0.0
        %1428 = vmatpush.msra.mxu0 0.0
        %1429 = vmatpush.msra.mxu0 0.0
        %1430 = vmatpush.msra.mxu0 0.0
        %1431 = vmatpush.msra.mxu0 0.0
        %1432 = vmatpush.msra.mxu0 0.0
        %1433 = vmatpush.msra.mxu0 0.0
        %1434 = vmatpush.msra.mxu0 0.0
        %1435 = vmatpush.msra.mxu0 0.0
        %1436 = vmatpush.msra.mxu0 0.0
        %1437 = vmatpush.msra.mxu0 %v1346
        %1438 = vmatpush.msra.mxu0 %v1344
        %1439 = vmatmul.f32.gmra.mxu0 %v1383
        %v1440 = vpop.f32.mrf.mxu0
        %v1441 = vadd.f32 %v1412, %v1440
        %1442 = vmatmul.f32.gmra.mxu0 %v1386
        %v1443 = vpop.f32.mrf.mxu0
        %v1444 = vadd.f32 %v1415, %v1443
        %1445 = vmatmul.f32.gmra.mxu0 %v1389
        %v1446 = vpop.f32.mrf.mxu0
        %v1447 = vadd.f32 %v1418, %v1446
        %1448 = vmatmul.f32.gmra.mxu0 %v1392
        %v1449 = vpop.f32.mrf.mxu0
        %v1450 = vadd.f32 %v1421, %v1449
        %1451 = vdwg.mxu0
        %vm1452 = vcmp.ge.f32.partialorder %v1441, 0.0
        %vm1453 = vcmp.ge.f32.partialorder %v1444, 0.0
        %vm1454 = vcmp.ge.f32.partialorder %v1447, 0.0
        %vm1455 = vcmp.ge.f32.partialorder %v1450, 0.0
        %v1456 = vmul.f32 %v1441, 0.01
        %v1457 = vmul.f32 %v1444, 0.01
        %v1458 = vmul.f32 %v1447, 0.01
        %v1459 = vmul.f32 %v1450, 0.01
        %v1460 = vsel %vm1452, %v1441, %v1456
        %v1461 = vsel %vm1453, %v1444, %v1457
        %v1462 = vsel %vm1454, %v1447, %v1458
        %v1463 = vsel %vm1455, %v1450, %v1459
        %v1464 = vld [vmem:[%s10] sm:$0xff]
        %v1465 = vld [vmem:[%s10 + $0x8] sm:$0xf]
        %v1466 = vld [vmem:[%s10 + $0xc] sm:$0xff]
        %v1467 = vld [vmem:[%s10 + $0x14] sm:$0xf]
        %v1468 = vld [vmem:[%s10 + $0x18] sm:$0xff]
        %v1469 = vld [vmem:[%s10 + $0x20] sm:$0xf]
        %v1470 = vld [vmem:[%s10 + $0x24] sm:$0xff]
        %v1471 = vld [vmem:[%s10 + $0x2c] sm:$0xf]
        %v1472 = vld [vmem:[%s10 + $0x30] sm:$0xff]
        %v1473 = vld [vmem:[%s10 + $0x38] sm:$0xf]
        %v1474 = vld [vmem:[%s10 + $0x3c] sm:$0xff]
        %v1475 = vld [vmem:[%s10 + $0x44] sm:$0xf]
        %v1476 = vld [vmem:[%s10 + $0x48] sm:$0xff]
        %v1477 = vld [vmem:[%s10 + $0x50] sm:$0xf]
        %v1478 = vld [vmem:[%s10 + $0x54] sm:$0xff]
        %v1479 = vld [vmem:[%s10 + $0x5c] sm:$0xf]
        %v1480 = vunpack.c.l.bf16 %v1464
        %v1481 = vunpack.c.h.bf16 %v1464
        %v1482 = vunpack.c.l.bf16 %v1465
        %v1483 = vunpack.c.l.bf16 %v1466
        %v1484 = vunpack.c.h.bf16 %v1466
        %v1485 = vunpack.c.l.bf16 %v1467
        %v1486 = vunpack.c.l.bf16 %v1468
        %v1487 = vunpack.c.h.bf16 %v1468
        %v1488 = vunpack.c.l.bf16 %v1469
        %v1489 = vunpack.c.l.bf16 %v1470
        %v1490 = vunpack.c.h.bf16 %v1470
        %v1491 = vunpack.c.l.bf16 %v1471
        %v1492 = vunpack.c.l.bf16 %v1472
        %v1493 = vunpack.c.h.bf16 %v1472
        %v1494 = vunpack.c.l.bf16 %v1473
        %v1495 = vunpack.c.l.bf16 %v1474
        %v1496 = vunpack.c.h.bf16 %v1474
        %v1497 = vunpack.c.l.bf16 %v1475
        %v1498 = vunpack.c.l.bf16 %v1476
        %v1499 = vunpack.c.h.bf16 %v1476
        %v1500 = vunpack.c.l.bf16 %v1477
        %v1501 = vunpack.c.l.bf16 %v1478
        %v1502 = vunpack.c.h.bf16 %v1478
        %v1503 = vunpack.c.l.bf16 %v1479
        %s1504 = scalar_lea.vmem %s10, 96
        %v1505 = vld [vmem:[%s1504] sm:$0xff]
        %v1506 = vld [vmem:[%s1504 + $0x8] sm:$0xf]
        %v1507 = vld [vmem:[%s1504 + $0xc] sm:$0xff]
        %v1508 = vld [vmem:[%s1504 + $0x14] sm:$0xf]
        %v1509 = vld [vmem:[%s1504 + $0x18] sm:$0xff]
        %v1510 = vld [vmem:[%s1504 + $0x20] sm:$0xf]
        %v1511 = vld [vmem:[%s1504 + $0x24] sm:$0xff]
        %v1512 = vld [vmem:[%s1504 + $0x2c] sm:$0xf]
        %v1513 = vld [vmem:[%s1504 + $0x30] sm:$0xff]
        %v1514 = vld [vmem:[%s1504 + $0x38] sm:$0xf]
        %v1515 = vld [vmem:[%s1504 + $0x3c] sm:$0xff]
        %v1516 = vld [vmem:[%s1504 + $0x44] sm:$0xf]
        %v1517 = vld [vmem:[%s1504 + $0x48] sm:$0xff]
        %v1518 = vld [vmem:[%s1504 + $0x50] sm:$0xf]
        %v1519 = vld [vmem:[%s1504 + $0x54] sm:$0xff]
        %v1520 = vld [vmem:[%s1504 + $0x5c] sm:$0xf]
        %v1521 = vunpack.c.l.bf16 %v1505
        %v1522 = vunpack.c.h.bf16 %v1505
        %v1523 = vunpack.c.l.bf16 %v1506
        %v1524 = vunpack.c.l.bf16 %v1507
        %v1525 = vunpack.c.h.bf16 %v1507
        %v1526 = vunpack.c.l.bf16 %v1508
        %v1527 = vunpack.c.l.bf16 %v1509
        %v1528 = vunpack.c.h.bf16 %v1509
        %v1529 = vunpack.c.l.bf16 %v1510
        %v1530 = vunpack.c.l.bf16 %v1511
        %v1531 = vunpack.c.h.bf16 %v1511
        %v1532 = vunpack.c.l.bf16 %v1512
        %v1533 = vunpack.c.l.bf16 %v1513
        %v1534 = vunpack.c.h.bf16 %v1513
        %v1535 = vunpack.c.l.bf16 %v1514
        %v1536 = vunpack.c.l.bf16 %v1515
        %v1537 = vunpack.c.h.bf16 %v1515
        %v1538 = vunpack.c.l.bf16 %v1516
        %v1539 = vunpack.c.l.bf16 %v1517
        %v1540 = vunpack.c.h.bf16 %v1517
        %v1541 = vunpack.c.l.bf16 %v1518
        %v1542 = vunpack.c.l.bf16 %v1519
        %v1543 = vunpack.c.h.bf16 %v1519
        %v1544 = vunpack.c.l.bf16 %v1520
        %v1546 = vsel %vm1265, %v1461, 0
        %v1549 = vsel %vm1272, %v1542, 0
        %v1552 = vsel %vm1272, %v1543, 0
        %v1555 = vsel %vm1272, %v1544, 0
        %1557 = vmatpush.msra.mxu0 0.0
        %1558 = vmatpush.msra.mxu0 0.0
        %1559 = vmatpush.msra.mxu0 0.0
        %1560 = vmatpush.msra.mxu0 0.0
        %1561 = vmatpush.msra.mxu0 0.0
        %1562 = vmatpush.msra.mxu0 0.0
        %1563 = vmatpush.msra.mxu0 0.0
        %1564 = vmatpush.msra.mxu0 0.0
        %1565 = vmatpush.msra.mxu0 %v1549
        %1566 = vmatpush.msra.mxu0 %v1539
        %1567 = vmatpush.msra.mxu0 %v1536
        %1568 = vmatpush.msra.mxu0 %v1533
        %1569 = vmatpush.msra.mxu0 %v1530
        %1570 = vmatpush.msra.mxu0 %v1527
        %1571 = vmatpush.msra.mxu0 %v1524
        %1572 = vmatpush.msra.mxu0 %v1521
        %1573 = vmatmul.f32.gmra.mxu0 %v1546
        %v1574 = vpop.f32.mrf.mxu0
        %v1575 = vadd.f32 0.0, %v1574
        %1576 = vdwg.mxu0
        %1577 = vmatpush.msra.mxu0 0.0
        %1578 = vmatpush.msra.mxu0 0.0
        %1579 = vmatpush.msra.mxu0 0.0
        %1580 = vmatpush.msra.mxu0 0.0
        %1581 = vmatpush.msra.mxu0 0.0
        %1582 = vmatpush.msra.mxu0 0.0
        %1583 = vmatpush.msra.mxu0 0.0
        %1584 = vmatpush.msra.mxu0 0.0
        %1585 = vmatpush.msra.mxu0 %v1552
        %1586 = vmatpush.msra.mxu0 %v1540
        %1587 = vmatpush.msra.mxu0 %v1537
        %1588 = vmatpush.msra.mxu0 %v1534
        %1589 = vmatpush.msra.mxu0 %v1531
        %1590 = vmatpush.msra.mxu0 %v1528
        %1591 = vmatpush.msra.mxu0 %v1525
        %1592 = vmatpush.msra.mxu0 %v1522
        %1593 = vmatmul.f32.gmra.mxu0 %v1546
        %v1594 = vpop.f32.mrf.mxu0
        %v1595 = vadd.f32 0.0, %v1594
        %1596 = vdwg.mxu0
        %1597 = vmatpush.msra.mxu0 0.0
        %1598 = vmatpush.msra.mxu0 0.0
        %1599 = vmatpush.msra.mxu0 0.0
        %1600 = vmatpush.msra.mxu0 0.0
        %1601 = vmatpush.msra.mxu0 0.0
        %1602 = vmatpush.msra.mxu0 0.0
        %1603 = vmatpush.msra.mxu0 0.0
        %1604 = vmatpush.msra.mxu0 0.0
        %1605 = vmatpush.msra.mxu0 %v1555
        %1606 = vmatpush.msra.mxu0 %v1541
        %1607 = vmatpush.msra.mxu0 %v1538
        %1608 = vmatpush.msra.mxu0 %v1535
        %1609 = vmatpush.msra.mxu0 %v1532
        %1610 = vmatpush.msra.mxu0 %v1529
        %1611 = vmatpush.msra.mxu0 %v1526
        %1612 = vmatpush.msra.mxu0 %v1523
        %1613 = vmatmul.f32.gmra.mxu0 %v1546
        %v1614 = vpop.f32.mrf.mxu0
        %v1615 = vadd.f32 0.0, %v1614
        %1616 = vdwg.mxu0
        %v1618 = vsel %vm1265, %v1460, 0
        %v1621 = vsel %vm1272, %v1501, 0
        %v1624 = vsel %vm1272, %v1502, 0
        %v1627 = vsel %vm1272, %v1503, 0
        %1629 = vmatpush.msra.mxu0 0.0
        %1630 = vmatpush.msra.mxu0 0.0
        %1631 = vmatpush.msra.mxu0 0.0
        %1632 = vmatpush.msra.mxu0 0.0
        %1633 = vmatpush.msra.mxu0 0.0
        %1634 = vmatpush.msra.mxu0 0.0
        %1635 = vmatpush.msra.mxu0 0.0
        %1636 = vmatpush.msra.mxu0 0.0
        %1637 = vmatpush.msra.mxu0 %v1621
        %1638 = vmatpush.msra.mxu0 %v1498
        %1639 = vmatpush.msra.mxu0 %v1495
        %1640 = vmatpush.msra.mxu0 %v1492
        %1641 = vmatpush.msra.mxu0 %v1489
        %1642 = vmatpush.msra.mxu0 %v1486
        %1643 = vmatpush.msra.mxu0 %v1483
        %1644 = vmatpush.msra.mxu0 %v1480
        %1645 = vmatmul.f32.gmra.mxu0 %v1618
        %v1646 = vpop.f32.mrf.mxu0
        %v1647 = vadd.f32 %v1575, %v1646
        %1648 = vdwg.mxu0
        %1649 = vmatpush.msra.mxu0 0.0
        %1650 = vmatpush.msra.mxu0 0.0
        %1651 = vmatpush.msra.mxu0 0.0
        %1652 = vmatpush.msra.mxu0 0.0
        %1653 = vmatpush.msra.mxu0 0.0
        %1654 = vmatpush.msra.mxu0 0.0
        %1655 = vmatpush.msra.mxu0 0.0
        %1656 = vmatpush.msra.mxu0 0.0
        %1657 = vmatpush.msra.mxu0 %v1624
        %1658 = vmatpush.msra.mxu0 %v1499
        %1659 = vmatpush.msra.mxu0 %v1496
        %1660 = vmatpush.msra.mxu0 %v1493
        %1661 = vmatpush.msra.mxu0 %v1490
        %1662 = vmatpush.msra.mxu0 %v1487
        %1663 = vmatpush.msra.mxu0 %v1484
        %1664 = vmatpush.msra.mxu0 %v1481
        %1665 = vmatmul.f32.gmra.mxu0 %v1618
        %v1666 = vpop.f32.mrf.mxu0
        %v1667 = vadd.f32 %v1595, %v1666
        %1668 = vdwg.mxu0
        %1669 = vmatpush.msra.mxu0 0.0
        %1670 = vmatpush.msra.mxu0 0.0
        %1671 = vmatpush.msra.mxu0 0.0
        %1672 = vmatpush.msra.mxu0 0.0
        %1673 = vmatpush.msra.mxu0 0.0
        %1674 = vmatpush.msra.mxu0 0.0
        %1675 = vmatpush.msra.mxu0 0.0
        %1676 = vmatpush.msra.mxu0 0.0
        %1677 = vmatpush.msra.mxu0 %v1627
        %1678 = vmatpush.msra.mxu0 %v1500
        %1679 = vmatpush.msra.mxu0 %v1497
        %1680 = vmatpush.msra.mxu0 %v1494
        %1681 = vmatpush.msra.mxu0 %v1491
        %1682 = vmatpush.msra.mxu0 %v1488
        %1683 = vmatpush.msra.mxu0 %v1485
        %1684 = vmatpush.msra.mxu0 %v1482
        %1685 = vmatmul.f32.gmra.mxu0 %v1618
        %v1686 = vpop.f32.mrf.mxu0
        %v1687 = vadd.f32 %v1615, %v1686
        %1688 = vdwg.mxu0
        %s1689 = scalar_lea.vmem %s10, 192
        %v1690 = vld [vmem:[%s1689] sm:$0xff]
        %v1691 = vld [vmem:[%s1689 + $0x8] sm:$0xf]
        %v1692 = vld [vmem:[%s1689 + $0xc] sm:$0xff]
        %v1693 = vld [vmem:[%s1689 + $0x14] sm:$0xf]
        %v1694 = vld [vmem:[%s1689 + $0x18] sm:$0xff]
        %v1695 = vld [vmem:[%s1689 + $0x20] sm:$0xf]
        %v1696 = vld [vmem:[%s1689 + $0x24] sm:$0xff]
        %v1697 = vld [vmem:[%s1689 + $0x2c] sm:$0xf]
        %v1698 = vld [vmem:[%s1689 + $0x30] sm:$0xff]
        %v1699 = vld [vmem:[%s1689 + $0x38] sm:$0xf]
        %v1700 = vld [vmem:[%s1689 + $0x3c] sm:$0xff]
        %v1701 = vld [vmem:[%s1689 + $0x44] sm:$0xf]
        %v1702 = vld [vmem:[%s1689 + $0x48] sm:$0xff]
        %v1703 = vld [vmem:[%s1689 + $0x50] sm:$0xf]
        %v1704 = vld [vmem:[%s1689 + $0x54] sm:$0xff]
        %v1705 = vld [vmem:[%s1689 + $0x5c] sm:$0xf]
        %v1706 = vunpack.c.l.bf16 %v1690
        %v1707 = vunpack.c.h.bf16 %v1690
        %v1708 = vunpack.c.l.bf16 %v1691
        %v1709 = vunpack.c.l.bf16 %v1692
        %v1710 = vunpack.c.h.bf16 %v1692
        %v1711 = vunpack.c.l.bf16 %v1693
        %v1712 = vunpack.c.l.bf16 %v1694
        %v1713 = vunpack.c.h.bf16 %v1694
        %v1714 = vunpack.c.l.bf16 %v1695
        %v1715 = vunpack.c.l.bf16 %v1696
        %v1716 = vunpack.c.h.bf16 %v1696
        %v1717 = vunpack.c.l.bf16 %v1697
        %v1718 = vunpack.c.l.bf16 %v1698
        %v1719 = vunpack.c.h.bf16 %v1698
        %v1720 = vunpack.c.l.bf16 %v1699
        %v1721 = vunpack.c.l.bf16 %v1700
        %v1722 = vunpack.c.h.bf16 %v1700
        %v1723 = vunpack.c.l.bf16 %v1701
        %v1724 = vunpack.c.l.bf16 %v1702
        %v1725 = vunpack.c.h.bf16 %v1702
        %v1726 = vunpack.c.l.bf16 %v1703
        %v1727 = vunpack.c.l.bf16 %v1704
        %v1728 = vunpack.c.h.bf16 %v1704
        %v1729 = vunpack.c.l.bf16 %v1705
        %v1731 = vsel %vm1265, %v1462, 0
        %v1734 = vsel %vm1272, %v1727, 0
        %v1737 = vsel %vm1272, %v1728, 0
        %v1740 = vsel %vm1272, %v1729, 0
        %1742 = vmatpush.msra.mxu0 0.0
        %1743 = vmatpush.msra.mxu0 0.0
        %1744 = vmatpush.msra.mxu0 0.0
        %1745 = vmatpush.msra.mxu0 0.0
        %1746 = vmatpush.msra.mxu0 0.0
        %1747 = vmatpush.msra.mxu0 0.0
        %1748 = vmatpush.msra.mxu0 0.0
        %1749 = vmatpush.msra.mxu0 0.0
        %1750 = vmatpush.msra.mxu0 %v1734
        %1751 = vmatpush.msra.mxu0 %v1724
        %1752 = vmatpush.msra.mxu0 %v1721
        %1753 = vmatpush.msra.mxu0 %v1718
        %1754 = vmatpush.msra.mxu0 %v1715
        %1755 = vmatpush.msra.mxu0 %v1712
        %1756 = vmatpush.msra.mxu0 %v1709
        %1757 = vmatpush.msra.mxu0 %v1706
        %1758 = vmatmul.f32.gmra.mxu0 %v1731
        %v1759 = vpop.f32.mrf.mxu0
        %v1760 = vadd.f32 0.0, %v1759
        %1761 = vdwg.mxu0
        %1762 = vmatpush.msra.mxu0 0.0
        %1763 = vmatpush.msra.mxu0 0.0
        %1764 = vmatpush.msra.mxu0 0.0
        %1765 = vmatpush.msra.mxu0 0.0
        %1766 = vmatpush.msra.mxu0 0.0
        %1767 = vmatpush.msra.mxu0 0.0
        %1768 = vmatpush.msra.mxu0 0.0
        %1769 = vmatpush.msra.mxu0 0.0
        %1770 = vmatpush.msra.mxu0 %v1737
        %1771 = vmatpush.msra.mxu0 %v1725
        %1772 = vmatpush.msra.mxu0 %v1722
        %1773 = vmatpush.msra.mxu0 %v1719
        %1774 = vmatpush.msra.mxu0 %v1716
        %1775 = vmatpush.msra.mxu0 %v1713
        %1776 = vmatpush.msra.mxu0 %v1710
        %1777 = vmatpush.msra.mxu0 %v1707
        %1778 = vmatmul.f32.gmra.mxu0 %v1731
        %v1779 = vpop.f32.mrf.mxu0
        %v1780 = vadd.f32 0.0, %v1779
        %1781 = vdwg.mxu0
        %1782 = vmatpush.msra.mxu0 0.0
        %1783 = vmatpush.msra.mxu0 0.0
        %1784 = vmatpush.msra.mxu0 0.0
        %1785 = vmatpush.msra.mxu0 0.0
        %1786 = vmatpush.msra.mxu0 0.0
        %1787 = vmatpush.msra.mxu0 0.0
        %1788 = vmatpush.msra.mxu0 0.0
        %1789 = vmatpush.msra.mxu0 0.0
        %1790 = vmatpush.msra.mxu0 %v1740
        %1791 = vmatpush.msra.mxu0 %v1726
        %1792 = vmatpush.msra.mxu0 %v1723
        %1793 = vmatpush.msra.mxu0 %v1720
        %1794 = vmatpush.msra.mxu0 %v1717
        %1795 = vmatpush.msra.mxu0 %v1714
        %1796 = vmatpush.msra.mxu0 %v1711
        %1797 = vmatpush.msra.mxu0 %v1708
        %1798 = vmatmul.f32.gmra.mxu0 %v1731
        %v1799 = vpop.f32.mrf.mxu0
        %v1800 = vadd.f32 0.0, %v1799
        %1801 = vdwg.mxu0
        %v1802 = vadd.f32 %v1647, %v1760
        %v1803 = vadd.f32 %v1667, %v1780
        %v1804 = vadd.f32 %v1687, %v1800
        %s1805 = scalar_lea.vmem %s10, 288
        %v1806 = vld [vmem:[%s1805] sm:$0xff]
        %v1807 = vld [vmem:[%s1805 + $0x8] sm:$0xf]
        %v1808 = vld [vmem:[%s1805 + $0xc] sm:$0xff]
        %v1809 = vld [vmem:[%s1805 + $0x14] sm:$0xf]
        %v1810 = vld [vmem:[%s1805 + $0x18] sm:$0xff]
        %v1811 = vld [vmem:[%s1805 + $0x20] sm:$0xf]
        %v1812 = vld [vmem:[%s1805 + $0x24] sm:$0xff]
        %v1813 = vld [vmem:[%s1805 + $0x2c] sm:$0xf]
        %v1814 = vld [vmem:[%s1805 + $0x30] sm:$0xff]
        %v1815 = vld [vmem:[%s1805 + $0x38] sm:$0xf]
        %v1816 = vld [vmem:[%s1805 + $0x3c] sm:$0xff]
        %v1817 = vld [vmem:[%s1805 + $0x44] sm:$0xf]
        %v1818 = vld [vmem:[%s1805 + $0x48] sm:$0xff]
        %v1819 = vld [vmem:[%s1805 + $0x50] sm:$0xf]
        %v1820 = vld [vmem:[%s1805 + $0x54] sm:$0xff]
        %v1821 = vld [vmem:[%s1805 + $0x5c] sm:$0xf]
        %v1822 = vunpack.c.l.bf16 %v1806
        %v1823 = vunpack.c.h.bf16 %v1806
        %v1824 = vunpack.c.l.bf16 %v1807
        %v1825 = vunpack.c.l.bf16 %v1808
        %v1826 = vunpack.c.h.bf16 %v1808
        %v1827 = vunpack.c.l.bf16 %v1809
        %v1828 = vunpack.c.l.bf16 %v1810
        %v1829 = vunpack.c.h.bf16 %v1810
        %v1830 = vunpack.c.l.bf16 %v1811
        %v1831 = vunpack.c.l.bf16 %v1812
        %v1832 = vunpack.c.h.bf16 %v1812
        %v1833 = vunpack.c.l.bf16 %v1813
        %v1834 = vunpack.c.l.bf16 %v1814
        %v1835 = vunpack.c.h.bf16 %v1814
        %v1836 = vunpack.c.l.bf16 %v1815
        %v1837 = vunpack.c.l.bf16 %v1816
        %v1838 = vunpack.c.h.bf16 %v1816
        %v1839 = vunpack.c.l.bf16 %v1817
        %v1840 = vunpack.c.l.bf16 %v1818
        %v1841 = vunpack.c.h.bf16 %v1818
        %v1842 = vunpack.c.l.bf16 %v1819
        %v1843 = vunpack.c.l.bf16 %v1820
        %v1844 = vunpack.c.h.bf16 %v1820
        %v1845 = vunpack.c.l.bf16 %v1821
        %v1847 = vsel %vm1265, %v1463, 0
        %v1850 = vsel %vm1272, %v1843, 0
        %v1853 = vsel %vm1272, %v1844, 0
        %v1856 = vsel %vm1272, %v1845, 0
        %1858 = vmatpush.msra.mxu0 0.0
        %1859 = vmatpush.msra.mxu0 0.0
        %1860 = vmatpush.msra.mxu0 0.0
        %1861 = vmatpush.msra.mxu0 0.0
        %1862 = vmatpush.msra.mxu0 0.0
        %1863 = vmatpush.msra.mxu0 0.0
        %1864 = vmatpush.msra.mxu0 0.0
        %1865 = vmatpush.msra.mxu0 0.0
        %1866 = vmatpush.msra.mxu0 %v1850
        %1867 = vmatpush.msra.mxu0 %v1840
        %1868 = vmatpush.msra.mxu0 %v1837
        %1869 = vmatpush.msra.mxu0 %v1834
        %1870 = vmatpush.msra.mxu0 %v1831
        %1871 = vmatpush.msra.mxu0 %v1828
        %1872 = vmatpush.msra.mxu0 %v1825
        %1873 = vmatpush.msra.mxu0 %v1822
        %1874 = vmatmul.f32.gmra.mxu0 %v1847
        %v1875 = vpop.f32.mrf.mxu0
        %v1876 = vadd.f32 0.0, %v1875
        %1877 = vdwg.mxu0
        %1878 = vmatpush.msra.mxu0 0.0
        %1879 = vmatpush.msra.mxu0 0.0
        %1880 = vmatpush.msra.mxu0 0.0
        %1881 = vmatpush.msra.mxu0 0.0
        %1882 = vmatpush.msra.mxu0 0.0
        %1883 = vmatpush.msra.mxu0 0.0
        %1884 = vmatpush.msra.mxu0 0.0
        %1885 = vmatpush.msra.mxu0 0.0
        %1886 = vmatpush.msra.mxu0 %v1853
        %1887 = vmatpush.msra.mxu0 %v1841
        %1888 = vmatpush.msra.mxu0 %v1838
        %1889 = vmatpush.msra.mxu0 %v1835
        %1890 = vmatpush.msra.mxu0 %v1832
        %1891 = vmatpush.msra.mxu0 %v1829
        %1892 = vmatpush.msra.mxu0 %v1826
        %1893 = vmatpush.msra.mxu0 %v1823
        %1894 = vmatmul.f32.gmra.mxu0 %v1847
        %v1895 = vpop.f32.mrf.mxu0
        %v1896 = vadd.f32 0.0, %v1895
        %1897 = vdwg.mxu0
        %1898 = vmatpush.msra.mxu0 0.0
        %1899 = vmatpush.msra.mxu0 0.0
        %1900 = vmatpush.msra.mxu0 0.0
        %1901 = vmatpush.msra.mxu0 0.0
        %1902 = vmatpush.msra.mxu0 0.0
        %1903 = vmatpush.msra.mxu0 0.0
        %1904 = vmatpush.msra.mxu0 0.0
        %1905 = vmatpush.msra.mxu0 0.0
        %1906 = vmatpush.msra.mxu0 %v1856
        %1907 = vmatpush.msra.mxu0 %v1842
        %1908 = vmatpush.msra.mxu0 %v1839
        %1909 = vmatpush.msra.mxu0 %v1836
        %1910 = vmatpush.msra.mxu0 %v1833
        %1911 = vmatpush.msra.mxu0 %v1830
        %1912 = vmatpush.msra.mxu0 %v1827
        %1913 = vmatpush.msra.mxu0 %v1824
        %1914 = vmatmul.f32.gmra.mxu0 %v1847
        %v1915 = vpop.f32.mrf.mxu0
        %v1916 = vadd.f32 0.0, %v1915
        %1917 = vdwg.mxu0
        %v1918 = vadd.f32 %v1802, %v1876
        %v1919 = vadd.f32 %v1803, %v1896
        %v1920 = vadd.f32 %v1804, %v1916
        %1923 = vrot.lane.b32.xlu0 %v1918, 127
        %v1924 = vpop.permute.xlu0 %1923
        %1925 = vrot.lane.b32.xlu0 %v1919, 127
        %v1926 = vpop.permute.xlu0 %1925
        %vm1927 = vcmask 1039360
        %v1928 = vsel %vm1927, %v1924, %v1926
        %1931 = vrot.lane.b32.xlu0 %v1918, 126
        %v1932 = vpop.permute.xlu0 %1931
        %1933 = vrot.lane.b32.xlu0 %v1919, 126
        %v1934 = vpop.permute.xlu0 %1933
        %vm1935 = vcmask 1031168
        %v1936 = vsel %vm1935, %v1932, %v1934
        %1939 = vrot.lane.b32.xlu0 %v1918, 112
        %v1940 = vpop.permute.xlu0 %1939
        %1941 = vrot.lane.b32.xlu0 %v1919, 112
        %v1942 = vpop.permute.xlu0 %1941
        %vm1943 = vcmask 916480
        %v1944 = vsel %vm1943, %v1940, %v1942
        %1947 = vrot.lane.b32.xlu0 %v1918, 111
        %v1948 = vpop.permute.xlu0 %1947
        %1949 = vrot.lane.b32.xlu0 %v1919, 111
        %v1950 = vpop.permute.xlu0 %1949
        %vm1951 = vcmask 908288
        %v1952 = vsel %vm1951, %v1948, %v1950
        %1955 = vrot.lane.b32.xlu0 %v1918, 110
        %v1956 = vpop.permute.xlu0 %1955
        %1957 = vrot.lane.b32.xlu0 %v1919, 110
        %v1958 = vpop.permute.xlu0 %1957
        %vm1959 = vcmask 900096
        %v1960 = vsel %vm1959, %v1956, %v1958
        %1963 = vrot.lane.b32.xlu0 %v1918, 96
        %v1964 = vpop.permute.xlu0 %1963
        %1965 = vrot.lane.b32.xlu0 %v1919, 96
        %v1966 = vpop.permute.xlu0 %1965
        %vm1967 = vcmask 785408
        %v1968 = vsel %vm1967, %v1964, %v1966
        %1972 = vrot.lane.b32.xlu0 %v1918, 95
        %v1973 = vpop.permute.xlu0 %1972
        %1974 = vrot.lane.b32.xlu0 %v1919, 95
        %v1975 = vpop.permute.xlu0 %1974
        %1976 = vrot.lane.b32.xlu0 %v1920, 95
        %v1977 = vpop.permute.xlu0 %1976
        %vm1978 = vcmask 777216
        %v1979 = vsel %vm1978, %v1973, %v1975
        %v1980 = vsel %vm1978, %v1975, %v1977
        %1983 = vrot.lane.b32.xlu0 %v1918, 94
        %v1984 = vpop.permute.xlu0 %1983
        %1985 = vrot.lane.b32.xlu0 %v1919, 94
        %v1986 = vpop.permute.xlu0 %1985
        %1987 = vrot.lane.b32.xlu0 %v1920, 94
        %v1988 = vpop.permute.xlu0 %1987
        %vm1989 = vcmask 769024
        %v1990 = vsel %vm1989, %v1984, %v1986
        %v1991 = vsel %vm1989, %v1986, %v1988
        %v1994 = vld [vmem:[#allocation12] sm:$0xff]
        %v1995 = vld [vmem:[#allocation12 + $0x8] sm:$0xff]
        %v1996 = vld [vmem:[%s8] sm:$0xff]
        %v1997 = vld [vmem:[%s8 + $0x8] sm:$0xff]
        %1999 = vset.pattern.permute.xlu0 0
        %2000 = vperm.xlu0 %1999, %v1996
        %v2001 = vpop.permute.xlu0 %2000
        %2004 = vset.pattern.permute.xlu0 0
        %2005 = vperm.xlu0 %2004, %v1997
        %v2006 = vpop.permute.xlu0 %2005
        %vm2008 = vcmask 588800
        %v2010 = vsel %vm2008, %v1994, 0
        %v2013 = vsel %vm2008, %v1995, 0
        %2015 = vmatpush.msra.mxu0 0.0
        %2016 = vmatpush.msra.mxu0 0.0
        %2017 = vmatpush.msra.mxu0 0.0
        %2018 = vmatpush.msra.mxu0 0.0
        %2019 = vmatpush.msra.mxu0 0.0
        %2020 = vmatpush.msra.mxu0 0.0
        %2021 = vmatpush.msra.mxu0 0.0
        %2022 = vmatpush.msra.mxu0 %v1990
        %2023 = vmatpush.msra.mxu0 %v1979
        %2024 = vmatpush.msra.mxu0 %v1968
        %2025 = vmatpush.msra.mxu0 %v1960
        %2026 = vmatpush.msra.mxu0 %v1952
        %2027 = vmatpush.msra.mxu0 %v1944
        %2028 = vmatpush.msra.mxu0 %v1936
        %2029 = vmatpush.msra.mxu0 %v1928
        %2030 = vmatpush.msra.mxu0 %v1918
        %2031 = vmatmul.f32.gmra.mxu0 %v2010
        %v2032 = vpop.f32.mrf.mxu0
        %v2033 = vadd.f32 %v2001, %v2032
        %2034 = vmatmul.f32.gmra.mxu0 %v2013
        %v2035 = vpop.f32.mrf.mxu0
        %v2036 = vadd.f32 %v2006, %v2035
        %2037 = vdwg.mxu0
        %2038 = vmatpush.msra.mxu0 0.0
        %2039 = vmatpush.msra.mxu0 0.0
        %2040 = vmatpush.msra.mxu0 0.0
        %2041 = vmatpush.msra.mxu0 0.0
        %2042 = vmatpush.msra.mxu0 0.0
        %2043 = vmatpush.msra.mxu0 0.0
        %2044 = vmatpush.msra.mxu0 0.0
        %2045 = vmatpush.msra.mxu0 %v1991
        %2046 = vmatpush.msra.mxu0 %v1980
        %2047 = vmatpush.msra.mxu0 %v1966
        %2048 = vmatpush.msra.mxu0 %v1958
        %2049 = vmatpush.msra.mxu0 %v1950
        %2050 = vmatpush.msra.mxu0 %v1942
        %2051 = vmatpush.msra.mxu0 %v1934
        %2052 = vmatpush.msra.mxu0 %v1926
        %2053 = vmatpush.msra.mxu0 %v1919
        %2054 = vmatmul.f32.gmra.mxu0 %v2010
        %v2055 = vpop.f32.mrf.mxu0
        %v2056 = vadd.f32 %v2001, %v2055
        %2057 = vmatmul.f32.gmra.mxu0 %v2013
        %v2058 = vpop.f32.mrf.mxu0
        %v2059 = vadd.f32 %v2006, %v2058
        %2060 = vdwg.mxu0
        %v2061 = vand.u32 2147483647, %v2033
        %v2062 = vand.u32 2147483647, %v2056
        %v2063 = vand.u32 2147483647, %v2036
        %v2064 = vand.u32 2147483647, %v2059
        %v2065 = vsub.f32 0.0, %v2061
        %v2066 = vsub.f32 0.0, %v2062
        %v2067 = vsub.f32 0.0, %v2063
        %v2068 = vsub.f32 0.0, %v2064
        %v2069 = vmul.f32 %v2065, 1.442695
        %v2070 = vpow.pop %v2069
        %v2071 = vmul.f32 %v2066, 1.442695
        %v2072 = vpow.pop %v2071
        %v2073 = vmul.f32 %v2067, 1.442695
        %v2074 = vpow.pop %v2073
        %v2075 = vmul.f32 %v2068, 1.442695
        %v2076 = vpow.pop %v2075
        %vm2077 = vcmp.ge.f32.partialorder %v2033, 0.0
        %vm2078 = vcmp.ge.f32.partialorder %v2056, 0.0
        %vm2079 = vcmp.ge.f32.partialorder %v2036, 0.0
        %vm2080 = vcmp.ge.f32.partialorder %v2059, 0.0
        %v2081 = vadd.f32 %v2070, 1.0
        %v2082 = vadd.f32 %v2072, 1.0
        %v2083 = vadd.f32 %v2074, 1.0
        %v2084 = vadd.f32 %v2076, 1.0
        %v2085 = vrcp.pop %v2081
        %v2086 = vmul.f32 %v2081, %v2085
        %v2087 = vsub.f32 1.0, %v2086
        %v2088 = vmul.f32 %v2085, %v2087
        %v2089 = vadd.f32 %v2085, %v2088
        %vm2090 = vweird.f32 %v2081
        %vm2091 = vweird.f32 %v2085
        %vm2092 = vmor %vm2090, %vm2091
        %v2093 = vsel %vm2092, %v2085, %v2089
        %v2094 = vand.u32 2147483647, %v2081
        %vm2095 = vcmp.eq.f32.partialorder %v2094, 8.507059e+37
        %v2096 = vand.u32 %v2081, 2147483648
        %v2097 = vor.u32 1.1754944e-38, %v2096
        %v2098 = vsel %vm2095, %v2097, %v2093
        %v2099 = vmul.f32 1.0, %v2098
        %v2100 = vrcp.pop %v2082
        %v2101 = vmul.f32 %v2082, %v2100
        %v2102 = vsub.f32 1.0, %v2101
        %v2103 = vmul.f32 %v2100, %v2102
        %v2104 = vadd.f32 %v2100, %v2103
        %vm2105 = vweird.f32 %v2082
        %vm2106 = vweird.f32 %v2100
        %vm2107 = vmor %vm2105, %vm2106
        %v2108 = vsel %vm2107, %v2100, %v2104
        %v2109 = vand.u32 2147483647, %v2082
        %vm2110 = vcmp.eq.f32.partialorder %v2109, 8.507059e+37
        %v2111 = vand.u32 %v2082, 2147483648
        %v2112 = vor.u32 1.1754944e-38, %v2111
        %v2113 = vsel %vm2110, %v2112, %v2108
        %v2114 = vmul.f32 1.0, %v2113
        %v2115 = vrcp.pop %v2083
        %v2116 = vmul.f32 %v2083, %v2115
        %v2117 = vsub.f32 1.0, %v2116
        %v2118 = vmul.f32 %v2115, %v2117
        %v2119 = vadd.f32 %v2115, %v2118
        %vm2120 = vweird.f32 %v2083
        %vm2121 = vweird.f32 %v2115
        %vm2122 = vmor %vm2120, %vm2121
        %v2123 = vsel %vm2122, %v2115, %v2119
        %v2124 = vand.u32 2147483647, %v2083
        %vm2125 = vcmp.eq.f32.partialorder %v2124, 8.507059e+37
        %v2126 = vand.u32 %v2083, 2147483648
        %v2127 = vor.u32 1.1754944e-38, %v2126
        %v2128 = vsel %vm2125, %v2127, %v2123
        %v2129 = vmul.f32 1.0, %v2128
        %v2130 = vrcp.pop %v2084
        %v2131 = vmul.f32 %v2084, %v2130
        %v2132 = vsub.f32 1.0, %v2131
        %v2133 = vmul.f32 %v2130, %v2132
        %v2134 = vadd.f32 %v2130, %v2133
        %vm2135 = vweird.f32 %v2084
        %vm2136 = vweird.f32 %v2130
        %vm2137 = vmor %vm2135, %vm2136
        %v2138 = vsel %vm2137, %v2130, %v2134
        %v2139 = vand.u32 2147483647, %v2084
        %vm2140 = vcmp.eq.f32.partialorder %v2139, 8.507059e+37
        %v2141 = vand.u32 %v2084, 2147483648
        %v2142 = vor.u32 1.1754944e-38, %v2141
        %v2143 = vsel %vm2140, %v2142, %v2138
        %v2144 = vmul.f32 1.0, %v2143
        %v2145 = vmul.f32 %v2070, %v2098
        %v2146 = vmul.f32 %v2072, %v2113
        %v2147 = vmul.f32 %v2074, %v2128
        %v2148 = vmul.f32 %v2076, %v2143
        %v2149 = vsel %vm2077, %v2099, %v2145
        %v2150 = vsel %vm2078, %v2114, %v2146
        %v2151 = vsel %vm2079, %v2129, %v2147
        %v2152 = vsel %vm2080, %v2144, %v2148
        %v2153 = vld [vmem:[#allocation15] sm:$0xff]
        %v2154 = vld [vmem:[#allocation15 + $0x8] sm:$0xff]
        %v2155 = vld [vmem:[#allocation15 + $0x10] sm:$0xff]
        %v2156 = vld [vmem:[#allocation15 + $0x18] sm:$0xf]
        %v2157 = vld [vmem:[#allocation15 + $0x1c] sm:$0xff]
        %v2158 = vld [vmem:[#allocation15 + $0x24] sm:$0xff]
        %v2159 = vld [vmem:[#allocation15 + $0x2c] sm:$0xff]
        %v2160 = vld [vmem:[#allocation15 + $0x34] sm:$0xf]
        %v2161 = vld [vmem:[#allocation15 + $0x38] sm:$0xff]
        %v2162 = vld [vmem:[#allocation15 + $0x40] sm:$0xff]
        %v2163 = vld [vmem:[#allocation15 + $0x48] sm:$0xff]
        %v2164 = vld [vmem:[#allocation15 + $0x50] sm:$0xf]
        %v2165 = vld [vmem:[#allocation15 + $0x54] sm:$0xff]
        %v2166 = vld [vmem:[#allocation15 + $0x5c] sm:$0xff]
        %v2167 = vld [vmem:[#allocation15 + $0x64] sm:$0xff]
        %v2168 = vld [vmem:[#allocation15 + $0x6c] sm:$0xf]
        %v2169 = vld [vmem:[#allocation15 + $0x70] sm:$0xff]
        %v2170 = vld [vmem:[#allocation15 + $0x78] sm:$0xff]
        %v2171 = vld [vmem:[#allocation15 + $0x80] sm:$0xff]
        %v2172 = vld [vmem:[#allocation15 + $0x88] sm:$0xf]
        %v2173 = vld [vmem:[#allocation15 + $0x8c] sm:$0xff]
        %v2174 = vld [vmem:[#allocation15 + $0x94] sm:$0xff]
        %v2175 = vld [vmem:[#allocation15 + $0x9c] sm:$0xff]
        %v2176 = vld [vmem:[#allocation15 + $0xa4] sm:$0xf]
        %v2177 = vld [vmem:[#allocation15 + $0xa8] sm:$0xff]
        %v2178 = vld [vmem:[#allocation15 + $0xb0] sm:$0xff]
        %v2179 = vld [vmem:[#allocation15 + $0xb8] sm:$0xff]
        %v2180 = vld [vmem:[#allocation15 + $0xc0] sm:$0xf]
        %v2181 = vld [vmem:[#allocation15 + $0xc4] sm:$0xff]
        %v2182 = vld [vmem:[#allocation15 + $0xcc] sm:$0xff]
        %v2183 = vld [vmem:[#allocation15 + $0xd4] sm:$0xff]
        %v2184 = vld [vmem:[#allocation15 + $0xdc] sm:$0xf]
        %v2185 = vld [vmem:[#allocation15 + $0xe0] sm:$0xff]
        %v2186 = vld [vmem:[#allocation15 + $0xe8] sm:$0xff]
        %v2187 = vld [vmem:[#allocation15 + $0xf0] sm:$0xff]
        %v2188 = vld [vmem:[#allocation15 + $0xf8] sm:$0xf]
        %v2189 = vld [vmem:[#allocation15 + $0xfc] sm:$0xff]
        %v2190 = vld [vmem:[#allocation15 + $0x104] sm:$0xff]
        %v2191 = vld [vmem:[#allocation15 + $0x10c] sm:$0xff]
        %v2192 = vld [vmem:[#allocation15 + $0x114] sm:$0xf]
        %v2193 = vld [vmem:[#allocation15 + $0x118] sm:$0xff]
        %v2194 = vld [vmem:[#allocation15 + $0x120] sm:$0xff]
        %v2195 = vld [vmem:[#allocation15 + $0x128] sm:$0xff]
        %v2196 = vld [vmem:[#allocation15 + $0x130] sm:$0xf]
        %v2197 = vld [vmem:[#allocation15 + $0x134] sm:$0xff]
        %v2198 = vld [vmem:[#allocation15 + $0x13c] sm:$0xff]
        %v2199 = vld [vmem:[#allocation15 + $0x144] sm:$0xff]
        %v2200 = vld [vmem:[#allocation15 + $0x14c] sm:$0xf]
        %v2201 = vld [vmem:[#allocation15 + $0x150] sm:$0xff]
        %v2202 = vld [vmem:[#allocation15 + $0x158] sm:$0xff]
        %v2203 = vld [vmem:[#allocation15 + $0x160] sm:$0xff]
        %v2204 = vld [vmem:[#allocation15 + $0x168] sm:$0xf]
        %v2205 = vld [vmem:[#allocation15 + $0x16c] sm:$0xff]
        %v2206 = vld [vmem:[#allocation15 + $0x174] sm:$0xff]
        %v2207 = vld [vmem:[#allocation15 + $0x17c] sm:$0xff]
        %v2208 = vld [vmem:[#allocation15 + $0x184] sm:$0xf]
        %v2209 = vld [vmem:[#allocation15 + $0x188] sm:$0xff]
        %v2210 = vld [vmem:[#allocation15 + $0x190] sm:$0xff]
        %v2211 = vld [vmem:[#allocation15 + $0x198] sm:$0xff]
        %v2212 = vld [vmem:[#allocation15 + $0x1a0] sm:$0xf]
        %v2213 = vld [vmem:[#allocation15 + $0x1a4] sm:$0xff]
        %v2214 = vld [vmem:[#allocation15 + $0x1ac] sm:$0xff]
        %v2215 = vld [vmem:[#allocation15 + $0x1b4] sm:$0xff]
        %v2216 = vld [vmem:[#allocation15 + $0x1bc] sm:$0xf]
        %v2217 = vld [vmem:[#allocation15 + $0x1c0] sm:$0xff]
        %v2218 = vld [vmem:[#allocation15 + $0x1c8] sm:$0xff]
        %v2219 = vld [vmem:[#allocation15 + $0x1d0] sm:$0xff]
        %v2220 = vld [vmem:[#allocation15 + $0x1d8] sm:$0xf]
        %v2221 = vld [vmem:[#allocation15 + $0x1dc] sm:$0xff]
        %v2222 = vld [vmem:[#allocation15 + $0x1e4] sm:$0xff]
        %v2223 = vld [vmem:[#allocation15 + $0x1ec] sm:$0xff]
        %v2224 = vld [vmem:[#allocation15 + $0x1f4] sm:$0xf]
        %v2225 = vld [vmem:[#allocation15 + $0x1f8] sm:$0xff]
        %v2226 = vld [vmem:[#allocation15 + $0x200] sm:$0xff]
        %v2227 = vld [vmem:[#allocation15 + $0x208] sm:$0xff]
        %v2228 = vld [vmem:[#allocation15 + $0x210] sm:$0xf]
        %v2229 = vld [vmem:[#allocation15 + $0x214] sm:$0xff]
        %v2230 = vld [vmem:[#allocation15 + $0x21c] sm:$0xff]
        %v2231 = vld [vmem:[#allocation15 + $0x224] sm:$0xff]
        %v2232 = vld [vmem:[#allocation15 + $0x22c] sm:$0xf]
        %v2233 = vld [vmem:[#allocation15 + $0x230] sm:$0xff]
        %v2234 = vld [vmem:[#allocation15 + $0x238] sm:$0xff]
        %v2235 = vld [vmem:[#allocation15 + $0x240] sm:$0xff]
        %v2236 = vld [vmem:[#allocation15 + $0x248] sm:$0xf]
        %v2237 = vld [vmem:[#allocation15 + $0x24c] sm:$0xff]
        %v2238 = vld [vmem:[#allocation15 + $0x254] sm:$0xff]
        %v2239 = vld [vmem:[#allocation15 + $0x25c] sm:$0xff]
        %v2240 = vld [vmem:[#allocation15 + $0x264] sm:$0xf]
        %v2241 = vld [vmem:[#allocation15 + $0x268] sm:$0xff]
        %v2242 = vld [vmem:[#allocation15 + $0x270] sm:$0xff]
        %v2243 = vld [vmem:[#allocation15 + $0x278] sm:$0xff]
        %v2244 = vld [vmem:[#allocation15 + $0x280] sm:$0xf]
        %v2245 = vld [vmem:[#allocation15 + $0x284] sm:$0xff]
        %v2246 = vld [vmem:[#allocation15 + $0x28c] sm:$0xff]
        %v2247 = vld [vmem:[#allocation15 + $0x294] sm:$0xff]
        %v2248 = vld [vmem:[#allocation15 + $0x29c] sm:$0xf]
        %v2249 = vld [vmem:[#allocation15 + $0x2a0] sm:$0xff]
        %v2250 = vld [vmem:[#allocation15 + $0x2a8] sm:$0xff]
        %v2251 = vld [vmem:[#allocation15 + $0x2b0] sm:$0xff]
        %v2252 = vld [vmem:[#allocation15 + $0x2b8] sm:$0xf]
        %v2253 = vld [vmem:[#allocation15 + $0x2bc] sm:$0xff]
        %v2254 = vld [vmem:[#allocation15 + $0x2c4] sm:$0xff]
        %v2255 = vld [vmem:[#allocation15 + $0x2cc] sm:$0xff]
        %v2256 = vld [vmem:[#allocation15 + $0x2d4] sm:$0xf]
        %v2257 = vld [vmem:[#allocation15 + $0x2d8] sm:$0xff]
        %v2258 = vld [vmem:[#allocation15 + $0x2e0] sm:$0xff]
        %v2259 = vld [vmem:[#allocation15 + $0x2e8] sm:$0xff]
        %v2260 = vld [vmem:[#allocation15 + $0x2f0] sm:$0xf]
        %v2261 = vld [vmem:[#allocation15 + $0x2f4] sm:$0xff]
        %v2262 = vld [vmem:[#allocation15 + $0x2fc] sm:$0xff]
        %v2263 = vld [vmem:[#allocation15 + $0x304] sm:$0xff]
        %v2264 = vld [vmem:[#allocation15 + $0x30c] sm:$0xf]
        %v2265 = vunpack.c.l.bf16 %v2153
        %v2266 = vunpack.c.h.bf16 %v2153
        %v2267 = vunpack.c.l.bf16 %v2154
        %v2268 = vunpack.c.h.bf16 %v2154
        %v2269 = vunpack.c.l.bf16 %v2155
        %v2270 = vunpack.c.h.bf16 %v2155
        %v2271 = vunpack.c.l.bf16 %v2156
        %v2272 = vunpack.c.l.bf16 %v2157
        %v2273 = vunpack.c.h.bf16 %v2157
        %v2274 = vunpack.c.l.bf16 %v2158
        %v2275 = vunpack.c.h.bf16 %v2158
        %v2276 = vunpack.c.l.bf16 %v2159
        %v2277 = vunpack.c.h.bf16 %v2159
        %v2278 = vunpack.c.l.bf16 %v2160
        %v2279 = vunpack.c.l.bf16 %v2161
        %v2280 = vunpack.c.h.bf16 %v2161
        %v2281 = vunpack.c.l.bf16 %v2162
        %v2282 = vunpack.c.h.bf16 %v2162
        %v2283 = vunpack.c.l.bf16 %v2163
        %v2284 = vunpack.c.h.bf16 %v2163
        %v2285 = vunpack.c.l.bf16 %v2164
        %v2286 = vunpack.c.l.bf16 %v2165
        %v2287 = vunpack.c.h.bf16 %v2165
        %v2288 = vunpack.c.l.bf16 %v2166
        %v2289 = vunpack.c.h.bf16 %v2166
        %v2290 = vunpack.c.l.bf16 %v2167
        %v2291 = vunpack.c.h.bf16 %v2167
        %v2292 = vunpack.c.l.bf16 %v2168
        %v2293 = vunpack.c.l.bf16 %v2169
        %v2294 = vunpack.c.h.bf16 %v2169
        %v2295 = vunpack.c.l.bf16 %v2170
        %v2296 = vunpack.c.h.bf16 %v2170
        %v2297 = vunpack.c.l.bf16 %v2171
        %v2298 = vunpack.c.h.bf16 %v2171
        %v2299 = vunpack.c.l.bf16 %v2172
        %v2300 = vunpack.c.l.bf16 %v2173
        %v2301 = vunpack.c.h.bf16 %v2173
        %v2302 = vunpack.c.l.bf16 %v2174
        %v2303 = vunpack.c.h.bf16 %v2174
        %v2304 = vunpack.c.l.bf16 %v2175
        %v2305 = vunpack.c.h.bf16 %v2175
        %v2306 = vunpack.c.l.bf16 %v2176
        %v2307 = vunpack.c.l.bf16 %v2177
        %v2308 = vunpack.c.h.bf16 %v2177
        %v2309 = vunpack.c.l.bf16 %v2178
        %v2310 = vunpack.c.h.bf16 %v2178
        %v2311 = vunpack.c.l.bf16 %v2179
        %v2312 = vunpack.c.h.bf16 %v2179
        %v2313 = vunpack.c.l.bf16 %v2180
        %v2314 = vunpack.c.l.bf16 %v2181
        %v2315 = vunpack.c.h.bf16 %v2181
        %v2316 = vunpack.c.l.bf16 %v2182
        %v2317 = vunpack.c.h.bf16 %v2182
        %v2318 = vunpack.c.l.bf16 %v2183
        %v2319 = vunpack.c.h.bf16 %v2183
        %v2320 = vunpack.c.l.bf16 %v2184
        %v2321 = vunpack.c.l.bf16 %v2185
        %v2322 = vunpack.c.h.bf16 %v2185
        %v2323 = vunpack.c.l.bf16 %v2186
        %v2324 = vunpack.c.h.bf16 %v2186
        %v2325 = vunpack.c.l.bf16 %v2187
        %v2326 = vunpack.c.h.bf16 %v2187
        %v2327 = vunpack.c.l.bf16 %v2188
        %v2328 = vunpack.c.l.bf16 %v2189
        %v2329 = vunpack.c.h.bf16 %v2189
        %v2330 = vunpack.c.l.bf16 %v2190
        %v2331 = vunpack.c.h.bf16 %v2190
        %v2332 = vunpack.c.l.bf16 %v2191
        %v2333 = vunpack.c.h.bf16 %v2191
        %v2334 = vunpack.c.l.bf16 %v2192
        %v2335 = vunpack.c.l.bf16 %v2193
        %v2336 = vunpack.c.h.bf16 %v2193
        %v2337 = vunpack.c.l.bf16 %v2194
        %v2338 = vunpack.c.h.bf16 %v2194
        %v2339 = vunpack.c.l.bf16 %v2195
        %v2340 = vunpack.c.h.bf16 %v2195
        %v2341 = vunpack.c.l.bf16 %v2196
        %v2342 = vunpack.c.l.bf16 %v2197
        %v2343 = vunpack.c.h.bf16 %v2197
        %v2344 = vunpack.c.l.bf16 %v2198
        %v2345 = vunpack.c.h.bf16 %v2198
        %v2346 = vunpack.c.l.bf16 %v2199
        %v2347 = vunpack.c.h.bf16 %v2199
        %v2348 = vunpack.c.l.bf16 %v2200
        %v2349 = vunpack.c.l.bf16 %v2201
        %v2350 = vunpack.c.h.bf16 %v2201
        %v2351 = vunpack.c.l.bf16 %v2202
        %v2352 = vunpack.c.h.bf16 %v2202
        %v2353 = vunpack.c.l.bf16 %v2203
        %v2354 = vunpack.c.h.bf16 %v2203
        %v2355 = vunpack.c.l.bf16 %v2204
        %v2356 = vunpack.c.l.bf16 %v2205
        %v2357 = vunpack.c.h.bf16 %v2205
        %v2358 = vunpack.c.l.bf16 %v2206
        %v2359 = vunpack.c.h.bf16 %v2206
        %v2360 = vunpack.c.l.bf16 %v2207
        %v2361 = vunpack.c.h.bf16 %v2207
        %v2362 = vunpack.c.l.bf16 %v2208
        %v2363 = vunpack.c.l.bf16 %v2209
        %v2364 = vunpack.c.h.bf16 %v2209
        %v2365 = vunpack.c.l.bf16 %v2210
        %v2366 = vunpack.c.h.bf16 %v2210
        %v2367 = vunpack.c.l.bf16 %v2211
        %v2368 = vunpack.c.h.bf16 %v2211
        %v2369 = vunpack.c.l.bf16 %v2212
        %v2370 = vunpack.c.l.bf16 %v2213
        %v2371 = vunpack.c.h.bf16 %v2213
        %v2372 = vunpack.c.l.bf16 %v2214
        %v2373 = vunpack.c.h.bf16 %v2214
        %v2374 = vunpack.c.l.bf16 %v2215
        %v2375 = vunpack.c.h.bf16 %v2215
        %v2376 = vunpack.c.l.bf16 %v2216
        %v2377 = vunpack.c.l.bf16 %v2217
        %v2378 = vunpack.c.h.bf16 %v2217
        %v2379 = vunpack.c.l.bf16 %v2218
        %v2380 = vunpack.c.h.bf16 %v2218
        %v2381 = vunpack.c.l.bf16 %v2219
        %v2382 = vunpack.c.h.bf16 %v2219
        %v2383 = vunpack.c.l.bf16 %v2220
        %v2384 = vunpack.c.l.bf16 %v2221
        %v2385 = vunpack.c.h.bf16 %v2221
        %v2386 = vunpack.c.l.bf16 %v2222
        %v2387 = vunpack.c.h.bf16 %v2222
        %v2388 = vunpack.c.l.bf16 %v2223
        %v2389 = vunpack.c.h.bf16 %v2223
        %v2390 = vunpack.c.l.bf16 %v2224
        %v2391 = vunpack.c.l.bf16 %v2225
        %v2392 = vunpack.c.h.bf16 %v2225
        %v2393 = vunpack.c.l.bf16 %v2226
        %v2394 = vunpack.c.h.bf16 %v2226
        %v2395 = vunpack.c.l.bf16 %v2227
        %v2396 = vunpack.c.h.bf16 %v2227
        %v2397 = vunpack.c.l.bf16 %v2228
        %v2398 = vunpack.c.l.bf16 %v2229
        %v2399 = vunpack.c.h.bf16 %v2229
        %v2400 = vunpack.c.l.bf16 %v2230
        %v2401 = vunpack.c.h.bf16 %v2230
        %v2402 = vunpack.c.l.bf16 %v2231
        %v2403 = vunpack.c.h.bf16 %v2231
        %v2404 = vunpack.c.l.bf16 %v2232
        %v2405 = vunpack.c.l.bf16 %v2233
        %v2406 = vunpack.c.h.bf16 %v2233
        %v2407 = vunpack.c.l.bf16 %v2234
        %v2408 = vunpack.c.h.bf16 %v2234
        %v2409 = vunpack.c.l.bf16 %v2235
        %v2410 = vunpack.c.h.bf16 %v2235
        %v2411 = vunpack.c.l.bf16 %v2236
        %v2412 = vunpack.c.l.bf16 %v2237
        %v2413 = vunpack.c.h.bf16 %v2237
        %v2414 = vunpack.c.l.bf16 %v2238
        %v2415 = vunpack.c.h.bf16 %v2238
        %v2416 = vunpack.c.l.bf16 %v2239
        %v2417 = vunpack.c.h.bf16 %v2239
        %v2418 = vunpack.c.l.bf16 %v2240
        %v2419 = vunpack.c.l.bf16 %v2241
        %v2420 = vunpack.c.h.bf16 %v2241
        %v2421 = vunpack.c.l.bf16 %v2242
        %v2422 = vunpack.c.h.bf16 %v2242
        %v2423 = vunpack.c.l.bf16 %v2243
        %v2424 = vunpack.c.h.bf16 %v2243
        %v2425 = vunpack.c.l.bf16 %v2244
        %v2426 = vunpack.c.l.bf16 %v2245
        %v2427 = vunpack.c.h.bf16 %v2245
        %v2428 = vunpack.c.l.bf16 %v2246
        %v2429 = vunpack.c.h.bf16 %v2246
        %v2430 = vunpack.c.l.bf16 %v2247
        %v2431 = vunpack.c.h.bf16 %v2247
        %v2432 = vunpack.c.l.bf16 %v2248
        %v2433 = vunpack.c.l.bf16 %v2249
        %v2434 = vunpack.c.h.bf16 %v2249
        %v2435 = vunpack.c.l.bf16 %v2250
        %v2436 = vunpack.c.h.bf16 %v2250
        %v2437 = vunpack.c.l.bf16 %v2251
        %v2438 = vunpack.c.h.bf16 %v2251
        %v2439 = vunpack.c.l.bf16 %v2252
        %v2440 = vunpack.c.l.bf16 %v2253
        %v2441 = vunpack.c.h.bf16 %v2253
        %v2442 = vunpack.c.l.bf16 %v2254
        %v2443 = vunpack.c.h.bf16 %v2254
        %v2444 = vunpack.c.l.bf16 %v2255
        %v2445 = vunpack.c.h.bf16 %v2255
        %v2446 = vunpack.c.l.bf16 %v2256
        %v2447 = vunpack.c.l.bf16 %v2257
        %v2448 = vunpack.c.h.bf16 %v2257
        %v2449 = vunpack.c.l.bf16 %v2258
        %v2450 = vunpack.c.h.bf16 %v2258
        %v2451 = vunpack.c.l.bf16 %v2259
        %v2452 = vunpack.c.h.bf16 %v2259
        %v2453 = vunpack.c.l.bf16 %v2260
        %v2454 = vunpack.c.l.bf16 %v2261
        %v2455 = vunpack.c.h.bf16 %v2261
        %v2456 = vunpack.c.l.bf16 %v2262
        %v2457 = vunpack.c.h.bf16 %v2262
        %v2458 = vunpack.c.l.bf16 %v2263
        %v2459 = vunpack.c.h.bf16 %v2263
        %v2460 = vunpack.c.l.bf16 %v2264
        %s2461 = scalar_lea.vmem [#allocation15], 784
        %v2462 = vld [vmem:[%s2461] sm:$0xff]
        %v2463 = vld [vmem:[%s2461 + $0x8] sm:$0xff]
        %v2464 = vld [vmem:[%s2461 + $0x10] sm:$0xff]
        %v2465 = vld [vmem:[%s2461 + $0x18] sm:$0xf]
        %v2466 = vld [vmem:[%s2461 + $0x1c] sm:$0xff]
        %v2467 = vld [vmem:[%s2461 + $0x24] sm:$0xff]
        %v2468 = vld [vmem:[%s2461 + $0x2c] sm:$0xff]
        %v2469 = vld [vmem:[%s2461 + $0x34] sm:$0xf]
        %v2470 = vld [vmem:[%s2461 + $0x38] sm:$0xff]
        %v2471 = vld [vmem:[%s2461 + $0x40] sm:$0xff]
        %v2472 = vld [vmem:[%s2461 + $0x48] sm:$0xff]
        %v2473 = vld [vmem:[%s2461 + $0x50] sm:$0xf]
        %v2474 = vld [vmem:[%s2461 + $0x54] sm:$0xff]
        %v2475 = vld [vmem:[%s2461 + $0x5c] sm:$0xff]
        %v2476 = vld [vmem:[%s2461 + $0x64] sm:$0xff]
        %v2477 = vld [vmem:[%s2461 + $0x6c] sm:$0xf]
        %v2478 = vld [vmem:[%s2461 + $0x70] sm:$0xff]
        %v2479 = vld [vmem:[%s2461 + $0x78] sm:$0xff]
        %v2480 = vld [vmem:[%s2461 + $0x80] sm:$0xff]
        %v2481 = vld [vmem:[%s2461 + $0x88] sm:$0xf]
        %v2482 = vld [vmem:[%s2461 + $0x8c] sm:$0xff]
        %v2483 = vld [vmem:[%s2461 + $0x94] sm:$0xff]
        %v2484 = vld [vmem:[%s2461 + $0x9c] sm:$0xff]
        %v2485 = vld [vmem:[%s2461 + $0xa4] sm:$0xf]
        %v2486 = vld [vmem:[%s2461 + $0xa8] sm:$0xff]
        %v2487 = vld [vmem:[%s2461 + $0xb0] sm:$0xff]
        %v2488 = vld [vmem:[%s2461 + $0xb8] sm:$0xff]
        %v2489 = vld [vmem:[%s2461 + $0xc0] sm:$0xf]
        %v2490 = vld [vmem:[%s2461 + $0xc4] sm:$0xff]
        %v2491 = vld [vmem:[%s2461 + $0xcc] sm:$0xff]
        %v2492 = vld [vmem:[%s2461 + $0xd4] sm:$0xff]
        %v2493 = vld [vmem:[%s2461 + $0xdc] sm:$0xf]
        %v2494 = vld [vmem:[%s2461 + $0xe0] sm:$0xff]
        %v2495 = vld [vmem:[%s2461 + $0xe8] sm:$0xff]
        %v2496 = vld [vmem:[%s2461 + $0xf0] sm:$0xff]
        %v2497 = vld [vmem:[%s2461 + $0xf8] sm:$0xf]
        %v2498 = vld [vmem:[%s2461 + $0xfc] sm:$0xff]
        %v2499 = vld [vmem:[%s2461 + $0x104] sm:$0xff]
        %v2500 = vld [vmem:[%s2461 + $0x10c] sm:$0xff]
        %v2501 = vld [vmem:[%s2461 + $0x114] sm:$0xf]
        %v2502 = vld [vmem:[%s2461 + $0x118] sm:$0xff]
        %v2503 = vld [vmem:[%s2461 + $0x120] sm:$0xff]
        %v2504 = vld [vmem:[%s2461 + $0x128] sm:$0xff]
        %v2505 = vld [vmem:[%s2461 + $0x130] sm:$0xf]
        %v2506 = vld [vmem:[%s2461 + $0x134] sm:$0xff]
        %v2507 = vld [vmem:[%s2461 + $0x13c] sm:$0xff]
        %v2508 = vld [vmem:[%s2461 + $0x144] sm:$0xff]
        %v2509 = vld [vmem:[%s2461 + $0x14c] sm:$0xf]
        %v2510 = vld [vmem:[%s2461 + $0x150] sm:$0xff]
        %v2511 = vld [vmem:[%s2461 + $0x158] sm:$0xff]
        %v2512 = vld [vmem:[%s2461 + $0x160] sm:$0xff]
        %v2513 = vld [vmem:[%s2461 + $0x168] sm:$0xf]
        %v2514 = vld [vmem:[%s2461 + $0x16c] sm:$0xff]
        %v2515 = vld [vmem:[%s2461 + $0x174] sm:$0xff]
        %v2516 = vld [vmem:[%s2461 + $0x17c] sm:$0xff]
        %v2517 = vld [vmem:[%s2461 + $0x184] sm:$0xf]
        %v2518 = vld [vmem:[%s2461 + $0x188] sm:$0xff]
        %v2519 = vld [vmem:[%s2461 + $0x190] sm:$0xff]
        %v2520 = vld [vmem:[%s2461 + $0x198] sm:$0xff]
        %v2521 = vld [vmem:[%s2461 + $0x1a0] sm:$0xf]
        %v2522 = vld [vmem:[%s2461 + $0x1a4] sm:$0xff]
        %v2523 = vld [vmem:[%s2461 + $0x1ac] sm:$0xff]
        %v2524 = vld [vmem:[%s2461 + $0x1b4] sm:$0xff]
        %v2525 = vld [vmem:[%s2461 + $0x1bc] sm:$0xf]
        %v2526 = vld [vmem:[%s2461 + $0x1c0] sm:$0xff]
        %v2527 = vld [vmem:[%s2461 + $0x1c8] sm:$0xff]
        %v2528 = vld [vmem:[%s2461 + $0x1d0] sm:$0xff]
        %v2529 = vld [vmem:[%s2461 + $0x1d8] sm:$0xf]
        %v2530 = vld [vmem:[%s2461 + $0x1dc] sm:$0xff]
        %v2531 = vld [vmem:[%s2461 + $0x1e4] sm:$0xff]
        %v2532 = vld [vmem:[%s2461 + $0x1ec] sm:$0xff]
        %v2533 = vld [vmem:[%s2461 + $0x1f4] sm:$0xf]
        %v2534 = vld [vmem:[%s2461 + $0x1f8] sm:$0xff]
        %v2535 = vld [vmem:[%s2461 + $0x200] sm:$0xff]
        %v2536 = vld [vmem:[%s2461 + $0x208] sm:$0xff]
        %v2537 = vld [vmem:[%s2461 + $0x210] sm:$0xf]
        %v2538 = vld [vmem:[%s2461 + $0x214] sm:$0xff]
        %v2539 = vld [vmem:[%s2461 + $0x21c] sm:$0xff]
        %v2540 = vld [vmem:[%s2461 + $0x224] sm:$0xff]
        %v2541 = vld [vmem:[%s2461 + $0x22c] sm:$0xf]
        %v2542 = vld [vmem:[%s2461 + $0x230] sm:$0xff]
        %v2543 = vld [vmem:[%s2461 + $0x238] sm:$0xff]
        %v2544 = vld [vmem:[%s2461 + $0x240] sm:$0xff]
        %v2545 = vld [vmem:[%s2461 + $0x248] sm:$0xf]
        %v2546 = vld [vmem:[%s2461 + $0x24c] sm:$0xff]
        %v2547 = vld [vmem:[%s2461 + $0x254] sm:$0xff]
        %v2548 = vld [vmem:[%s2461 + $0x25c] sm:$0xff]
        %v2549 = vld [vmem:[%s2461 + $0x264] sm:$0xf]
        %v2550 = vld [vmem:[%s2461 + $0x268] sm:$0xff]
        %v2551 = vld [vmem:[%s2461 + $0x270] sm:$0xff]
        %v2552 = vld [vmem:[%s2461 + $0x278] sm:$0xff]
        %v2553 = vld [vmem:[%s2461 + $0x280] sm:$0xf]
        %v2554 = vld [vmem:[%s2461 + $0x284] sm:$0xff]
        %v2555 = vld [vmem:[%s2461 + $0x28c] sm:$0xff]
        %v2556 = vld [vmem:[%s2461 + $0x294] sm:$0xff]
        %v2557 = vld [vmem:[%s2461 + $0x29c] sm:$0xf]
        %v2558 = vld [vmem:[%s2461 + $0x2a0] sm:$0xff]
        %v2559 = vld [vmem:[%s2461 + $0x2a8] sm:$0xff]
        %v2560 = vld [vmem:[%s2461 + $0x2b0] sm:$0xff]
        %v2561 = vld [vmem:[%s2461 + $0x2b8] sm:$0xf]
        %v2562 = vld [vmem:[%s2461 + $0x2bc] sm:$0xff]
        %v2563 = vld [vmem:[%s2461 + $0x2c4] sm:$0xff]
        %v2564 = vld [vmem:[%s2461 + $0x2cc] sm:$0xff]
        %v2565 = vld [vmem:[%s2461 + $0x2d4] sm:$0xf]
        %v2566 = vld [vmem:[%s2461 + $0x2d8] sm:$0xff]
        %v2567 = vld [vmem:[%s2461 + $0x2e0] sm:$0xff]
        %v2568 = vld [vmem:[%s2461 + $0x2e8] sm:$0xff]
        %v2569 = vld [vmem:[%s2461 + $0x2f0] sm:$0xf]
        %v2570 = vld [vmem:[%s2461 + $0x2f4] sm:$0xff]
        %v2571 = vld [vmem:[%s2461 + $0x2fc] sm:$0xff]
        %v2572 = vld [vmem:[%s2461 + $0x304] sm:$0xff]
        %v2573 = vld [vmem:[%s2461 + $0x30c] sm:$0xf]
        %v2574 = vunpack.c.l.bf16 %v2462
        %v2575 = vunpack.c.h.bf16 %v2462
        %v2576 = vunpack.c.l.bf16 %v2463
        %v2577 = vunpack.c.h.bf16 %v2463
        %v2578 = vunpack.c.l.bf16 %v2464
        %v2579 = vunpack.c.h.bf16 %v2464
        %v2580 = vunpack.c.l.bf16 %v2465
        %v2581 = vunpack.c.l.bf16 %v2466
        %v2582 = vunpack.c.h.bf16 %v2466
        %v2583 = vunpack.c.l.bf16 %v2467
        %v2584 = vunpack.c.h.bf16 %v2467
        %v2585 = vunpack.c.l.bf16 %v2468
        %v2586 = vunpack.c.h.bf16 %v2468
        %v2587 = vunpack.c.l.bf16 %v2469
        %v2588 = vunpack.c.l.bf16 %v2470
        %v2589 = vunpack.c.h.bf16 %v2470
        %v2590 = vunpack.c.l.bf16 %v2471
        %v2591 = vunpack.c.h.bf16 %v2471
        %v2592 = vunpack.c.l.bf16 %v2472
        %v2593 = vunpack.c.h.bf16 %v2472
        %v2594 = vunpack.c.l.bf16 %v2473
        %v2595 = vunpack.c.l.bf16 %v2474
        %v2596 = vunpack.c.h.bf16 %v2474
        %v2597 = vunpack.c.l.bf16 %v2475
        %v2598 = vunpack.c.h.bf16 %v2475
        %v2599 = vunpack.c.l.bf16 %v2476
        %v2600 = vunpack.c.h.bf16 %v2476
        %v2601 = vunpack.c.l.bf16 %v2477
        %v2602 = vunpack.c.l.bf16 %v2478
        %v2603 = vunpack.c.h.bf16 %v2478
        %v2604 = vunpack.c.l.bf16 %v2479
        %v2605 = vunpack.c.h.bf16 %v2479
        %v2606 = vunpack.c.l.bf16 %v2480
        %v2607 = vunpack.c.h.bf16 %v2480
        %v2608 = vunpack.c.l.bf16 %v2481
        %v2609 = vunpack.c.l.bf16 %v2482
        %v2610 = vunpack.c.h.bf16 %v2482
        %v2611 = vunpack.c.l.bf16 %v2483
        %v2612 = vunpack.c.h.bf16 %v2483
        %v2613 = vunpack.c.l.bf16 %v2484
        %v2614 = vunpack.c.h.bf16 %v2484
        %v2615 = vunpack.c.l.bf16 %v2485
        %v2616 = vunpack.c.l.bf16 %v2486
        %v2617 = vunpack.c.h.bf16 %v2486
        %v2618 = vunpack.c.l.bf16 %v2487
        %v2619 = vunpack.c.h.bf16 %v2487
        %v2620 = vunpack.c.l.bf16 %v2488
        %v2621 = vunpack.c.h.bf16 %v2488
        %v2622 = vunpack.c.l.bf16 %v2489
        %v2623 = vunpack.c.l.bf16 %v2490
        %v2624 = vunpack.c.h.bf16 %v2490
        %v2625 = vunpack.c.l.bf16 %v2491
        %v2626 = vunpack.c.h.bf16 %v2491
        %v2627 = vunpack.c.l.bf16 %v2492
        %v2628 = vunpack.c.h.bf16 %v2492
        %v2629 = vunpack.c.l.bf16 %v2493
        %v2630 = vunpack.c.l.bf16 %v2494
        %v2631 = vunpack.c.h.bf16 %v2494
        %v2632 = vunpack.c.l.bf16 %v2495
        %v2633 = vunpack.c.h.bf16 %v2495
        %v2634 = vunpack.c.l.bf16 %v2496
        %v2635 = vunpack.c.h.bf16 %v2496
        %v2636 = vunpack.c.l.bf16 %v2497
        %v2637 = vunpack.c.l.bf16 %v2498
        %v2638 = vunpack.c.h.bf16 %v2498
        %v2639 = vunpack.c.l.bf16 %v2499
        %v2640 = vunpack.c.h.bf16 %v2499
        %v2641 = vunpack.c.l.bf16 %v2500
        %v2642 = vunpack.c.h.bf16 %v2500
        %v2643 = vunpack.c.l.bf16 %v2501
        %v2644 = vunpack.c.l.bf16 %v2502
        %v2645 = vunpack.c.h.bf16 %v2502
        %v2646 = vunpack.c.l.bf16 %v2503
        %v2647 = vunpack.c.h.bf16 %v2503
        %v2648 = vunpack.c.l.bf16 %v2504
        %v2649 = vunpack.c.h.bf16 %v2504
        %v2650 = vunpack.c.l.bf16 %v2505
        %v2651 = vunpack.c.l.bf16 %v2506
        %v2652 = vunpack.c.h.bf16 %v2506
        %v2653 = vunpack.c.l.bf16 %v2507
        %v2654 = vunpack.c.h.bf16 %v2507
        %v2655 = vunpack.c.l.bf16 %v2508
        %v2656 = vunpack.c.h.bf16 %v2508
        %v2657 = vunpack.c.l.bf16 %v2509
        %v2658 = vunpack.c.l.bf16 %v2510
        %v2659 = vunpack.c.h.bf16 %v2510
        %v2660 = vunpack.c.l.bf16 %v2511
        %v2661 = vunpack.c.h.bf16 %v2511
        %v2662 = vunpack.c.l.bf16 %v2512
        %v2663 = vunpack.c.h.bf16 %v2512
        %v2664 = vunpack.c.l.bf16 %v2513
        %v2665 = vunpack.c.l.bf16 %v2514
        %v2666 = vunpack.c.h.bf16 %v2514
        %v2667 = vunpack.c.l.bf16 %v2515
        %v2668 = vunpack.c.h.bf16 %v2515
        %v2669 = vunpack.c.l.bf16 %v2516
        %v2670 = vunpack.c.h.bf16 %v2516
        %v2671 = vunpack.c.l.bf16 %v2517
        %v2672 = vunpack.c.l.bf16 %v2518
        %v2673 = vunpack.c.h.bf16 %v2518
        %v2674 = vunpack.c.l.bf16 %v2519
        %v2675 = vunpack.c.h.bf16 %v2519
        %v2676 = vunpack.c.l.bf16 %v2520
        %v2677 = vunpack.c.h.bf16 %v2520
        %v2678 = vunpack.c.l.bf16 %v2521
        %v2679 = vunpack.c.l.bf16 %v2522
        %v2680 = vunpack.c.h.bf16 %v2522
        %v2681 = vunpack.c.l.bf16 %v2523
        %v2682 = vunpack.c.h.bf16 %v2523
        %v2683 = vunpack.c.l.bf16 %v2524
        %v2684 = vunpack.c.h.bf16 %v2524
        %v2685 = vunpack.c.l.bf16 %v2525
        %v2686 = vunpack.c.l.bf16 %v2526
        %v2687 = vunpack.c.h.bf16 %v2526
        %v2688 = vunpack.c.l.bf16 %v2527
        %v2689 = vunpack.c.h.bf16 %v2527
        %v2690 = vunpack.c.l.bf16 %v2528
        %v2691 = vunpack.c.h.bf16 %v2528
        %v2692 = vunpack.c.l.bf16 %v2529
        %v2693 = vunpack.c.l.bf16 %v2530
        %v2694 = vunpack.c.h.bf16 %v2530
        %v2695 = vunpack.c.l.bf16 %v2531
        %v2696 = vunpack.c.h.bf16 %v2531
        %v2697 = vunpack.c.l.bf16 %v2532
        %v2698 = vunpack.c.h.bf16 %v2532
        %v2699 = vunpack.c.l.bf16 %v2533
        %v2700 = vunpack.c.l.bf16 %v2534
        %v2701 = vunpack.c.h.bf16 %v2534
        %v2702 = vunpack.c.l.bf16 %v2535
        %v2703 = vunpack.c.h.bf16 %v2535
        %v2704 = vunpack.c.l.bf16 %v2536
        %v2705 = vunpack.c.h.bf16 %v2536
        %v2706 = vunpack.c.l.bf16 %v2537
        %v2707 = vunpack.c.l.bf16 %v2538
        %v2708 = vunpack.c.h.bf16 %v2538
        %v2709 = vunpack.c.l.bf16 %v2539
        %v2710 = vunpack.c.h.bf16 %v2539
        %v2711 = vunpack.c.l.bf16 %v2540
        %v2712 = vunpack.c.h.bf16 %v2540
        %v2713 = vunpack.c.l.bf16 %v2541
        %v2714 = vunpack.c.l.bf16 %v2542
        %v2715 = vunpack.c.h.bf16 %v2542
        %v2716 = vunpack.c.l.bf16 %v2543
        %v2717 = vunpack.c.h.bf16 %v2543
        %v2718 = vunpack.c.l.bf16 %v2544
        %v2719 = vunpack.c.h.bf16 %v2544
        %v2720 = vunpack.c.l.bf16 %v2545
        %v2721 = vunpack.c.l.bf16 %v2546
        %v2722 = vunpack.c.h.bf16 %v2546
        %v2723 = vunpack.c.l.bf16 %v2547
        %v2724 = vunpack.c.h.bf16 %v2547
        %v2725 = vunpack.c.l.bf16 %v2548
        %v2726 = vunpack.c.h.bf16 %v2548
        %v2727 = vunpack.c.l.bf16 %v2549
        %v2728 = vunpack.c.l.bf16 %v2550
        %v2729 = vunpack.c.h.bf16 %v2550
        %v2730 = vunpack.c.l.bf16 %v2551
        %v2731 = vunpack.c.h.bf16 %v2551
        %v2732 = vunpack.c.l.bf16 %v2552
        %v2733 = vunpack.c.h.bf16 %v2552
        %v2734 = vunpack.c.l.bf16 %v2553
        %v2735 = vunpack.c.l.bf16 %v2554
        %v2736 = vunpack.c.h.bf16 %v2554
        %v2737 = vunpack.c.l.bf16 %v2555
        %v2738 = vunpack.c.h.bf16 %v2555
        %v2739 = vunpack.c.l.bf16 %v2556
        %v2740 = vunpack.c.h.bf16 %v2556
        %v2741 = vunpack.c.l.bf16 %v2557
        %v2742 = vunpack.c.l.bf16 %v2558
        %v2743 = vunpack.c.h.bf16 %v2558
        %v2744 = vunpack.c.l.bf16 %v2559
        %v2745 = vunpack.c.h.bf16 %v2559
        %v2746 = vunpack.c.l.bf16 %v2560
        %v2747 = vunpack.c.h.bf16 %v2560
        %v2748 = vunpack.c.l.bf16 %v2561
        %v2749 = vunpack.c.l.bf16 %v2562
        %v2750 = vunpack.c.h.bf16 %v2562
        %v2751 = vunpack.c.l.bf16 %v2563
        %v2752 = vunpack.c.h.bf16 %v2563
        %v2753 = vunpack.c.l.bf16 %v2564
        %v2754 = vunpack.c.h.bf16 %v2564
        %v2755 = vunpack.c.l.bf16 %v2565
        %v2756 = vunpack.c.l.bf16 %v2566
        %v2757 = vunpack.c.h.bf16 %v2566
        %v2758 = vunpack.c.l.bf16 %v2567
        %v2759 = vunpack.c.h.bf16 %v2567
        %v2760 = vunpack.c.l.bf16 %v2568
        %v2761 = vunpack.c.h.bf16 %v2568
        %v2762 = vunpack.c.l.bf16 %v2569
        %v2763 = vunpack.c.l.bf16 %v2570
        %v2764 = vunpack.c.h.bf16 %v2570
        %v2765 = vunpack.c.l.bf16 %v2571
        %v2766 = vunpack.c.h.bf16 %v2571
        %v2767 = vunpack.c.l.bf16 %v2572
        %v2768 = vunpack.c.h.bf16 %v2572
        %v2769 = vunpack.c.l.bf16 %v2573
        %v2772 = vrot.slane %v2149, 4
        %v2773 = vrot.slane %v2150, 4
        %v2775 = vsel %vm1967, %v2773, 0
        %2777 = vmatpush.msra.mxu0 %v2679
        %2778 = vmatpush.msra.mxu0 %v2672
        %2779 = vmatpush.msra.mxu0 %v2665
        %2780 = vmatpush.msra.mxu0 %v2658
        %2781 = vmatpush.msra.mxu0 %v2651
        %2782 = vmatpush.msra.mxu0 %v2644
        %2783 = vmatpush.msra.mxu0 %v2637
        %2784 = vmatpush.msra.mxu0 %v2630
        %2785 = vmatpush.msra.mxu0 %v2623
        %2786 = vmatpush.msra.mxu0 %v2616
        %2787 = vmatpush.msra.mxu0 %v2609
        %2788 = vmatpush.msra.mxu0 %v2602
        %2789 = vmatpush.msra.mxu0 %v2595
        %2790 = vmatpush.msra.mxu0 %v2588
        %2791 = vmatpush.msra.mxu0 %v2581
        %2792 = vmatpush.msra.mxu0 %v2574
        %2793 = vmatmul.f32.gmra.mxu0 %v2772
        %v2794 = vpop.f32.mrf.mxu0
        %v2795 = vadd.f32 0.0, %v2794
        %2796 = vdwg.mxu0
        %2797 = vmatpush.msra.mxu0 0.0
        %2798 = vmatpush.msra.mxu0 0.0
        %2799 = vmatpush.msra.mxu0 0.0
        %2800 = vmatpush.msra.mxu0 0.0
        %2801 = vmatpush.msra.mxu0 %v2763
        %2802 = vmatpush.msra.mxu0 %v2756
        %2803 = vmatpush.msra.mxu0 %v2749
        %2804 = vmatpush.msra.mxu0 %v2742
        %2805 = vmatpush.msra.mxu0 %v2735
        %2806 = vmatpush.msra.mxu0 %v2728
        %2807 = vmatpush.msra.mxu0 %v2721
        %2808 = vmatpush.msra.mxu0 %v2714
        %2809 = vmatpush.msra.mxu0 %v2707
        %2810 = vmatpush.msra.mxu0 %v2700
        %2811 = vmatpush.msra.mxu0 %v2693
        %2812 = vmatpush.msra.mxu0 %v2686
        %2813 = vmatmul.f32.gmra.mxu0 %v2775
        %v2814 = vpop.f32.mrf.mxu0
        %v2815 = vadd.f32 %v2795, %v2814
        %2816 = vdwg.mxu0
        %2817 = vmatpush.msra.mxu0 %v2680
        %2818 = vmatpush.msra.mxu0 %v2673
        %2819 = vmatpush.msra.mxu0 %v2666
        %2820 = vmatpush.msra.mxu0 %v2659
        %2821 = vmatpush.msra.mxu0 %v2652
        %2822 = vmatpush.msra.mxu0 %v2645
        %2823 = vmatpush.msra.mxu0 %v2638
        %2824 = vmatpush.msra.mxu0 %v2631
        %2825 = vmatpush.msra.mxu0 %v2624
        %2826 = vmatpush.msra.mxu0 %v2617
        %2827 = vmatpush.msra.mxu0 %v2610
        %2828 = vmatpush.msra.mxu0 %v2603
        %2829 = vmatpush.msra.mxu0 %v2596
        %2830 = vmatpush.msra.mxu0 %v2589
        %2831 = vmatpush.msra.mxu0 %v2582
        %2832 = vmatpush.msra.mxu0 %v2575
        %2833 = vmatmul.f32.gmra.mxu0 %v2772
        %v2834 = vpop.f32.mrf.mxu0
        %v2835 = vadd.f32 0.0, %v2834
        %2836 = vdwg.mxu0
        %2837 = vmatpush.msra.mxu0 0.0
        %2838 = vmatpush.msra.mxu0 0.0
        %2839 = vmatpush.msra.mxu0 0.0
        %2840 = vmatpush.msra.mxu0 0.0
        %2841 = vmatpush.msra.mxu0 %v2764
        %2842 = vmatpush.msra.mxu0 %v2757
        %2843 = vmatpush.msra.mxu0 %v2750
        %2844 = vmatpush.msra.mxu0 %v2743
        %2845 = vmatpush.msra.mxu0 %v2736
        %2846 = vmatpush.msra.mxu0 %v2729
        %2847 = vmatpush.msra.mxu0 %v2722
        %2848 = vmatpush.msra.mxu0 %v2715
        %2849 = vmatpush.msra.mxu0 %v2708
        %2850 = vmatpush.msra.mxu0 %v2701
        %2851 = vmatpush.msra.mxu0 %v2694
        %2852 = vmatpush.msra.mxu0 %v2687
        %2853 = vmatmul.f32.gmra.mxu0 %v2775
        %v2854 = vpop.f32.mrf.mxu0
        %v2855 = vadd.f32 %v2835, %v2854
        %2856 = vdwg.mxu0
        %2857 = vmatpush.msra.mxu0 %v2681
        %2858 = vmatpush.msra.mxu0 %v2674
        %2859 = vmatpush.msra.mxu0 %v2667
        %2860 = vmatpush.msra.mxu0 %v2660
        %2861 = vmatpush.msra.mxu0 %v2653
        %2862 = vmatpush.msra.mxu0 %v2646
        %2863 = vmatpush.msra.mxu0 %v2639
        %2864 = vmatpush.msra.mxu0 %v2632
        %2865 = vmatpush.msra.mxu0 %v2625
        %2866 = vmatpush.msra.mxu0 %v2618
        %2867 = vmatpush.msra.mxu0 %v2611
        %2868 = vmatpush.msra.mxu0 %v2604
        %2869 = vmatpush.msra.mxu0 %v2597
        %2870 = vmatpush.msra.mxu0 %v2590
        %2871 = vmatpush.msra.mxu0 %v2583
        %2872 = vmatpush.msra.mxu0 %v2576
        %2873 = vmatmul.f32.gmra.mxu0 %v2772
        %v2874 = vpop.f32.mrf.mxu0
        %v2875 = vadd.f32 0.0, %v2874
        %2876 = vdwg.mxu0
        %2877 = vmatpush.msra.mxu0 0.0
        %2878 = vmatpush.msra.mxu0 0.0
        %2879 = vmatpush.msra.mxu0 0.0
        %2880 = vmatpush.msra.mxu0 0.0
        %2881 = vmatpush.msra.mxu0 %v2765
        %2882 = vmatpush.msra.mxu0 %v2758
        %2883 = vmatpush.msra.mxu0 %v2751
        %2884 = vmatpush.msra.mxu0 %v2744
        %2885 = vmatpush.msra.mxu0 %v2737
        %2886 = vmatpush.msra.mxu0 %v2730
        %2887 = vmatpush.msra.mxu0 %v2723
        %2888 = vmatpush.msra.mxu0 %v2716
        %2889 = vmatpush.msra.mxu0 %v2709
        %2890 = vmatpush.msra.mxu0 %v2702
        %2891 = vmatpush.msra.mxu0 %v2695
        %2892 = vmatpush.msra.mxu0 %v2688
        %2893 = vmatmul.f32.gmra.mxu0 %v2775
        %v2894 = vpop.f32.mrf.mxu0
        %v2895 = vadd.f32 %v2875, %v2894
        %2896 = vdwg.mxu0
        %2897 = vmatpush.msra.mxu0 %v2682
        %2898 = vmatpush.msra.mxu0 %v2675
        %2899 = vmatpush.msra.mxu0 %v2668
        %2900 = vmatpush.msra.mxu0 %v2661
        %2901 = vmatpush.msra.mxu0 %v2654
        %2902 = vmatpush.msra.mxu0 %v2647
        %2903 = vmatpush.msra.mxu0 %v2640
        %2904 = vmatpush.msra.mxu0 %v2633
        %2905 = vmatpush.msra.mxu0 %v2626
        %2906 = vmatpush.msra.mxu0 %v2619
        %2907 = vmatpush.msra.mxu0 %v2612
        %2908 = vmatpush.msra.mxu0 %v2605
        %2909 = vmatpush.msra.mxu0 %v2598
        %2910 = vmatpush.msra.mxu0 %v2591
        %2911 = vmatpush.msra.mxu0 %v2584
        %2912 = vmatpush.msra.mxu0 %v2577
        %2913 = vmatmul.f32.gmra.mxu0 %v2772
        %v2914 = vpop.f32.mrf.mxu0
        %v2915 = vadd.f32 0.0, %v2914
        %2916 = vdwg.mxu0
        %2917 = vmatpush.msra.mxu0 0.0
        %2918 = vmatpush.msra.mxu0 0.0
        %2919 = vmatpush.msra.mxu0 0.0
        %2920 = vmatpush.msra.mxu0 0.0
        %2921 = vmatpush.msra.mxu0 %v2766
        %2922 = vmatpush.msra.mxu0 %v2759
        %2923 = vmatpush.msra.mxu0 %v2752
        %2924 = vmatpush.msra.mxu0 %v2745
        %2925 = vmatpush.msra.mxu0 %v2738
        %2926 = vmatpush.msra.mxu0 %v2731
        %2927 = vmatpush.msra.mxu0 %v2724
        %2928 = vmatpush.msra.mxu0 %v2717
        %2929 = vmatpush.msra.mxu0 %v2710
        %2930 = vmatpush.msra.mxu0 %v2703
        %2931 = vmatpush.msra.mxu0 %v2696
        %2932 = vmatpush.msra.mxu0 %v2689
        %2933 = vmatmul.f32.gmra.mxu0 %v2775
        %v2934 = vpop.f32.mrf.mxu0
        %v2935 = vadd.f32 %v2915, %v2934
        %2936 = vdwg.mxu0
        %2937 = vmatpush.msra.mxu0 %v2683
        %2938 = vmatpush.msra.mxu0 %v2676
        %2939 = vmatpush.msra.mxu0 %v2669
        %2940 = vmatpush.msra.mxu0 %v2662
        %2941 = vmatpush.msra.mxu0 %v2655
        %2942 = vmatpush.msra.mxu0 %v2648
        %2943 = vmatpush.msra.mxu0 %v2641
        %2944 = vmatpush.msra.mxu0 %v2634
        %2945 = vmatpush.msra.mxu0 %v2627
        %2946 = vmatpush.msra.mxu0 %v2620
        %2947 = vmatpush.msra.mxu0 %v2613
        %2948 = vmatpush.msra.mxu0 %v2606
        %2949 = vmatpush.msra.mxu0 %v2599
        %2950 = vmatpush.msra.mxu0 %v2592
        %2951 = vmatpush.msra.mxu0 %v2585
        %2952 = vmatpush.msra.mxu0 %v2578
        %2953 = vmatmul.f32.gmra.mxu0 %v2772
        %v2954 = vpop.f32.mrf.mxu0
        %v2955 = vadd.f32 0.0, %v2954
        %2956 = vdwg.mxu0
        %2957 = vmatpush.msra.mxu0 0.0
        %2958 = vmatpush.msra.mxu0 0.0
        %2959 = vmatpush.msra.mxu0 0.0
        %2960 = vmatpush.msra.mxu0 0.0
        %2961 = vmatpush.msra.mxu0 %v2767
        %2962 = vmatpush.msra.mxu0 %v2760
        %2963 = vmatpush.msra.mxu0 %v2753
        %2964 = vmatpush.msra.mxu0 %v2746
        %2965 = vmatpush.msra.mxu0 %v2739
        %2966 = vmatpush.msra.mxu0 %v2732
        %2967 = vmatpush.msra.mxu0 %v2725
        %2968 = vmatpush.msra.mxu0 %v2718
        %2969 = vmatpush.msra.mxu0 %v2711
        %2970 = vmatpush.msra.mxu0 %v2704
        %2971 = vmatpush.msra.mxu0 %v2697
        %2972 = vmatpush.msra.mxu0 %v2690
        %2973 = vmatmul.f32.gmra.mxu0 %v2775
        %v2974 = vpop.f32.mrf.mxu0
        %v2975 = vadd.f32 %v2955, %v2974
        %2976 = vdwg.mxu0
        %2977 = vmatpush.msra.mxu0 %v2684
        %2978 = vmatpush.msra.mxu0 %v2677
        %2979 = vmatpush.msra.mxu0 %v2670
        %2980 = vmatpush.msra.mxu0 %v2663
        %2981 = vmatpush.msra.mxu0 %v2656
        %2982 = vmatpush.msra.mxu0 %v2649
        %2983 = vmatpush.msra.mxu0 %v2642
        %2984 = vmatpush.msra.mxu0 %v2635
        %2985 = vmatpush.msra.mxu0 %v2628
        %2986 = vmatpush.msra.mxu0 %v2621
        %2987 = vmatpush.msra.mxu0 %v2614
        %2988 = vmatpush.msra.mxu0 %v2607
        %2989 = vmatpush.msra.mxu0 %v2600
        %2990 = vmatpush.msra.mxu0 %v2593
        %2991 = vmatpush.msra.mxu0 %v2586
        %2992 = vmatpush.msra.mxu0 %v2579
        %2993 = vmatmul.f32.gmra.mxu0 %v2772
        %v2994 = vpop.f32.mrf.mxu0
        %v2995 = vadd.f32 0.0, %v2994
        %2996 = vdwg.mxu0
        %2997 = vmatpush.msra.mxu0 0.0
        %2998 = vmatpush.msra.mxu0 0.0
        %2999 = vmatpush.msra.mxu0 0.0
        %3000 = vmatpush.msra.mxu0 0.0
        %3001 = vmatpush.msra.mxu0 %v2768
        %3002 = vmatpush.msra.mxu0 %v2761
        %3003 = vmatpush.msra.mxu0 %v2754
        %3004 = vmatpush.msra.mxu0 %v2747
        %3005 = vmatpush.msra.mxu0 %v2740
        %3006 = vmatpush.msra.mxu0 %v2733
        %3007 = vmatpush.msra.mxu0 %v2726
        %3008 = vmatpush.msra.mxu0 %v2719
        %3009 = vmatpush.msra.mxu0 %v2712
        %3010 = vmatpush.msra.mxu0 %v2705
        %3011 = vmatpush.msra.mxu0 %v2698
        %3012 = vmatpush.msra.mxu0 %v2691
        %3013 = vmatmul.f32.gmra.mxu0 %v2775
        %v3014 = vpop.f32.mrf.mxu0
        %v3015 = vadd.f32 %v2995, %v3014
        %3016 = vdwg.mxu0
        %3017 = vmatpush.msra.mxu0 %v2685
        %3018 = vmatpush.msra.mxu0 %v2678
        %3019 = vmatpush.msra.mxu0 %v2671
        %3020 = vmatpush.msra.mxu0 %v2664
        %3021 = vmatpush.msra.mxu0 %v2657
        %3022 = vmatpush.msra.mxu0 %v2650
        %3023 = vmatpush.msra.mxu0 %v2643
        %3024 = vmatpush.msra.mxu0 %v2636
        %3025 = vmatpush.msra.mxu0 %v2629
        %3026 = vmatpush.msra.mxu0 %v2622
        %3027 = vmatpush.msra.mxu0 %v2615
        %3028 = vmatpush.msra.mxu0 %v2608
        %3029 = vmatpush.msra.mxu0 %v2601
        %3030 = vmatpush.msra.mxu0 %v2594
        %3031 = vmatpush.msra.mxu0 %v2587
        %3032 = vmatpush.msra.mxu0 %v2580
        %3033 = vmatmul.f32.gmra.mxu0 %v2772
        %v3034 = vpop.f32.mrf.mxu0
        %v3035 = vadd.f32 0.0, %v3034
        %3036 = vdwg.mxu0
        %3037 = vmatpush.msra.mxu0 0.0
        %3038 = vmatpush.msra.mxu0 0.0
        %3039 = vmatpush.msra.mxu0 0.0
        %3040 = vmatpush.msra.mxu0 0.0
        %3041 = vmatpush.msra.mxu0 %v2769
        %3042 = vmatpush.msra.mxu0 %v2762
        %3043 = vmatpush.msra.mxu0 %v2755
        %3044 = vmatpush.msra.mxu0 %v2748
        %3045 = vmatpush.msra.mxu0 %v2741
        %3046 = vmatpush.msra.mxu0 %v2734
        %3047 = vmatpush.msra.mxu0 %v2727
        %3048 = vmatpush.msra.mxu0 %v2720
        %3049 = vmatpush.msra.mxu0 %v2713
        %3050 = vmatpush.msra.mxu0 %v2706
        %3051 = vmatpush.msra.mxu0 %v2699
        %3052 = vmatpush.msra.mxu0 %v2692
        %3053 = vmatmul.f32.gmra.mxu0 %v2775
        %v3054 = vpop.f32.mrf.mxu0
        %v3055 = vadd.f32 %v3035, %v3054
        %3056 = vdwg.mxu0
        %v3057 = vsel %vm1967, %v2150, 0
        %3059 = vmatpush.msra.mxu0 %v2370
        %3060 = vmatpush.msra.mxu0 %v2363
        %3061 = vmatpush.msra.mxu0 %v2356
        %3062 = vmatpush.msra.mxu0 %v2349
        %3063 = vmatpush.msra.mxu0 %v2342
        %3064 = vmatpush.msra.mxu0 %v2335
        %3065 = vmatpush.msra.mxu0 %v2328
        %3066 = vmatpush.msra.mxu0 %v2321
        %3067 = vmatpush.msra.mxu0 %v2314
        %3068 = vmatpush.msra.mxu0 %v2307
        %3069 = vmatpush.msra.mxu0 %v2300
        %3070 = vmatpush.msra.mxu0 %v2293
        %3071 = vmatpush.msra.mxu0 %v2286
        %3072 = vmatpush.msra.mxu0 %v2279
        %3073 = vmatpush.msra.mxu0 %v2272
        %3074 = vmatpush.msra.mxu0 %v2265
        %3075 = vmatmul.f32.gmra.mxu0 %v2149
        %v3076 = vpop.f32.mrf.mxu0
        %v3077 = vadd.f32 %v2815, %v3076
        %3078 = vdwg.mxu0
        %3079 = vmatpush.msra.mxu0 0.0
        %3080 = vmatpush.msra.mxu0 0.0
        %3081 = vmatpush.msra.mxu0 0.0
        %3082 = vmatpush.msra.mxu0 0.0
        %3083 = vmatpush.msra.mxu0 %v2454
        %3084 = vmatpush.msra.mxu0 %v2447
        %3085 = vmatpush.msra.mxu0 %v2440
        %3086 = vmatpush.msra.mxu0 %v2433
        %3087 = vmatpush.msra.mxu0 %v2426
        %3088 = vmatpush.msra.mxu0 %v2419
        %3089 = vmatpush.msra.mxu0 %v2412
        %3090 = vmatpush.msra.mxu0 %v2405
        %3091 = vmatpush.msra.mxu0 %v2398
        %3092 = vmatpush.msra.mxu0 %v2391
        %3093 = vmatpush.msra.mxu0 %v2384
        %3094 = vmatpush.msra.mxu0 %v2377
        %3095 = vmatmul.f32.gmra.mxu0 %v3057
        %v3096 = vpop.f32.mrf.mxu0
        %v3097 = vadd.f32 %v3077, %v3096
        %3098 = vdwg.mxu0
        %3099 = vmatpush.msra.mxu0 %v2371
        %3100 = vmatpush.msra.mxu0 %v2364
        %3101 = vmatpush.msra.mxu0 %v2357
        %3102 = vmatpush.msra.mxu0 %v2350
        %3103 = vmatpush.msra.mxu0 %v2343
        %3104 = vmatpush.msra.mxu0 %v2336
        %3105 = vmatpush.msra.mxu0 %v2329
        %3106 = vmatpush.msra.mxu0 %v2322
        %3107 = vmatpush.msra.mxu0 %v2315
        %3108 = vmatpush.msra.mxu0 %v2308
        %3109 = vmatpush.msra.mxu0 %v2301
        %3110 = vmatpush.msra.mxu0 %v2294
        %3111 = vmatpush.msra.mxu0 %v2287
        %3112 = vmatpush.msra.mxu0 %v2280
        %3113 = vmatpush.msra.mxu0 %v2273
        %3114 = vmatpush.msra.mxu0 %v2266
        %3115 = vmatmul.f32.gmra.mxu0 %v2149
        %v3116 = vpop.f32.mrf.mxu0
        %v3117 = vadd.f32 %v2855, %v3116
        %3118 = vdwg.mxu0
        %3119 = vmatpush.msra.mxu0 0.0
        %3120 = vmatpush.msra.mxu0 0.0
        %3121 = vmatpush.msra.mxu0 0.0
        %3122 = vmatpush.msra.mxu0 0.0
        %3123 = vmatpush.msra.mxu0 %v2455
        %3124 = vmatpush.msra.mxu0 %v2448
        %3125 = vmatpush.msra.mxu0 %v2441
        %3126 = vmatpush.msra.mxu0 %v2434
        %3127 = vmatpush.msra.mxu0 %v2427
        %3128 = vmatpush.msra.mxu0 %v2420
        %3129 = vmatpush.msra.mxu0 %v2413
        %3130 = vmatpush.msra.mxu0 %v2406
        %3131 = vmatpush.msra.mxu0 %v2399
        %3132 = vmatpush.msra.mxu0 %v2392
        %3133 = vmatpush.msra.mxu0 %v2385
        %3134 = vmatpush.msra.mxu0 %v2378
        %3135 = vmatmul.f32.gmra.mxu0 %v3057
        %v3136 = vpop.f32.mrf.mxu0
        %v3137 = vadd.f32 %v3117, %v3136
        %3138 = vdwg.mxu0
        %3139 = vmatpush.msra.mxu0 %v2372
        %3140 = vmatpush.msra.mxu0 %v2365
        %3141 = vmatpush.msra.mxu0 %v2358
        %3142 = vmatpush.msra.mxu0 %v2351
        %3143 = vmatpush.msra.mxu0 %v2344
        %3144 = vmatpush.msra.mxu0 %v2337
        %3145 = vmatpush.msra.mxu0 %v2330
        %3146 = vmatpush.msra.mxu0 %v2323
        %3147 = vmatpush.msra.mxu0 %v2316
        %3148 = vmatpush.msra.mxu0 %v2309
        %3149 = vmatpush.msra.mxu0 %v2302
        %3150 = vmatpush.msra.mxu0 %v2295
        %3151 = vmatpush.msra.mxu0 %v2288
        %3152 = vmatpush.msra.mxu0 %v2281
        %3153 = vmatpush.msra.mxu0 %v2274
        %3154 = vmatpush.msra.mxu0 %v2267
        %3155 = vmatmul.f32.gmra.mxu0 %v2149
        %v3156 = vpop.f32.mrf.mxu0
        %v3157 = vadd.f32 %v2895, %v3156
        %3158 = vdwg.mxu0
        %3159 = vmatpush.msra.mxu0 0.0
        %3160 = vmatpush.msra.mxu0 0.0
        %3161 = vmatpush.msra.mxu0 0.0
        %3162 = vmatpush.msra.mxu0 0.0
        %3163 = vmatpush.msra.mxu0 %v2456
        %3164 = vmatpush.msra.mxu0 %v2449
        %3165 = vmatpush.msra.mxu0 %v2442
        %3166 = vmatpush.msra.mxu0 %v2435
        %3167 = vmatpush.msra.mxu0 %v2428
        %3168 = vmatpush.msra.mxu0 %v2421
        %3169 = vmatpush.msra.mxu0 %v2414
        %3170 = vmatpush.msra.mxu0 %v2407
        %3171 = vmatpush.msra.mxu0 %v2400
        %3172 = vmatpush.msra.mxu0 %v2393
        %3173 = vmatpush.msra.mxu0 %v2386
        %3174 = vmatpush.msra.mxu0 %v2379
        %3175 = vmatmul.f32.gmra.mxu0 %v3057
        %v3176 = vpop.f32.mrf.mxu0
        %v3177 = vadd.f32 %v3157, %v3176
        %3178 = vdwg.mxu0
        %3179 = vmatpush.msra.mxu0 %v2373
        %3180 = vmatpush.msra.mxu0 %v2366
        %3181 = vmatpush.msra.mxu0 %v2359
        %3182 = vmatpush.msra.mxu0 %v2352
        %3183 = vmatpush.msra.mxu0 %v2345
        %3184 = vmatpush.msra.mxu0 %v2338
        %3185 = vmatpush.msra.mxu0 %v2331
        %3186 = vmatpush.msra.mxu0 %v2324
        %3187 = vmatpush.msra.mxu0 %v2317
        %3188 = vmatpush.msra.mxu0 %v2310
        %3189 = vmatpush.msra.mxu0 %v2303
        %3190 = vmatpush.msra.mxu0 %v2296
        %3191 = vmatpush.msra.mxu0 %v2289
        %3192 = vmatpush.msra.mxu0 %v2282
        %3193 = vmatpush.msra.mxu0 %v2275
        %3194 = vmatpush.msra.mxu0 %v2268
        %3195 = vmatmul.f32.gmra.mxu0 %v2149
        %v3196 = vpop.f32.mrf.mxu0
        %v3197 = vadd.f32 %v2935, %v3196
        %3198 = vdwg.mxu0
        %3199 = vmatpush.msra.mxu0 0.0
        %3200 = vmatpush.msra.mxu0 0.0
        %3201 = vmatpush.msra.mxu0 0.0
        %3202 = vmatpush.msra.mxu0 0.0
        %3203 = vmatpush.msra.mxu0 %v2457
        %3204 = vmatpush.msra.mxu0 %v2450
        %3205 = vmatpush.msra.mxu0 %v2443
        %3206 = vmatpush.msra.mxu0 %v2436
        %3207 = vmatpush.msra.mxu0 %v2429
        %3208 = vmatpush.msra.mxu0 %v2422
        %3209 = vmatpush.msra.mxu0 %v2415
        %3210 = vmatpush.msra.mxu0 %v2408
        %3211 = vmatpush.msra.mxu0 %v2401
        %3212 = vmatpush.msra.mxu0 %v2394
        %3213 = vmatpush.msra.mxu0 %v2387
        %3214 = vmatpush.msra.mxu0 %v2380
        %3215 = vmatmul.f32.gmra.mxu0 %v3057
        %v3216 = vpop.f32.mrf.mxu0
        %v3217 = vadd.f32 %v3197, %v3216
        %3218 = vdwg.mxu0
        %3219 = vmatpush.msra.mxu0 %v2374
        %3220 = vmatpush.msra.mxu0 %v2367
        %3221 = vmatpush.msra.mxu0 %v2360
        %3222 = vmatpush.msra.mxu0 %v2353
        %3223 = vmatpush.msra.mxu0 %v2346
        %3224 = vmatpush.msra.mxu0 %v2339
        %3225 = vmatpush.msra.mxu0 %v2332
        %3226 = vmatpush.msra.mxu0 %v2325
        %3227 = vmatpush.msra.mxu0 %v2318
        %3228 = vmatpush.msra.mxu0 %v2311
        %3229 = vmatpush.msra.mxu0 %v2304
        %3230 = vmatpush.msra.mxu0 %v2297
        %3231 = vmatpush.msra.mxu0 %v2290
        %3232 = vmatpush.msra.mxu0 %v2283
        %3233 = vmatpush.msra.mxu0 %v2276
        %3234 = vmatpush.msra.mxu0 %v2269
        %3235 = vmatmul.f32.gmra.mxu0 %v2149
        %v3236 = vpop.f32.mrf.mxu0
        %v3237 = vadd.f32 %v2975, %v3236
        %3238 = vdwg.mxu0
        %3239 = vmatpush.msra.mxu0 0.0
        %3240 = vmatpush.msra.mxu0 0.0
        %3241 = vmatpush.msra.mxu0 0.0
        %3242 = vmatpush.msra.mxu0 0.0
        %3243 = vmatpush.msra.mxu0 %v2458
        %3244 = vmatpush.msra.mxu0 %v2451
        %3245 = vmatpush.msra.mxu0 %v2444
        %3246 = vmatpush.msra.mxu0 %v2437
        %3247 = vmatpush.msra.mxu0 %v2430
        %3248 = vmatpush.msra.mxu0 %v2423
        %3249 = vmatpush.msra.mxu0 %v2416
        %3250 = vmatpush.msra.mxu0 %v2409
        %3251 = vmatpush.msra.mxu0 %v2402
        %3252 = vmatpush.msra.mxu0 %v2395
        %3253 = vmatpush.msra.mxu0 %v2388
        %3254 = vmatpush.msra.mxu0 %v2381
        %3255 = vmatmul.f32.gmra.mxu0 %v3057
        %v3256 = vpop.f32.mrf.mxu0
        %v3257 = vadd.f32 %v3237, %v3256
        %3258 = vdwg.mxu0
        %3259 = vmatpush.msra.mxu0 %v2375
        %3260 = vmatpush.msra.mxu0 %v2368
        %3261 = vmatpush.msra.mxu0 %v2361
        %3262 = vmatpush.msra.mxu0 %v2354
        %3263 = vmatpush.msra.mxu0 %v2347
        %3264 = vmatpush.msra.mxu0 %v2340
        %3265 = vmatpush.msra.mxu0 %v2333
        %3266 = vmatpush.msra.mxu0 %v2326
        %3267 = vmatpush.msra.mxu0 %v2319
        %3268 = vmatpush.msra.mxu0 %v2312
        %3269 = vmatpush.msra.mxu0 %v2305
        %3270 = vmatpush.msra.mxu0 %v2298
        %3271 = vmatpush.msra.mxu0 %v2291
        %3272 = vmatpush.msra.mxu0 %v2284
        %3273 = vmatpush.msra.mxu0 %v2277
        %3274 = vmatpush.msra.mxu0 %v2270
        %3275 = vmatmul.f32.gmra.mxu0 %v2149
        %v3276 = vpop.f32.mrf.mxu0
        %v3277 = vadd.f32 %v3015, %v3276
        %3278 = vdwg.mxu0
        %3279 = vmatpush.msra.mxu0 0.0
        %3280 = vmatpush.msra.mxu0 0.0
        %3281 = vmatpush.msra.mxu0 0.0
        %3282 = vmatpush.msra.mxu0 0.0
        %3283 = vmatpush.msra.mxu0 %v2459
        %3284 = vmatpush.msra.mxu0 %v2452
        %3285 = vmatpush.msra.mxu0 %v2445
        %3286 = vmatpush.msra.mxu0 %v2438
        %3287 = vmatpush.msra.mxu0 %v2431
        %3288 = vmatpush.msra.mxu0 %v2424
        %3289 = vmatpush.msra.mxu0 %v2417
        %3290 = vmatpush.msra.mxu0 %v2410
        %3291 = vmatpush.msra.mxu0 %v2403
        %3292 = vmatpush.msra.mxu0 %v2396
        %3293 = vmatpush.msra.mxu0 %v2389
        %3294 = vmatpush.msra.mxu0 %v2382
        %3295 = vmatmul.f32.gmra.mxu0 %v3057
        %v3296 = vpop.f32.mrf.mxu0
        %v3297 = vadd.f32 %v3277, %v3296
        %3298 = vdwg.mxu0
        %3299 = vmatpush.msra.mxu0 %v2376
        %3300 = vmatpush.msra.mxu0 %v2369
        %3301 = vmatpush.msra.mxu0 %v2362
        %3302 = vmatpush.msra.mxu0 %v2355
        %3303 = vmatpush.msra.mxu0 %v2348
        %3304 = vmatpush.msra.mxu0 %v2341
        %3305 = vmatpush.msra.mxu0 %v2334
        %3306 = vmatpush.msra.mxu0 %v2327
        %3307 = vmatpush.msra.mxu0 %v2320
        %3308 = vmatpush.msra.mxu0 %v2313
        %3309 = vmatpush.msra.mxu0 %v2306
        %3310 = vmatpush.msra.mxu0 %v2299
        %3311 = vmatpush.msra.mxu0 %v2292
        %3312 = vmatpush.msra.mxu0 %v2285
        %3313 = vmatpush.msra.mxu0 %v2278
        %3314 = vmatpush.msra.mxu0 %v2271
        %3315 = vmatmul.f32.gmra.mxu0 %v2149
        %v3316 = vpop.f32.mrf.mxu0
        %v3317 = vadd.f32 %v3055, %v3316
        %3318 = vdwg.mxu0
        %3319 = vmatpush.msra.mxu0 0.0
        %3320 = vmatpush.msra.mxu0 0.0
        %3321 = vmatpush.msra.mxu0 0.0
        %3322 = vmatpush.msra.mxu0 0.0
        %3323 = vmatpush.msra.mxu0 %v2460
        %3324 = vmatpush.msra.mxu0 %v2453
        %3325 = vmatpush.msra.mxu0 %v2446
        %3326 = vmatpush.msra.mxu0 %v2439
        %3327 = vmatpush.msra.mxu0 %v2432
        %3328 = vmatpush.msra.mxu0 %v2425
        %3329 = vmatpush.msra.mxu0 %v2418
        %3330 = vmatpush.msra.mxu0 %v2411
        %3331 = vmatpush.msra.mxu0 %v2404
        %3332 = vmatpush.msra.mxu0 %v2397
        %3333 = vmatpush.msra.mxu0 %v2390
        %3334 = vmatpush.msra.mxu0 %v2383
        %3335 = vmatmul.f32.gmra.mxu0 %v3057
        %v3336 = vpop.f32.mrf.mxu0
        %v3337 = vadd.f32 %v3317, %v3336
        %3338 = vdwg.mxu0
        %s3339 = scalar_lea.vmem [#allocation15], 1568
        %v3340 = vld [vmem:[%s3339] sm:$0xff]
        %v3341 = vld [vmem:[%s3339 + $0x8] sm:$0xff]
        %v3342 = vld [vmem:[%s3339 + $0x10] sm:$0xff]
        %v3343 = vld [vmem:[%s3339 + $0x18] sm:$0xf]
        %v3344 = vld [vmem:[%s3339 + $0x1c] sm:$0xff]
        %v3345 = vld [vmem:[%s3339 + $0x24] sm:$0xff]
        %v3346 = vld [vmem:[%s3339 + $0x2c] sm:$0xff]
        %v3347 = vld [vmem:[%s3339 + $0x34] sm:$0xf]
        %v3348 = vld [vmem:[%s3339 + $0x38] sm:$0xff]
        %v3349 = vld [vmem:[%s3339 + $0x40] sm:$0xff]
        %v3350 = vld [vmem:[%s3339 + $0x48] sm:$0xff]
        %v3351 = vld [vmem:[%s3339 + $0x50] sm:$0xf]
        %v3352 = vld [vmem:[%s3339 + $0x54] sm:$0xff]
        %v3353 = vld [vmem:[%s3339 + $0x5c] sm:$0xff]
        %v3354 = vld [vmem:[%s3339 + $0x64] sm:$0xff]
        %v3355 = vld [vmem:[%s3339 + $0x6c] sm:$0xf]
        %v3356 = vld [vmem:[%s3339 + $0x70] sm:$0xff]
        %v3357 = vld [vmem:[%s3339 + $0x78] sm:$0xff]
        %v3358 = vld [vmem:[%s3339 + $0x80] sm:$0xff]
        %v3359 = vld [vmem:[%s3339 + $0x88] sm:$0xf]
        %v3360 = vld [vmem:[%s3339 + $0x8c] sm:$0xff]
        %v3361 = vld [vmem:[%s3339 + $0x94] sm:$0xff]
        %v3362 = vld [vmem:[%s3339 + $0x9c] sm:$0xff]
        %v3363 = vld [vmem:[%s3339 + $0xa4] sm:$0xf]
        %v3364 = vld [vmem:[%s3339 + $0xa8] sm:$0xff]
        %v3365 = vld [vmem:[%s3339 + $0xb0] sm:$0xff]
        %v3366 = vld [vmem:[%s3339 + $0xb8] sm:$0xff]
        %v3367 = vld [vmem:[%s3339 + $0xc0] sm:$0xf]
        %v3368 = vld [vmem:[%s3339 + $0xc4] sm:$0xff]
        %v3369 = vld [vmem:[%s3339 + $0xcc] sm:$0xff]
        %v3370 = vld [vmem:[%s3339 + $0xd4] sm:$0xff]
        %v3371 = vld [vmem:[%s3339 + $0xdc] sm:$0xf]
        %v3372 = vld [vmem:[%s3339 + $0xe0] sm:$0xff]
        %v3373 = vld [vmem:[%s3339 + $0xe8] sm:$0xff]
        %v3374 = vld [vmem:[%s3339 + $0xf0] sm:$0xff]
        %v3375 = vld [vmem:[%s3339 + $0xf8] sm:$0xf]
        %v3376 = vld [vmem:[%s3339 + $0xfc] sm:$0xff]
        %v3377 = vld [vmem:[%s3339 + $0x104] sm:$0xff]
        %v3378 = vld [vmem:[%s3339 + $0x10c] sm:$0xff]
        %v3379 = vld [vmem:[%s3339 + $0x114] sm:$0xf]
        %v3380 = vld [vmem:[%s3339 + $0x118] sm:$0xff]
        %v3381 = vld [vmem:[%s3339 + $0x120] sm:$0xff]
        %v3382 = vld [vmem:[%s3339 + $0x128] sm:$0xff]
        %v3383 = vld [vmem:[%s3339 + $0x130] sm:$0xf]
        %v3384 = vld [vmem:[%s3339 + $0x134] sm:$0xff]
        %v3385 = vld [vmem:[%s3339 + $0x13c] sm:$0xff]
        %v3386 = vld [vmem:[%s3339 + $0x144] sm:$0xff]
        %v3387 = vld [vmem:[%s3339 + $0x14c] sm:$0xf]
        %v3388 = vld [vmem:[%s3339 + $0x150] sm:$0xff]
        %v3389 = vld [vmem:[%s3339 + $0x158] sm:$0xff]
        %v3390 = vld [vmem:[%s3339 + $0x160] sm:$0xff]
        %v3391 = vld [vmem:[%s3339 + $0x168] sm:$0xf]
        %v3392 = vld [vmem:[%s3339 + $0x16c] sm:$0xff]
        %v3393 = vld [vmem:[%s3339 + $0x174] sm:$0xff]
        %v3394 = vld [vmem:[%s3339 + $0x17c] sm:$0xff]
        %v3395 = vld [vmem:[%s3339 + $0x184] sm:$0xf]
        %v3396 = vld [vmem:[%s3339 + $0x188] sm:$0xff]
        %v3397 = vld [vmem:[%s3339 + $0x190] sm:$0xff]
        %v3398 = vld [vmem:[%s3339 + $0x198] sm:$0xff]
        %v3399 = vld [vmem:[%s3339 + $0x1a0] sm:$0xf]
        %v3400 = vld [vmem:[%s3339 + $0x1a4] sm:$0xff]
        %v3401 = vld [vmem:[%s3339 + $0x1ac] sm:$0xff]
        %v3402 = vld [vmem:[%s3339 + $0x1b4] sm:$0xff]
        %v3403 = vld [vmem:[%s3339 + $0x1bc] sm:$0xf]
        %v3404 = vld [vmem:[%s3339 + $0x1c0] sm:$0xff]
        %v3405 = vld [vmem:[%s3339 + $0x1c8] sm:$0xff]
        %v3406 = vld [vmem:[%s3339 + $0x1d0] sm:$0xff]
        %v3407 = vld [vmem:[%s3339 + $0x1d8] sm:$0xf]
        %v3408 = vld [vmem:[%s3339 + $0x1dc] sm:$0xff]
        %v3409 = vld [vmem:[%s3339 + $0x1e4] sm:$0xff]
        %v3410 = vld [vmem:[%s3339 + $0x1ec] sm:$0xff]
        %v3411 = vld [vmem:[%s3339 + $0x1f4] sm:$0xf]
        %v3412 = vld [vmem:[%s3339 + $0x1f8] sm:$0xff]
        %v3413 = vld [vmem:[%s3339 + $0x200] sm:$0xff]
        %v3414 = vld [vmem:[%s3339 + $0x208] sm:$0xff]
        %v3415 = vld [vmem:[%s3339 + $0x210] sm:$0xf]
        %v3416 = vld [vmem:[%s3339 + $0x214] sm:$0xff]
        %v3417 = vld [vmem:[%s3339 + $0x21c] sm:$0xff]
        %v3418 = vld [vmem:[%s3339 + $0x224] sm:$0xff]
        %v3419 = vld [vmem:[%s3339 + $0x22c] sm:$0xf]
        %v3420 = vld [vmem:[%s3339 + $0x230] sm:$0xff]
        %v3421 = vld [vmem:[%s3339 + $0x238] sm:$0xff]
        %v3422 = vld [vmem:[%s3339 + $0x240] sm:$0xff]
        %v3423 = vld [vmem:[%s3339 + $0x248] sm:$0xf]
        %v3424 = vld [vmem:[%s3339 + $0x24c] sm:$0xff]
        %v3425 = vld [vmem:[%s3339 + $0x254] sm:$0xff]
        %v3426 = vld [vmem:[%s3339 + $0x25c] sm:$0xff]
        %v3427 = vld [vmem:[%s3339 + $0x264] sm:$0xf]
        %v3428 = vld [vmem:[%s3339 + $0x268] sm:$0xff]
        %v3429 = vld [vmem:[%s3339 + $0x270] sm:$0xff]
        %v3430 = vld [vmem:[%s3339 + $0x278] sm:$0xff]
        %v3431 = vld [vmem:[%s3339 + $0x280] sm:$0xf]
        %v3432 = vld [vmem:[%s3339 + $0x284] sm:$0xff]
        %v3433 = vld [vmem:[%s3339 + $0x28c] sm:$0xff]
        %v3434 = vld [vmem:[%s3339 + $0x294] sm:$0xff]
        %v3435 = vld [vmem:[%s3339 + $0x29c] sm:$0xf]
        %v3436 = vld [vmem:[%s3339 + $0x2a0] sm:$0xff]
        %v3437 = vld [vmem:[%s3339 + $0x2a8] sm:$0xff]
        %v3438 = vld [vmem:[%s3339 + $0x2b0] sm:$0xff]
        %v3439 = vld [vmem:[%s3339 + $0x2b8] sm:$0xf]
        %v3440 = vld [vmem:[%s3339 + $0x2bc] sm:$0xff]
        %v3441 = vld [vmem:[%s3339 + $0x2c4] sm:$0xff]
        %v3442 = vld [vmem:[%s3339 + $0x2cc] sm:$0xff]
        %v3443 = vld [vmem:[%s3339 + $0x2d4] sm:$0xf]
        %v3444 = vld [vmem:[%s3339 + $0x2d8] sm:$0xff]
        %v3445 = vld [vmem:[%s3339 + $0x2e0] sm:$0xff]
        %v3446 = vld [vmem:[%s3339 + $0x2e8] sm:$0xff]
        %v3447 = vld [vmem:[%s3339 + $0x2f0] sm:$0xf]
        %v3448 = vld [vmem:[%s3339 + $0x2f4] sm:$0xff]
        %v3449 = vld [vmem:[%s3339 + $0x2fc] sm:$0xff]
        %v3450 = vld [vmem:[%s3339 + $0x304] sm:$0xff]
        %v3451 = vld [vmem:[%s3339 + $0x30c] sm:$0xf]
        %v3452 = vunpack.c.l.bf16 %v3340
        %v3453 = vunpack.c.h.bf16 %v3340
        %v3454 = vunpack.c.l.bf16 %v3341
        %v3455 = vunpack.c.h.bf16 %v3341
        %v3456 = vunpack.c.l.bf16 %v3342
        %v3457 = vunpack.c.h.bf16 %v3342
        %v3458 = vunpack.c.l.bf16 %v3343
        %v3459 = vunpack.c.l.bf16 %v3344
        %v3460 = vunpack.c.h.bf16 %v3344
        %v3461 = vunpack.c.l.bf16 %v3345
        %v3462 = vunpack.c.h.bf16 %v3345
        %v3463 = vunpack.c.l.bf16 %v3346
        %v3464 = vunpack.c.h.bf16 %v3346
        %v3465 = vunpack.c.l.bf16 %v3347
        %v3466 = vunpack.c.l.bf16 %v3348
        %v3467 = vunpack.c.h.bf16 %v3348
        %v3468 = vunpack.c.l.bf16 %v3349
        %v3469 = vunpack.c.h.bf16 %v3349
        %v3470 = vunpack.c.l.bf16 %v3350
        %v3471 = vunpack.c.h.bf16 %v3350
        %v3472 = vunpack.c.l.bf16 %v3351
        %v3473 = vunpack.c.l.bf16 %v3352
        %v3474 = vunpack.c.h.bf16 %v3352
        %v3475 = vunpack.c.l.bf16 %v3353
        %v3476 = vunpack.c.h.bf16 %v3353
        %v3477 = vunpack.c.l.bf16 %v3354
        %v3478 = vunpack.c.h.bf16 %v3354
        %v3479 = vunpack.c.l.bf16 %v3355
        %v3480 = vunpack.c.l.bf16 %v3356
        %v3481 = vunpack.c.h.bf16 %v3356
        %v3482 = vunpack.c.l.bf16 %v3357
        %v3483 = vunpack.c.h.bf16 %v3357
        %v3484 = vunpack.c.l.bf16 %v3358
        %v3485 = vunpack.c.h.bf16 %v3358
        %v3486 = vunpack.c.l.bf16 %v3359
        %v3487 = vunpack.c.l.bf16 %v3360
        %v3488 = vunpack.c.h.bf16 %v3360
        %v3489 = vunpack.c.l.bf16 %v3361
        %v3490 = vunpack.c.h.bf16 %v3361
        %v3491 = vunpack.c.l.bf16 %v3362
        %v3492 = vunpack.c.h.bf16 %v3362
        %v3493 = vunpack.c.l.bf16 %v3363
        %v3494 = vunpack.c.l.bf16 %v3364
        %v3495 = vunpack.c.h.bf16 %v3364
        %v3496 = vunpack.c.l.bf16 %v3365
        %v3497 = vunpack.c.h.bf16 %v3365
        %v3498 = vunpack.c.l.bf16 %v3366
        %v3499 = vunpack.c.h.bf16 %v3366
        %v3500 = vunpack.c.l.bf16 %v3367
        %v3501 = vunpack.c.l.bf16 %v3368
        %v3502 = vunpack.c.h.bf16 %v3368
        %v3503 = vunpack.c.l.bf16 %v3369
        %v3504 = vunpack.c.h.bf16 %v3369
        %v3505 = vunpack.c.l.bf16 %v3370
        %v3506 = vunpack.c.h.bf16 %v3370
        %v3507 = vunpack.c.l.bf16 %v3371
        %v3508 = vunpack.c.l.bf16 %v3372
        %v3509 = vunpack.c.h.bf16 %v3372
        %v3510 = vunpack.c.l.bf16 %v3373
        %v3511 = vunpack.c.h.bf16 %v3373
        %v3512 = vunpack.c.l.bf16 %v3374
        %v3513 = vunpack.c.h.bf16 %v3374
        %v3514 = vunpack.c.l.bf16 %v3375
        %v3515 = vunpack.c.l.bf16 %v3376
        %v3516 = vunpack.c.h.bf16 %v3376
        %v3517 = vunpack.c.l.bf16 %v3377
        %v3518 = vunpack.c.h.bf16 %v3377
        %v3519 = vunpack.c.l.bf16 %v3378
        %v3520 = vunpack.c.h.bf16 %v3378
        %v3521 = vunpack.c.l.bf16 %v3379
        %v3522 = vunpack.c.l.bf16 %v3380
        %v3523 = vunpack.c.h.bf16 %v3380
        %v3524 = vunpack.c.l.bf16 %v3381
        %v3525 = vunpack.c.h.bf16 %v3381
        %v3526 = vunpack.c.l.bf16 %v3382
        %v3527 = vunpack.c.h.bf16 %v3382
        %v3528 = vunpack.c.l.bf16 %v3383
        %v3529 = vunpack.c.l.bf16 %v3384
        %v3530 = vunpack.c.h.bf16 %v3384
        %v3531 = vunpack.c.l.bf16 %v3385
        %v3532 = vunpack.c.h.bf16 %v3385
        %v3533 = vunpack.c.l.bf16 %v3386
        %v3534 = vunpack.c.h.bf16 %v3386
        %v3535 = vunpack.c.l.bf16 %v3387
        %v3536 = vunpack.c.l.bf16 %v3388
        %v3537 = vunpack.c.h.bf16 %v3388
        %v3538 = vunpack.c.l.bf16 %v3389
        %v3539 = vunpack.c.h.bf16 %v3389
        %v3540 = vunpack.c.l.bf16 %v3390
        %v3541 = vunpack.c.h.bf16 %v3390
        %v3542 = vunpack.c.l.bf16 %v3391
        %v3543 = vunpack.c.l.bf16 %v3392
        %v3544 = vunpack.c.h.bf16 %v3392
        %v3545 = vunpack.c.l.bf16 %v3393
        %v3546 = vunpack.c.h.bf16 %v3393
        %v3547 = vunpack.c.l.bf16 %v3394
        %v3548 = vunpack.c.h.bf16 %v3394
        %v3549 = vunpack.c.l.bf16 %v3395
        %v3550 = vunpack.c.l.bf16 %v3396
        %v3551 = vunpack.c.h.bf16 %v3396
        %v3552 = vunpack.c.l.bf16 %v3397
        %v3553 = vunpack.c.h.bf16 %v3397
        %v3554 = vunpack.c.l.bf16 %v3398
        %v3555 = vunpack.c.h.bf16 %v3398
        %v3556 = vunpack.c.l.bf16 %v3399
        %v3557 = vunpack.c.l.bf16 %v3400
        %v3558 = vunpack.c.h.bf16 %v3400
        %v3559 = vunpack.c.l.bf16 %v3401
        %v3560 = vunpack.c.h.bf16 %v3401
        %v3561 = vunpack.c.l.bf16 %v3402
        %v3562 = vunpack.c.h.bf16 %v3402
        %v3563 = vunpack.c.l.bf16 %v3403
        %v3564 = vunpack.c.l.bf16 %v3404
        %v3565 = vunpack.c.h.bf16 %v3404
        %v3566 = vunpack.c.l.bf16 %v3405
        %v3567 = vunpack.c.h.bf16 %v3405
        %v3568 = vunpack.c.l.bf16 %v3406
        %v3569 = vunpack.c.h.bf16 %v3406
        %v3570 = vunpack.c.l.bf16 %v3407
        %v3571 = vunpack.c.l.bf16 %v3408
        %v3572 = vunpack.c.h.bf16 %v3408
        %v3573 = vunpack.c.l.bf16 %v3409
        %v3574 = vunpack.c.h.bf16 %v3409
        %v3575 = vunpack.c.l.bf16 %v3410
        %v3576 = vunpack.c.h.bf16 %v3410
        %v3577 = vunpack.c.l.bf16 %v3411
        %v3578 = vunpack.c.l.bf16 %v3412
        %v3579 = vunpack.c.h.bf16 %v3412
        %v3580 = vunpack.c.l.bf16 %v3413
        %v3581 = vunpack.c.h.bf16 %v3413
        %v3582 = vunpack.c.l.bf16 %v3414
        %v3583 = vunpack.c.h.bf16 %v3414
        %v3584 = vunpack.c.l.bf16 %v3415
        %v3585 = vunpack.c.l.bf16 %v3416
        %v3586 = vunpack.c.h.bf16 %v3416
        %v3587 = vunpack.c.l.bf16 %v3417
        %v3588 = vunpack.c.h.bf16 %v3417
        %v3589 = vunpack.c.l.bf16 %v3418
        %v3590 = vunpack.c.h.bf16 %v3418
        %v3591 = vunpack.c.l.bf16 %v3419
        %v3592 = vunpack.c.l.bf16 %v3420
        %v3593 = vunpack.c.h.bf16 %v3420
        %v3594 = vunpack.c.l.bf16 %v3421
        %v3595 = vunpack.c.h.bf16 %v3421
        %v3596 = vunpack.c.l.bf16 %v3422
        %v3597 = vunpack.c.h.bf16 %v3422
        %v3598 = vunpack.c.l.bf16 %v3423
        %v3599 = vunpack.c.l.bf16 %v3424
        %v3600 = vunpack.c.h.bf16 %v3424
        %v3601 = vunpack.c.l.bf16 %v3425
        %v3602 = vunpack.c.h.bf16 %v3425
        %v3603 = vunpack.c.l.bf16 %v3426
        %v3604 = vunpack.c.h.bf16 %v3426
        %v3605 = vunpack.c.l.bf16 %v3427
        %v3606 = vunpack.c.l.bf16 %v3428
        %v3607 = vunpack.c.h.bf16 %v3428
        %v3608 = vunpack.c.l.bf16 %v3429
        %v3609 = vunpack.c.h.bf16 %v3429
        %v3610 = vunpack.c.l.bf16 %v3430
        %v3611 = vunpack.c.h.bf16 %v3430
        %v3612 = vunpack.c.l.bf16 %v3431
        %v3613 = vunpack.c.l.bf16 %v3432
        %v3614 = vunpack.c.h.bf16 %v3432
        %v3615 = vunpack.c.l.bf16 %v3433
        %v3616 = vunpack.c.h.bf16 %v3433
        %v3617 = vunpack.c.l.bf16 %v3434
        %v3618 = vunpack.c.h.bf16 %v3434
        %v3619 = vunpack.c.l.bf16 %v3435
        %v3620 = vunpack.c.l.bf16 %v3436
        %v3621 = vunpack.c.h.bf16 %v3436
        %v3622 = vunpack.c.l.bf16 %v3437
        %v3623 = vunpack.c.h.bf16 %v3437
        %v3624 = vunpack.c.l.bf16 %v3438
        %v3625 = vunpack.c.h.bf16 %v3438
        %v3626 = vunpack.c.l.bf16 %v3439
        %v3627 = vunpack.c.l.bf16 %v3440
        %v3628 = vunpack.c.h.bf16 %v3440
        %v3629 = vunpack.c.l.bf16 %v3441
        %v3630 = vunpack.c.h.bf16 %v3441
        %v3631 = vunpack.c.l.bf16 %v3442
        %v3632 = vunpack.c.h.bf16 %v3442
        %v3633 = vunpack.c.l.bf16 %v3443
        %v3634 = vunpack.c.l.bf16 %v3444
        %v3635 = vunpack.c.h.bf16 %v3444
        %v3636 = vunpack.c.l.bf16 %v3445
        %v3637 = vunpack.c.h.bf16 %v3445
        %v3638 = vunpack.c.l.bf16 %v3446
        %v3639 = vunpack.c.h.bf16 %v3446
        %v3640 = vunpack.c.l.bf16 %v3447
        %v3641 = vunpack.c.l.bf16 %v3448
        %v3642 = vunpack.c.h.bf16 %v3448
        %v3643 = vunpack.c.l.bf16 %v3449
        %v3644 = vunpack.c.h.bf16 %v3449
        %v3645 = vunpack.c.l.bf16 %v3450
        %v3646 = vunpack.c.h.bf16 %v3450
        %v3647 = vunpack.c.l.bf16 %v3451
        %v3649 = vsel %vm1967, %v2152, 0
        %3651 = vmatpush.msra.mxu0 %v3557
        %3652 = vmatpush.msra.mxu0 %v3550
        %3653 = vmatpush.msra.mxu0 %v3543
        %3654 = vmatpush.msra.mxu0 %v3536
        %3655 = vmatpush.msra.mxu0 %v3529
        %3656 = vmatpush.msra.mxu0 %v3522
        %3657 = vmatpush.msra.mxu0 %v3515
        %3658 = vmatpush.msra.mxu0 %v3508
        %3659 = vmatpush.msra.mxu0 %v3501
        %3660 = vmatpush.msra.mxu0 %v3494
        %3661 = vmatpush.msra.mxu0 %v3487
        %3662 = vmatpush.msra.mxu0 %v3480
        %3663 = vmatpush.msra.mxu0 %v3473
        %3664 = vmatpush.msra.mxu0 %v3466
        %3665 = vmatpush.msra.mxu0 %v3459
        %3666 = vmatpush.msra.mxu0 %v3452
        %3667 = vmatmul.f32.gmra.mxu0 %v2151
        %v3668 = vpop.f32.mrf.mxu0
        %v3669 = vadd.f32 0.0, %v3668
        %3670 = vdwg.mxu0
        %3671 = vmatpush.msra.mxu0 0.0
        %3672 = vmatpush.msra.mxu0 0.0
        %3673 = vmatpush.msra.mxu0 0.0
        %3674 = vmatpush.msra.mxu0 0.0
        %3675 = vmatpush.msra.mxu0 %v3641
        %3676 = vmatpush.msra.mxu0 %v3634
        %3677 = vmatpush.msra.mxu0 %v3627
        %3678 = vmatpush.msra.mxu0 %v3620
        %3679 = vmatpush.msra.mxu0 %v3613
        %3680 = vmatpush.msra.mxu0 %v3606
        %3681 = vmatpush.msra.mxu0 %v3599
        %3682 = vmatpush.msra.mxu0 %v3592
        %3683 = vmatpush.msra.mxu0 %v3585
        %3684 = vmatpush.msra.mxu0 %v3578
        %3685 = vmatpush.msra.mxu0 %v3571
        %3686 = vmatpush.msra.mxu0 %v3564
        %3687 = vmatmul.f32.gmra.mxu0 %v3649
        %v3688 = vpop.f32.mrf.mxu0
        %v3689 = vadd.f32 %v3669, %v3688
        %3690 = vdwg.mxu0
        %3691 = vmatpush.msra.mxu0 %v3558
        %3692 = vmatpush.msra.mxu0 %v3551
        %3693 = vmatpush.msra.mxu0 %v3544
        %3694 = vmatpush.msra.mxu0 %v3537
        %3695 = vmatpush.msra.mxu0 %v3530
        %3696 = vmatpush.msra.mxu0 %v3523
        %3697 = vmatpush.msra.mxu0 %v3516
        %3698 = vmatpush.msra.mxu0 %v3509
        %3699 = vmatpush.msra.mxu0 %v3502
        %3700 = vmatpush.msra.mxu0 %v3495
        %3701 = vmatpush.msra.mxu0 %v3488
        %3702 = vmatpush.msra.mxu0 %v3481
        %3703 = vmatpush.msra.mxu0 %v3474
        %3704 = vmatpush.msra.mxu0 %v3467
        %3705 = vmatpush.msra.mxu0 %v3460
        %3706 = vmatpush.msra.mxu0 %v3453
        %3707 = vmatmul.f32.gmra.mxu0 %v2151
        %v3708 = vpop.f32.mrf.mxu0
        %v3709 = vadd.f32 0.0, %v3708
        %3710 = vdwg.mxu0
        %3711 = vmatpush.msra.mxu0 0.0
        %3712 = vmatpush.msra.mxu0 0.0
        %3713 = vmatpush.msra.mxu0 0.0
        %3714 = vmatpush.msra.mxu0 0.0
        %3715 = vmatpush.msra.mxu0 %v3642
        %3716 = vmatpush.msra.mxu0 %v3635
        %3717 = vmatpush.msra.mxu0 %v3628
        %3718 = vmatpush.msra.mxu0 %v3621
        %3719 = vmatpush.msra.mxu0 %v3614
        %3720 = vmatpush.msra.mxu0 %v3607
        %3721 = vmatpush.msra.mxu0 %v3600
        %3722 = vmatpush.msra.mxu0 %v3593
        %3723 = vmatpush.msra.mxu0 %v3586
        %3724 = vmatpush.msra.mxu0 %v3579
        %3725 = vmatpush.msra.mxu0 %v3572
        %3726 = vmatpush.msra.mxu0 %v3565
        %3727 = vmatmul.f32.gmra.mxu0 %v3649
        %v3728 = vpop.f32.mrf.mxu0
        %v3729 = vadd.f32 %v3709, %v3728
        %3730 = vdwg.mxu0
        %3731 = vmatpush.msra.mxu0 %v3559
        %3732 = vmatpush.msra.mxu0 %v3552
        %3733 = vmatpush.msra.mxu0 %v3545
        %3734 = vmatpush.msra.mxu0 %v3538
        %3735 = vmatpush.msra.mxu0 %v3531
        %3736 = vmatpush.msra.mxu0 %v3524
        %3737 = vmatpush.msra.mxu0 %v3517
        %3738 = vmatpush.msra.mxu0 %v3510
        %3739 = vmatpush.msra.mxu0 %v3503
        %3740 = vmatpush.msra.mxu0 %v3496
        %3741 = vmatpush.msra.mxu0 %v3489
        %3742 = vmatpush.msra.mxu0 %v3482
        %3743 = vmatpush.msra.mxu0 %v3475
        %3744 = vmatpush.msra.mxu0 %v3468
        %3745 = vmatpush.msra.mxu0 %v3461
        %3746 = vmatpush.msra.mxu0 %v3454
        %3747 = vmatmul.f32.gmra.mxu0 %v2151
        %v3748 = vpop.f32.mrf.mxu0
        %v3749 = vadd.f32 0.0, %v3748
        %3750 = vdwg.mxu0
        %3751 = vmatpush.msra.mxu0 0.0
        %3752 = vmatpush.msra.mxu0 0.0
        %3753 = vmatpush.msra.mxu0 0.0
        %3754 = vmatpush.msra.mxu0 0.0
        %3755 = vmatpush.msra.mxu0 %v3643
        %3756 = vmatpush.msra.mxu0 %v3636
        %3757 = vmatpush.msra.mxu0 %v3629
        %3758 = vmatpush.msra.mxu0 %v3622
        %3759 = vmatpush.msra.mxu0 %v3615
        %3760 = vmatpush.msra.mxu0 %v3608
        %3761 = vmatpush.msra.mxu0 %v3601
        %3762 = vmatpush.msra.mxu0 %v3594
        %3763 = vmatpush.msra.mxu0 %v3587
        %3764 = vmatpush.msra.mxu0 %v3580
        %3765 = vmatpush.msra.mxu0 %v3573
        %3766 = vmatpush.msra.mxu0 %v3566
        %3767 = vmatmul.f32.gmra.mxu0 %v3649
        %v3768 = vpop.f32.mrf.mxu0
        %v3769 = vadd.f32 %v3749, %v3768
        %3770 = vdwg.mxu0
        %3771 = vmatpush.msra.mxu0 %v3560
        %3772 = vmatpush.msra.mxu0 %v3553
        %3773 = vmatpush.msra.mxu0 %v3546
        %3774 = vmatpush.msra.mxu0 %v3539
        %3775 = vmatpush.msra.mxu0 %v3532
        %3776 = vmatpush.msra.mxu0 %v3525
        %3777 = vmatpush.msra.mxu0 %v3518
        %3778 = vmatpush.msra.mxu0 %v3511
        %3779 = vmatpush.msra.mxu0 %v3504
        %3780 = vmatpush.msra.mxu0 %v3497
        %3781 = vmatpush.msra.mxu0 %v3490
        %3782 = vmatpush.msra.mxu0 %v3483
        %3783 = vmatpush.msra.mxu0 %v3476
        %3784 = vmatpush.msra.mxu0 %v3469
        %3785 = vmatpush.msra.mxu0 %v3462
        %3786 = vmatpush.msra.mxu0 %v3455
        %3787 = vmatmul.f32.gmra.mxu0 %v2151
        %v3788 = vpop.f32.mrf.mxu0
        %v3789 = vadd.f32 0.0, %v3788
        %3790 = vdwg.mxu0
        %3791 = vmatpush.msra.mxu0 0.0
        %3792 = vmatpush.msra.mxu0 0.0
        %3793 = vmatpush.msra.mxu0 0.0
        %3794 = vmatpush.msra.mxu0 0.0
        %3795 = vmatpush.msra.mxu0 %v3644
        %3796 = vmatpush.msra.mxu0 %v3637
        %3797 = vmatpush.msra.mxu0 %v3630
        %3798 = vmatpush.msra.mxu0 %v3623
        %3799 = vmatpush.msra.mxu0 %v3616
        %3800 = vmatpush.msra.mxu0 %v3609
        %3801 = vmatpush.msra.mxu0 %v3602
        %3802 = vmatpush.msra.mxu0 %v3595
        %3803 = vmatpush.msra.mxu0 %v3588
        %3804 = vmatpush.msra.mxu0 %v3581
        %3805 = vmatpush.msra.mxu0 %v3574
        %3806 = vmatpush.msra.mxu0 %v3567
        %3807 = vmatmul.f32.gmra.mxu0 %v3649
        %v3808 = vpop.f32.mrf.mxu0
        %v3809 = vadd.f32 %v3789, %v3808
        %3810 = vdwg.mxu0
        %3811 = vmatpush.msra.mxu0 %v3561
        %3812 = vmatpush.msra.mxu0 %v3554
        %3813 = vmatpush.msra.mxu0 %v3547
        %3814 = vmatpush.msra.mxu0 %v3540
        %3815 = vmatpush.msra.mxu0 %v3533
        %3816 = vmatpush.msra.mxu0 %v3526
        %3817 = vmatpush.msra.mxu0 %v3519
        %3818 = vmatpush.msra.mxu0 %v3512
        %3819 = vmatpush.msra.mxu0 %v3505
        %3820 = vmatpush.msra.mxu0 %v3498
        %3821 = vmatpush.msra.mxu0 %v3491
        %3822 = vmatpush.msra.mxu0 %v3484
        %3823 = vmatpush.msra.mxu0 %v3477
        %3824 = vmatpush.msra.mxu0 %v3470
        %3825 = vmatpush.msra.mxu0 %v3463
        %3826 = vmatpush.msra.mxu0 %v3456
        %3827 = vmatmul.f32.gmra.mxu0 %v2151
        %v3828 = vpop.f32.mrf.mxu0
        %v3829 = vadd.f32 0.0, %v3828
        %3830 = vdwg.mxu0
        %3831 = vmatpush.msra.mxu0 0.0
        %3832 = vmatpush.msra.mxu0 0.0
        %3833 = vmatpush.msra.mxu0 0.0
        %3834 = vmatpush.msra.mxu0 0.0
        %3835 = vmatpush.msra.mxu0 %v3645
        %3836 = vmatpush.msra.mxu0 %v3638
        %3837 = vmatpush.msra.mxu0 %v3631
        %3838 = vmatpush.msra.mxu0 %v3624
        %3839 = vmatpush.msra.mxu0 %v3617
        %3840 = vmatpush.msra.mxu0 %v3610
        %3841 = vmatpush.msra.mxu0 %v3603
        %3842 = vmatpush.msra.mxu0 %v3596
        %3843 = vmatpush.msra.mxu0 %v3589
        %3844 = vmatpush.msra.mxu0 %v3582
        %3845 = vmatpush.msra.mxu0 %v3575
        %3846 = vmatpush.msra.mxu0 %v3568
        %3847 = vmatmul.f32.gmra.mxu0 %v3649
        %v3848 = vpop.f32.mrf.mxu0
        %v3849 = vadd.f32 %v3829, %v3848
        %3850 = vdwg.mxu0
        %3851 = vmatpush.msra.mxu0 %v3562
        %3852 = vmatpush.msra.mxu0 %v3555
        %3853 = vmatpush.msra.mxu0 %v3548
        %3854 = vmatpush.msra.mxu0 %v3541
        %3855 = vmatpush.msra.mxu0 %v3534
        %3856 = vmatpush.msra.mxu0 %v3527
        %3857 = vmatpush.msra.mxu0 %v3520
        %3858 = vmatpush.msra.mxu0 %v3513
        %3859 = vmatpush.msra.mxu0 %v3506
        %3860 = vmatpush.msra.mxu0 %v3499
        %3861 = vmatpush.msra.mxu0 %v3492
        %3862 = vmatpush.msra.mxu0 %v3485
        %3863 = vmatpush.msra.mxu0 %v3478
        %3864 = vmatpush.msra.mxu0 %v3471
        %3865 = vmatpush.msra.mxu0 %v3464
        %3866 = vmatpush.msra.mxu0 %v3457
        %3867 = vmatmul.f32.gmra.mxu0 %v2151
        %v3868 = vpop.f32.mrf.mxu0
        %v3869 = vadd.f32 0.0, %v3868
        %3870 = vdwg.mxu0
        %3871 = vmatpush.msra.mxu0 0.0
        %3872 = vmatpush.msra.mxu0 0.0
        %3873 = vmatpush.msra.mxu0 0.0
        %3874 = vmatpush.msra.mxu0 0.0
        %3875 = vmatpush.msra.mxu0 %v3646
        %3876 = vmatpush.msra.mxu0 %v3639
        %3877 = vmatpush.msra.mxu0 %v3632
        %3878 = vmatpush.msra.mxu0 %v3625
        %3879 = vmatpush.msra.mxu0 %v3618
        %3880 = vmatpush.msra.mxu0 %v3611
        %3881 = vmatpush.msra.mxu0 %v3604
        %3882 = vmatpush.msra.mxu0 %v3597
        %3883 = vmatpush.msra.mxu0 %v3590
        %3884 = vmatpush.msra.mxu0 %v3583
        %3885 = vmatpush.msra.mxu0 %v3576
        %3886 = vmatpush.msra.mxu0 %v3569
        %3887 = vmatmul.f32.gmra.mxu0 %v3649
        %v3888 = vpop.f32.mrf.mxu0
        %v3889 = vadd.f32 %v3869, %v3888
        %3890 = vdwg.mxu0
        %3891 = vmatpush.msra.mxu0 %v3563
        %3892 = vmatpush.msra.mxu0 %v3556
        %3893 = vmatpush.msra.mxu0 %v3549
        %3894 = vmatpush.msra.mxu0 %v3542
        %3895 = vmatpush.msra.mxu0 %v3535
        %3896 = vmatpush.msra.mxu0 %v3528
        %3897 = vmatpush.msra.mxu0 %v3521
        %3898 = vmatpush.msra.mxu0 %v3514
        %3899 = vmatpush.msra.mxu0 %v3507
        %3900 = vmatpush.msra.mxu0 %v3500
        %3901 = vmatpush.msra.mxu0 %v3493
        %3902 = vmatpush.msra.mxu0 %v3486
        %3903 = vmatpush.msra.mxu0 %v3479
        %3904 = vmatpush.msra.mxu0 %v3472
        %3905 = vmatpush.msra.mxu0 %v3465
        %3906 = vmatpush.msra.mxu0 %v3458
        %3907 = vmatmul.f32.gmra.mxu0 %v2151
        %v3908 = vpop.f32.mrf.mxu0
        %v3909 = vadd.f32 0.0, %v3908
        %3910 = vdwg.mxu0
        %3911 = vmatpush.msra.mxu0 0.0
        %3912 = vmatpush.msra.mxu0 0.0
        %3913 = vmatpush.msra.mxu0 0.0
        %3914 = vmatpush.msra.mxu0 0.0
        %3915 = vmatpush.msra.mxu0 %v3647
        %3916 = vmatpush.msra.mxu0 %v3640
        %3917 = vmatpush.msra.mxu0 %v3633
        %3918 = vmatpush.msra.mxu0 %v3626
        %3919 = vmatpush.msra.mxu0 %v3619
        %3920 = vmatpush.msra.mxu0 %v3612
        %3921 = vmatpush.msra.mxu0 %v3605
        %3922 = vmatpush.msra.mxu0 %v3598
        %3923 = vmatpush.msra.mxu0 %v3591
        %3924 = vmatpush.msra.mxu0 %v3584
        %3925 = vmatpush.msra.mxu0 %v3577
        %3926 = vmatpush.msra.mxu0 %v3570
        %3927 = vmatmul.f32.gmra.mxu0 %v3649
        %v3928 = vpop.f32.mrf.mxu0
        %v3929 = vadd.f32 %v3909, %v3928
        %3930 = vdwg.mxu0
        %v3931 = vadd.f32 %v3097, %v3689
        %v3932 = vadd.f32 %v3137, %v3729
        %v3933 = vadd.f32 %v3177, %v3769
        %v3934 = vadd.f32 %v3217, %v3809
        %v3935 = vadd.f32 %v3257, %v3849
        %v3936 = vadd.f32 %v3297, %v3889
        %v3937 = vadd.f32 %v3337, %v3929
        %s3938 = scalar_lea.vmem [#allocation15], 2352
        %v3939 = vld [vmem:[%s3938] sm:$0xff]
        %v3940 = vld [vmem:[%s3938 + $0x8] sm:$0xff]
        %v3941 = vld [vmem:[%s3938 + $0x10] sm:$0xff]
        %v3942 = vld [vmem:[%s3938 + $0x18] sm:$0xf]
        %v3943 = vld [vmem:[%s3938 + $0x1c] sm:$0xff]
        %v3944 = vld [vmem:[%s3938 + $0x24] sm:$0xff]
        %v3945 = vld [vmem:[%s3938 + $0x2c] sm:$0xff]
        %v3946 = vld [vmem:[%s3938 + $0x34] sm:$0xf]
        %v3947 = vld [vmem:[%s3938 + $0x38] sm:$0xff]
        %v3948 = vld [vmem:[%s3938 + $0x40] sm:$0xff]
        %v3949 = vld [vmem:[%s3938 + $0x48] sm:$0xff]
        %v3950 = vld [vmem:[%s3938 + $0x50] sm:$0xf]
        %v3951 = vld [vmem:[%s3938 + $0x54] sm:$0xff]
        %v3952 = vld [vmem:[%s3938 + $0x5c] sm:$0xff]
        %v3953 = vld [vmem:[%s3938 + $0x64] sm:$0xff]
        %v3954 = vld [vmem:[%s3938 + $0x6c] sm:$0xf]
        %v3955 = vld [vmem:[%s3938 + $0x70] sm:$0xff]
        %v3956 = vld [vmem:[%s3938 + $0x78] sm:$0xff]
        %v3957 = vld [vmem:[%s3938 + $0x80] sm:$0xff]
        %v3958 = vld [vmem:[%s3938 + $0x88] sm:$0xf]
        %v3959 = vld [vmem:[%s3938 + $0x8c] sm:$0xff]
        %v3960 = vld [vmem:[%s3938 + $0x94] sm:$0xff]
        %v3961 = vld [vmem:[%s3938 + $0x9c] sm:$0xff]
        %v3962 = vld [vmem:[%s3938 + $0xa4] sm:$0xf]
        %v3963 = vld [vmem:[%s3938 + $0xa8] sm:$0xff]
        %v3964 = vld [vmem:[%s3938 + $0xb0] sm:$0xff]
        %v3965 = vld [vmem:[%s3938 + $0xb8] sm:$0xff]
        %v3966 = vld [vmem:[%s3938 + $0xc0] sm:$0xf]
        %v3967 = vld [vmem:[%s3938 + $0xc4] sm:$0xff]
        %v3968 = vld [vmem:[%s3938 + $0xcc] sm:$0xff]
        %v3969 = vld [vmem:[%s3938 + $0xd4] sm:$0xff]
        %v3970 = vld [vmem:[%s3938 + $0xdc] sm:$0xf]
        %v3971 = vld [vmem:[%s3938 + $0xe0] sm:$0xff]
        %v3972 = vld [vmem:[%s3938 + $0xe8] sm:$0xff]
        %v3973 = vld [vmem:[%s3938 + $0xf0] sm:$0xff]
        %v3974 = vld [vmem:[%s3938 + $0xf8] sm:$0xf]
        %v3975 = vld [vmem:[%s3938 + $0xfc] sm:$0xff]
        %v3976 = vld [vmem:[%s3938 + $0x104] sm:$0xff]
        %v3977 = vld [vmem:[%s3938 + $0x10c] sm:$0xff]
        %v3978 = vld [vmem:[%s3938 + $0x114] sm:$0xf]
        %v3979 = vld [vmem:[%s3938 + $0x118] sm:$0xff]
        %v3980 = vld [vmem:[%s3938 + $0x120] sm:$0xff]
        %v3981 = vld [vmem:[%s3938 + $0x128] sm:$0xff]
        %v3982 = vld [vmem:[%s3938 + $0x130] sm:$0xf]
        %v3983 = vld [vmem:[%s3938 + $0x134] sm:$0xff]
        %v3984 = vld [vmem:[%s3938 + $0x13c] sm:$0xff]
        %v3985 = vld [vmem:[%s3938 + $0x144] sm:$0xff]
        %v3986 = vld [vmem:[%s3938 + $0x14c] sm:$0xf]
        %v3987 = vld [vmem:[%s3938 + $0x150] sm:$0xff]
        %v3988 = vld [vmem:[%s3938 + $0x158] sm:$0xff]
        %v3989 = vld [vmem:[%s3938 + $0x160] sm:$0xff]
        %v3990 = vld [vmem:[%s3938 + $0x168] sm:$0xf]
        %v3991 = vld [vmem:[%s3938 + $0x16c] sm:$0xff]
        %v3992 = vld [vmem:[%s3938 + $0x174] sm:$0xff]
        %v3993 = vld [vmem:[%s3938 + $0x17c] sm:$0xff]
        %v3994 = vld [vmem:[%s3938 + $0x184] sm:$0xf]
        %v3995 = vld [vmem:[%s3938 + $0x188] sm:$0xff]
        %v3996 = vld [vmem:[%s3938 + $0x190] sm:$0xff]
        %v3997 = vld [vmem:[%s3938 + $0x198] sm:$0xff]
        %v3998 = vld [vmem:[%s3938 + $0x1a0] sm:$0xf]
        %v3999 = vld [vmem:[%s3938 + $0x1a4] sm:$0xff]
        %v4000 = vld [vmem:[%s3938 + $0x1ac] sm:$0xff]
        %v4001 = vld [vmem:[%s3938 + $0x1b4] sm:$0xff]
        %v4002 = vld [vmem:[%s3938 + $0x1bc] sm:$0xf]
        %v4003 = vld [vmem:[%s3938 + $0x1c0] sm:$0xff]
        %v4004 = vld [vmem:[%s3938 + $0x1c8] sm:$0xff]
        %v4005 = vld [vmem:[%s3938 + $0x1d0] sm:$0xff]
        %v4006 = vld [vmem:[%s3938 + $0x1d8] sm:$0xf]
        %v4007 = vld [vmem:[%s3938 + $0x1dc] sm:$0xff]
        %v4008 = vld [vmem:[%s3938 + $0x1e4] sm:$0xff]
        %v4009 = vld [vmem:[%s3938 + $0x1ec] sm:$0xff]
        %v4010 = vld [vmem:[%s3938 + $0x1f4] sm:$0xf]
        %v4011 = vld [vmem:[%s3938 + $0x1f8] sm:$0xff]
        %v4012 = vld [vmem:[%s3938 + $0x200] sm:$0xff]
        %v4013 = vld [vmem:[%s3938 + $0x208] sm:$0xff]
        %v4014 = vld [vmem:[%s3938 + $0x210] sm:$0xf]
        %v4015 = vld [vmem:[%s3938 + $0x214] sm:$0xff]
        %v4016 = vld [vmem:[%s3938 + $0x21c] sm:$0xff]
        %v4017 = vld [vmem:[%s3938 + $0x224] sm:$0xff]
        %v4018 = vld [vmem:[%s3938 + $0x22c] sm:$0xf]
        %v4019 = vld [vmem:[%s3938 + $0x230] sm:$0xff]
        %v4020 = vld [vmem:[%s3938 + $0x238] sm:$0xff]
        %v4021 = vld [vmem:[%s3938 + $0x240] sm:$0xff]
        %v4022 = vld [vmem:[%s3938 + $0x248] sm:$0xf]
        %v4023 = vld [vmem:[%s3938 + $0x24c] sm:$0xff]
        %v4024 = vld [vmem:[%s3938 + $0x254] sm:$0xff]
        %v4025 = vld [vmem:[%s3938 + $0x25c] sm:$0xff]
        %v4026 = vld [vmem:[%s3938 + $0x264] sm:$0xf]
        %v4027 = vld [vmem:[%s3938 + $0x268] sm:$0xff]
        %v4028 = vld [vmem:[%s3938 + $0x270] sm:$0xff]
        %v4029 = vld [vmem:[%s3938 + $0x278] sm:$0xff]
        %v4030 = vld [vmem:[%s3938 + $0x280] sm:$0xf]
        %v4031 = vld [vmem:[%s3938 + $0x284] sm:$0xff]
        %v4032 = vld [vmem:[%s3938 + $0x28c] sm:$0xff]
        %v4033 = vld [vmem:[%s3938 + $0x294] sm:$0xff]
        %v4034 = vld [vmem:[%s3938 + $0x29c] sm:$0xf]
        %v4035 = vld [vmem:[%s3938 + $0x2a0] sm:$0xff]
        %v4036 = vld [vmem:[%s3938 + $0x2a8] sm:$0xff]
        %v4037 = vld [vmem:[%s3938 + $0x2b0] sm:$0xff]
        %v4038 = vld [vmem:[%s3938 + $0x2b8] sm:$0xf]
        %v4039 = vld [vmem:[%s3938 + $0x2bc] sm:$0xff]
        %v4040 = vld [vmem:[%s3938 + $0x2c4] sm:$0xff]
        %v4041 = vld [vmem:[%s3938 + $0x2cc] sm:$0xff]
        %v4042 = vld [vmem:[%s3938 + $0x2d4] sm:$0xf]
        %v4043 = vld [vmem:[%s3938 + $0x2d8] sm:$0xff]
        %v4044 = vld [vmem:[%s3938 + $0x2e0] sm:$0xff]
        %v4045 = vld [vmem:[%s3938 + $0x2e8] sm:$0xff]
        %v4046 = vld [vmem:[%s3938 + $0x2f0] sm:$0xf]
        %v4047 = vld [vmem:[%s3938 + $0x2f4] sm:$0xff]
        %v4048 = vld [vmem:[%s3938 + $0x2fc] sm:$0xff]
        %v4049 = vld [vmem:[%s3938 + $0x304] sm:$0xff]
        %v4050 = vld [vmem:[%s3938 + $0x30c] sm:$0xf]
        %v4051 = vunpack.c.l.bf16 %v3939
        %v4052 = vunpack.c.h.bf16 %v3939
        %v4053 = vunpack.c.l.bf16 %v3940
        %v4054 = vunpack.c.h.bf16 %v3940
        %v4055 = vunpack.c.l.bf16 %v3941
        %v4056 = vunpack.c.h.bf16 %v3941
        %v4057 = vunpack.c.l.bf16 %v3942
        %v4058 = vunpack.c.l.bf16 %v3943
        %v4059 = vunpack.c.h.bf16 %v3943
        %v4060 = vunpack.c.l.bf16 %v3944
        %v4061 = vunpack.c.h.bf16 %v3944
        %v4062 = vunpack.c.l.bf16 %v3945
        %v4063 = vunpack.c.h.bf16 %v3945
        %v4064 = vunpack.c.l.bf16 %v3946
        %v4065 = vunpack.c.l.bf16 %v3947
        %v4066 = vunpack.c.h.bf16 %v3947
        %v4067 = vunpack.c.l.bf16 %v3948
        %v4068 = vunpack.c.h.bf16 %v3948
        %v4069 = vunpack.c.l.bf16 %v3949
        %v4070 = vunpack.c.h.bf16 %v3949
        %v4071 = vunpack.c.l.bf16 %v3950
        %v4072 = vunpack.c.l.bf16 %v3951
        %v4073 = vunpack.c.h.bf16 %v3951
        %v4074 = vunpack.c.l.bf16 %v3952
        %v4075 = vunpack.c.h.bf16 %v3952
        %v4076 = vunpack.c.l.bf16 %v3953
        %v4077 = vunpack.c.h.bf16 %v3953
        %v4078 = vunpack.c.l.bf16 %v3954
        %v4079 = vunpack.c.l.bf16 %v3955
        %v4080 = vunpack.c.h.bf16 %v3955
        %v4081 = vunpack.c.l.bf16 %v3956
        %v4082 = vunpack.c.h.bf16 %v3956
        %v4083 = vunpack.c.l.bf16 %v3957
        %v4084 = vunpack.c.h.bf16 %v3957
        %v4085 = vunpack.c.l.bf16 %v3958
        %v4086 = vunpack.c.l.bf16 %v3959
        %v4087 = vunpack.c.h.bf16 %v3959
        %v4088 = vunpack.c.l.bf16 %v3960
        %v4089 = vunpack.c.h.bf16 %v3960
        %v4090 = vunpack.c.l.bf16 %v3961
        %v4091 = vunpack.c.h.bf16 %v3961
        %v4092 = vunpack.c.l.bf16 %v3962
        %v4093 = vunpack.c.l.bf16 %v3963
        %v4094 = vunpack.c.h.bf16 %v3963
        %v4095 = vunpack.c.l.bf16 %v3964
        %v4096 = vunpack.c.h.bf16 %v3964
        %v4097 = vunpack.c.l.bf16 %v3965
        %v4098 = vunpack.c.h.bf16 %v3965
        %v4099 = vunpack.c.l.bf16 %v3966
        %v4100 = vunpack.c.l.bf16 %v3967
        %v4101 = vunpack.c.h.bf16 %v3967
        %v4102 = vunpack.c.l.bf16 %v3968
        %v4103 = vunpack.c.h.bf16 %v3968
        %v4104 = vunpack.c.l.bf16 %v3969
        %v4105 = vunpack.c.h.bf16 %v3969
        %v4106 = vunpack.c.l.bf16 %v3970
        %v4107 = vunpack.c.l.bf16 %v3971
        %v4108 = vunpack.c.h.bf16 %v3971
        %v4109 = vunpack.c.l.bf16 %v3972
        %v4110 = vunpack.c.h.bf16 %v3972
        %v4111 = vunpack.c.l.bf16 %v3973
        %v4112 = vunpack.c.h.bf16 %v3973
        %v4113 = vunpack.c.l.bf16 %v3974
        %v4114 = vunpack.c.l.bf16 %v3975
        %v4115 = vunpack.c.h.bf16 %v3975
        %v4116 = vunpack.c.l.bf16 %v3976
        %v4117 = vunpack.c.h.bf16 %v3976
        %v4118 = vunpack.c.l.bf16 %v3977
        %v4119 = vunpack.c.h.bf16 %v3977
        %v4120 = vunpack.c.l.bf16 %v3978
        %v4121 = vunpack.c.l.bf16 %v3979
        %v4122 = vunpack.c.h.bf16 %v3979
        %v4123 = vunpack.c.l.bf16 %v3980
        %v4124 = vunpack.c.h.bf16 %v3980
        %v4125 = vunpack.c.l.bf16 %v3981
        %v4126 = vunpack.c.h.bf16 %v3981
        %v4127 = vunpack.c.l.bf16 %v3982
        %v4128 = vunpack.c.l.bf16 %v3983
        %v4129 = vunpack.c.h.bf16 %v3983
        %v4130 = vunpack.c.l.bf16 %v3984
        %v4131 = vunpack.c.h.bf16 %v3984
        %v4132 = vunpack.c.l.bf16 %v3985
        %v4133 = vunpack.c.h.bf16 %v3985
        %v4134 = vunpack.c.l.bf16 %v3986
        %v4135 = vunpack.c.l.bf16 %v3987
        %v4136 = vunpack.c.h.bf16 %v3987
        %v4137 = vunpack.c.l.bf16 %v3988
        %v4138 = vunpack.c.h.bf16 %v3988
        %v4139 = vunpack.c.l.bf16 %v3989
        %v4140 = vunpack.c.h.bf16 %v3989
        %v4141 = vunpack.c.l.bf16 %v3990
        %v4142 = vunpack.c.l.bf16 %v3991
        %v4143 = vunpack.c.h.bf16 %v3991
        %v4144 = vunpack.c.l.bf16 %v3992
        %v4145 = vunpack.c.h.bf16 %v3992
        %v4146 = vunpack.c.l.bf16 %v3993
        %v4147 = vunpack.c.h.bf16 %v3993
        %v4148 = vunpack.c.l.bf16 %v3994
        %v4149 = vunpack.c.l.bf16 %v3995
        %v4150 = vunpack.c.h.bf16 %v3995
        %v4151 = vunpack.c.l.bf16 %v3996
        %v4152 = vunpack.c.h.bf16 %v3996
        %v4153 = vunpack.c.l.bf16 %v3997
        %v4154 = vunpack.c.h.bf16 %v3997
        %v4155 = vunpack.c.l.bf16 %v3998
        %v4156 = vunpack.c.l.bf16 %v3999
        %v4157 = vunpack.c.h.bf16 %v3999
        %v4158 = vunpack.c.l.bf16 %v4000
        %v4159 = vunpack.c.h.bf16 %v4000
        %v4160 = vunpack.c.l.bf16 %v4001
        %v4161 = vunpack.c.h.bf16 %v4001
        %v4162 = vunpack.c.l.bf16 %v4002
        %v4163 = vunpack.c.l.bf16 %v4003
        %v4164 = vunpack.c.h.bf16 %v4003
        %v4165 = vunpack.c.l.bf16 %v4004
        %v4166 = vunpack.c.h.bf16 %v4004
        %v4167 = vunpack.c.l.bf16 %v4005
        %v4168 = vunpack.c.h.bf16 %v4005
        %v4169 = vunpack.c.l.bf16 %v4006
        %v4170 = vunpack.c.l.bf16 %v4007
        %v4171 = vunpack.c.h.bf16 %v4007
        %v4172 = vunpack.c.l.bf16 %v4008
        %v4173 = vunpack.c.h.bf16 %v4008
        %v4174 = vunpack.c.l.bf16 %v4009
        %v4175 = vunpack.c.h.bf16 %v4009
        %v4176 = vunpack.c.l.bf16 %v4010
        %v4177 = vunpack.c.l.bf16 %v4011
        %v4178 = vunpack.c.h.bf16 %v4011
        %v4179 = vunpack.c.l.bf16 %v4012
        %v4180 = vunpack.c.h.bf16 %v4012
        %v4181 = vunpack.c.l.bf16 %v4013
        %v4182 = vunpack.c.h.bf16 %v4013
        %v4183 = vunpack.c.l.bf16 %v4014
        %v4184 = vunpack.c.l.bf16 %v4015
        %v4185 = vunpack.c.h.bf16 %v4015
        %v4186 = vunpack.c.l.bf16 %v4016
        %v4187 = vunpack.c.h.bf16 %v4016
        %v4188 = vunpack.c.l.bf16 %v4017
        %v4189 = vunpack.c.h.bf16 %v4017
        %v4190 = vunpack.c.l.bf16 %v4018
        %v4191 = vunpack.c.l.bf16 %v4019
        %v4192 = vunpack.c.h.bf16 %v4019
        %v4193 = vunpack.c.l.bf16 %v4020
        %v4194 = vunpack.c.h.bf16 %v4020
        %v4195 = vunpack.c.l.bf16 %v4021
        %v4196 = vunpack.c.h.bf16 %v4021
        %v4197 = vunpack.c.l.bf16 %v4022
        %v4198 = vunpack.c.l.bf16 %v4023
        %v4199 = vunpack.c.h.bf16 %v4023
        %v4200 = vunpack.c.l.bf16 %v4024
        %v4201 = vunpack.c.h.bf16 %v4024
        %v4202 = vunpack.c.l.bf16 %v4025
        %v4203 = vunpack.c.h.bf16 %v4025
        %v4204 = vunpack.c.l.bf16 %v4026
        %v4205 = vunpack.c.l.bf16 %v4027
        %v4206 = vunpack.c.h.bf16 %v4027
        %v4207 = vunpack.c.l.bf16 %v4028
        %v4208 = vunpack.c.h.bf16 %v4028
        %v4209 = vunpack.c.l.bf16 %v4029
        %v4210 = vunpack.c.h.bf16 %v4029
        %v4211 = vunpack.c.l.bf16 %v4030
        %v4212 = vunpack.c.l.bf16 %v4031
        %v4213 = vunpack.c.h.bf16 %v4031
        %v4214 = vunpack.c.l.bf16 %v4032
        %v4215 = vunpack.c.h.bf16 %v4032
        %v4216 = vunpack.c.l.bf16 %v4033
        %v4217 = vunpack.c.h.bf16 %v4033
        %v4218 = vunpack.c.l.bf16 %v4034
        %v4219 = vunpack.c.l.bf16 %v4035
        %v4220 = vunpack.c.h.bf16 %v4035
        %v4221 = vunpack.c.l.bf16 %v4036
        %v4222 = vunpack.c.h.bf16 %v4036
        %v4223 = vunpack.c.l.bf16 %v4037
        %v4224 = vunpack.c.h.bf16 %v4037
        %v4225 = vunpack.c.l.bf16 %v4038
        %v4226 = vunpack.c.l.bf16 %v4039
        %v4227 = vunpack.c.h.bf16 %v4039
        %v4228 = vunpack.c.l.bf16 %v4040
        %v4229 = vunpack.c.h.bf16 %v4040
        %v4230 = vunpack.c.l.bf16 %v4041
        %v4231 = vunpack.c.h.bf16 %v4041
        %v4232 = vunpack.c.l.bf16 %v4042
        %v4233 = vunpack.c.l.bf16 %v4043
        %v4234 = vunpack.c.h.bf16 %v4043
        %v4235 = vunpack.c.l.bf16 %v4044
        %v4236 = vunpack.c.h.bf16 %v4044
        %v4237 = vunpack.c.l.bf16 %v4045
        %v4238 = vunpack.c.h.bf16 %v4045
        %v4239 = vunpack.c.l.bf16 %v4046
        %v4240 = vunpack.c.l.bf16 %v4047
        %v4241 = vunpack.c.h.bf16 %v4047
        %v4242 = vunpack.c.l.bf16 %v4048
        %v4243 = vunpack.c.h.bf16 %v4048
        %v4244 = vunpack.c.l.bf16 %v4049
        %v4245 = vunpack.c.h.bf16 %v4049
        %v4246 = vunpack.c.l.bf16 %v4050
        %v4248 = vrot.slane %v2151, 4
        %v4249 = vrot.slane %v2152, 4
        %v4251 = vsel %vm1967, %v4249, 0
        %4253 = vmatpush.msra.mxu0 %v4156
        %4254 = vmatpush.msra.mxu0 %v4149
        %4255 = vmatpush.msra.mxu0 %v4142
        %4256 = vmatpush.msra.mxu0 %v4135
        %4257 = vmatpush.msra.mxu0 %v4128
        %4258 = vmatpush.msra.mxu0 %v4121
        %4259 = vmatpush.msra.mxu0 %v4114
        %4260 = vmatpush.msra.mxu0 %v4107
        %4261 = vmatpush.msra.mxu0 %v4100
        %4262 = vmatpush.msra.mxu0 %v4093
        %4263 = vmatpush.msra.mxu0 %v4086
        %4264 = vmatpush.msra.mxu0 %v4079
        %4265 = vmatpush.msra.mxu0 %v4072
        %4266 = vmatpush.msra.mxu0 %v4065
        %4267 = vmatpush.msra.mxu0 %v4058
        %4268 = vmatpush.msra.mxu0 %v4051
        %4269 = vmatmul.f32.gmra.mxu0 %v4248
        %v4270 = vpop.f32.mrf.mxu0
        %v4271 = vadd.f32 0.0, %v4270
        %4272 = vdwg.mxu0
        %4273 = vmatpush.msra.mxu0 0.0
        %4274 = vmatpush.msra.mxu0 0.0
        %4275 = vmatpush.msra.mxu0 0.0
        %4276 = vmatpush.msra.mxu0 0.0
        %4277 = vmatpush.msra.mxu0 %v4240
        %4278 = vmatpush.msra.mxu0 %v4233
        %4279 = vmatpush.msra.mxu0 %v4226
        %4280 = vmatpush.msra.mxu0 %v4219
        %4281 = vmatpush.msra.mxu0 %v4212
        %4282 = vmatpush.msra.mxu0 %v4205
        %4283 = vmatpush.msra.mxu0 %v4198
        %4284 = vmatpush.msra.mxu0 %v4191
        %4285 = vmatpush.msra.mxu0 %v4184
        %4286 = vmatpush.msra.mxu0 %v4177
        %4287 = vmatpush.msra.mxu0 %v4170
        %4288 = vmatpush.msra.mxu0 %v4163
        %4289 = vmatmul.f32.gmra.mxu0 %v4251
        %v4290 = vpop.f32.mrf.mxu0
        %v4291 = vadd.f32 %v4271, %v4290
        %4292 = vdwg.mxu0
        %4293 = vmatpush.msra.mxu0 %v4157
        %4294 = vmatpush.msra.mxu0 %v4150
        %4295 = vmatpush.msra.mxu0 %v4143
        %4296 = vmatpush.msra.mxu0 %v4136
        %4297 = vmatpush.msra.mxu0 %v4129
        %4298 = vmatpush.msra.mxu0 %v4122
        %4299 = vmatpush.msra.mxu0 %v4115
        %4300 = vmatpush.msra.mxu0 %v4108
        %4301 = vmatpush.msra.mxu0 %v4101
        %4302 = vmatpush.msra.mxu0 %v4094
        %4303 = vmatpush.msra.mxu0 %v4087
        %4304 = vmatpush.msra.mxu0 %v4080
        %4305 = vmatpush.msra.mxu0 %v4073
        %4306 = vmatpush.msra.mxu0 %v4066
        %4307 = vmatpush.msra.mxu0 %v4059
        %4308 = vmatpush.msra.mxu0 %v4052
        %4309 = vmatmul.f32.gmra.mxu0 %v4248
        %v4310 = vpop.f32.mrf.mxu0
        %v4311 = vadd.f32 0.0, %v4310
        %4312 = vdwg.mxu0
        %4313 = vmatpush.msra.mxu0 0.0
        %4314 = vmatpush.msra.mxu0 0.0
        %4315 = vmatpush.msra.mxu0 0.0
        %4316 = vmatpush.msra.mxu0 0.0
        %4317 = vmatpush.msra.mxu0 %v4241
        %4318 = vmatpush.msra.mxu0 %v4234
        %4319 = vmatpush.msra.mxu0 %v4227
        %4320 = vmatpush.msra.mxu0 %v4220
        %4321 = vmatpush.msra.mxu0 %v4213
        %4322 = vmatpush.msra.mxu0 %v4206
        %4323 = vmatpush.msra.mxu0 %v4199
        %4324 = vmatpush.msra.mxu0 %v4192
        %4325 = vmatpush.msra.mxu0 %v4185
        %4326 = vmatpush.msra.mxu0 %v4178
        %4327 = vmatpush.msra.mxu0 %v4171
        %4328 = vmatpush.msra.mxu0 %v4164
        %4329 = vmatmul.f32.gmra.mxu0 %v4251
        %v4330 = vpop.f32.mrf.mxu0
        %v4331 = vadd.f32 %v4311, %v4330
        %4332 = vdwg.mxu0
        %4333 = vmatpush.msra.mxu0 %v4158
        %4334 = vmatpush.msra.mxu0 %v4151
        %4335 = vmatpush.msra.mxu0 %v4144
        %4336 = vmatpush.msra.mxu0 %v4137
        %4337 = vmatpush.msra.mxu0 %v4130
        %4338 = vmatpush.msra.mxu0 %v4123
        %4339 = vmatpush.msra.mxu0 %v4116
        %4340 = vmatpush.msra.mxu0 %v4109
        %4341 = vmatpush.msra.mxu0 %v4102
        %4342 = vmatpush.msra.mxu0 %v4095
        %4343 = vmatpush.msra.mxu0 %v4088
        %4344 = vmatpush.msra.mxu0 %v4081
        %4345 = vmatpush.msra.mxu0 %v4074
        %4346 = vmatpush.msra.mxu0 %v4067
        %4347 = vmatpush.msra.mxu0 %v4060
        %4348 = vmatpush.msra.mxu0 %v4053
        %4349 = vmatmul.f32.gmra.mxu0 %v4248
        %v4350 = vpop.f32.mrf.mxu0
        %v4351 = vadd.f32 0.0, %v4350
        %4352 = vdwg.mxu0
        %4353 = vmatpush.msra.mxu0 0.0
        %4354 = vmatpush.msra.mxu0 0.0
        %4355 = vmatpush.msra.mxu0 0.0
        %4356 = vmatpush.msra.mxu0 0.0
        %4357 = vmatpush.msra.mxu0 %v4242
        %4358 = vmatpush.msra.mxu0 %v4235
        %4359 = vmatpush.msra.mxu0 %v4228
        %4360 = vmatpush.msra.mxu0 %v4221
        %4361 = vmatpush.msra.mxu0 %v4214
        %4362 = vmatpush.msra.mxu0 %v4207
        %4363 = vmatpush.msra.mxu0 %v4200
        %4364 = vmatpush.msra.mxu0 %v4193
        %4365 = vmatpush.msra.mxu0 %v4186
        %4366 = vmatpush.msra.mxu0 %v4179
        %4367 = vmatpush.msra.mxu0 %v4172
        %4368 = vmatpush.msra.mxu0 %v4165
        %4369 = vmatmul.f32.gmra.mxu0 %v4251
        %v4370 = vpop.f32.mrf.mxu0
        %v4371 = vadd.f32 %v4351, %v4370
        %4372 = vdwg.mxu0
        %4373 = vmatpush.msra.mxu0 %v4159
        %4374 = vmatpush.msra.mxu0 %v4152
        %4375 = vmatpush.msra.mxu0 %v4145
        %4376 = vmatpush.msra.mxu0 %v4138
        %4377 = vmatpush.msra.mxu0 %v4131
        %4378 = vmatpush.msra.mxu0 %v4124
        %4379 = vmatpush.msra.mxu0 %v4117
        %4380 = vmatpush.msra.mxu0 %v4110
        %4381 = vmatpush.msra.mxu0 %v4103
        %4382 = vmatpush.msra.mxu0 %v4096
        %4383 = vmatpush.msra.mxu0 %v4089
        %4384 = vmatpush.msra.mxu0 %v4082
        %4385 = vmatpush.msra.mxu0 %v4075
        %4386 = vmatpush.msra.mxu0 %v4068
        %4387 = vmatpush.msra.mxu0 %v4061
        %4388 = vmatpush.msra.mxu0 %v4054
        %4389 = vmatmul.f32.gmra.mxu0 %v4248
        %v4390 = vpop.f32.mrf.mxu0
        %v4391 = vadd.f32 0.0, %v4390
        %4392 = vdwg.mxu0
        %4393 = vmatpush.msra.mxu0 0.0
        %4394 = vmatpush.msra.mxu0 0.0
        %4395 = vmatpush.msra.mxu0 0.0
        %4396 = vmatpush.msra.mxu0 0.0
        %4397 = vmatpush.msra.mxu0 %v4243
        %4398 = vmatpush.msra.mxu0 %v4236
        %4399 = vmatpush.msra.mxu0 %v4229
        %4400 = vmatpush.msra.mxu0 %v4222
        %4401 = vmatpush.msra.mxu0 %v4215
        %4402 = vmatpush.msra.mxu0 %v4208
        %4403 = vmatpush.msra.mxu0 %v4201
        %4404 = vmatpush.msra.mxu0 %v4194
        %4405 = vmatpush.msra.mxu0 %v4187
        %4406 = vmatpush.msra.mxu0 %v4180
        %4407 = vmatpush.msra.mxu0 %v4173
        %4408 = vmatpush.msra.mxu0 %v4166
        %4409 = vmatmul.f32.gmra.mxu0 %v4251
        %v4410 = vpop.f32.mrf.mxu0
        %v4411 = vadd.f32 %v4391, %v4410
        %4412 = vdwg.mxu0
        %4413 = vmatpush.msra.mxu0 %v4160
        %4414 = vmatpush.msra.mxu0 %v4153
        %4415 = vmatpush.msra.mxu0 %v4146
        %4416 = vmatpush.msra.mxu0 %v4139
        %4417 = vmatpush.msra.mxu0 %v4132
        %4418 = vmatpush.msra.mxu0 %v4125
        %4419 = vmatpush.msra.mxu0 %v4118
        %4420 = vmatpush.msra.mxu0 %v4111
        %4421 = vmatpush.msra.mxu0 %v4104
        %4422 = vmatpush.msra.mxu0 %v4097
        %4423 = vmatpush.msra.mxu0 %v4090
        %4424 = vmatpush.msra.mxu0 %v4083
        %4425 = vmatpush.msra.mxu0 %v4076
        %4426 = vmatpush.msra.mxu0 %v4069
        %4427 = vmatpush.msra.mxu0 %v4062
        %4428 = vmatpush.msra.mxu0 %v4055
        %4429 = vmatmul.f32.gmra.mxu0 %v4248
        %v4430 = vpop.f32.mrf.mxu0
        %v4431 = vadd.f32 0.0, %v4430
        %4432 = vdwg.mxu0
        %4433 = vmatpush.msra.mxu0 0.0
        %4434 = vmatpush.msra.mxu0 0.0
        %4435 = vmatpush.msra.mxu0 0.0
        %4436 = vmatpush.msra.mxu0 0.0
        %4437 = vmatpush.msra.mxu0 %v4244
        %4438 = vmatpush.msra.mxu0 %v4237
        %4439 = vmatpush.msra.mxu0 %v4230
        %4440 = vmatpush.msra.mxu0 %v4223
        %4441 = vmatpush.msra.mxu0 %v4216
        %4442 = vmatpush.msra.mxu0 %v4209
        %4443 = vmatpush.msra.mxu0 %v4202
        %4444 = vmatpush.msra.mxu0 %v4195
        %4445 = vmatpush.msra.mxu0 %v4188
        %4446 = vmatpush.msra.mxu0 %v4181
        %4447 = vmatpush.msra.mxu0 %v4174
        %4448 = vmatpush.msra.mxu0 %v4167
        %4449 = vmatmul.f32.gmra.mxu0 %v4251
        %v4450 = vpop.f32.mrf.mxu0
        %v4451 = vadd.f32 %v4431, %v4450
        %4452 = vdwg.mxu0
        %4453 = vmatpush.msra.mxu0 %v4161
        %4454 = vmatpush.msra.mxu0 %v4154
        %4455 = vmatpush.msra.mxu0 %v4147
        %4456 = vmatpush.msra.mxu0 %v4140
        %4457 = vmatpush.msra.mxu0 %v4133
        %4458 = vmatpush.msra.mxu0 %v4126
        %4459 = vmatpush.msra.mxu0 %v4119
        %4460 = vmatpush.msra.mxu0 %v4112
        %4461 = vmatpush.msra.mxu0 %v4105
        %4462 = vmatpush.msra.mxu0 %v4098
        %4463 = vmatpush.msra.mxu0 %v4091
        %4464 = vmatpush.msra.mxu0 %v4084
        %4465 = vmatpush.msra.mxu0 %v4077
        %4466 = vmatpush.msra.mxu0 %v4070
        %4467 = vmatpush.msra.mxu0 %v4063
        %4468 = vmatpush.msra.mxu0 %v4056
        %4469 = vmatmul.f32.gmra.mxu0 %v4248
        %v4470 = vpop.f32.mrf.mxu0
        %v4471 = vadd.f32 0.0, %v4470
        %4472 = vdwg.mxu0
        %4473 = vmatpush.msra.mxu0 0.0
        %4474 = vmatpush.msra.mxu0 0.0
        %4475 = vmatpush.msra.mxu0 0.0
        %4476 = vmatpush.msra.mxu0 0.0
        %4477 = vmatpush.msra.mxu0 %v4245
        %4478 = vmatpush.msra.mxu0 %v4238
        %4479 = vmatpush.msra.mxu0 %v4231
        %4480 = vmatpush.msra.mxu0 %v4224
        %4481 = vmatpush.msra.mxu0 %v4217
        %4482 = vmatpush.msra.mxu0 %v4210
        %4483 = vmatpush.msra.mxu0 %v4203
        %4484 = vmatpush.msra.mxu0 %v4196
        %4485 = vmatpush.msra.mxu0 %v4189
        %4486 = vmatpush.msra.mxu0 %v4182
        %4487 = vmatpush.msra.mxu0 %v4175
        %4488 = vmatpush.msra.mxu0 %v4168
        %4489 = vmatmul.f32.gmra.mxu0 %v4251
        %v4490 = vpop.f32.mrf.mxu0
        %v4491 = vadd.f32 %v4471, %v4490
        %4492 = vdwg.mxu0
        %4493 = vmatpush.msra.mxu0 %v4162
        %4494 = vmatpush.msra.mxu0 %v4155
        %4495 = vmatpush.msra.mxu0 %v4148
        %4496 = vmatpush.msra.mxu0 %v4141
        %4497 = vmatpush.msra.mxu0 %v4134
        %4498 = vmatpush.msra.mxu0 %v4127
        %4499 = vmatpush.msra.mxu0 %v4120
        %4500 = vmatpush.msra.mxu0 %v4113
        %4501 = vmatpush.msra.mxu0 %v4106
        %4502 = vmatpush.msra.mxu0 %v4099
        %4503 = vmatpush.msra.mxu0 %v4092
        %4504 = vmatpush.msra.mxu0 %v4085
        %4505 = vmatpush.msra.mxu0 %v4078
        %4506 = vmatpush.msra.mxu0 %v4071
        %4507 = vmatpush.msra.mxu0 %v4064
        %4508 = vmatpush.msra.mxu0 %v4057
        %4509 = vmatmul.f32.gmra.mxu0 %v4248
        %v4510 = vpop.f32.mrf.mxu0
        %v4511 = vadd.f32 0.0, %v4510
        %4512 = vdwg.mxu0
        %4513 = vmatpush.msra.mxu0 0.0
        %4514 = vmatpush.msra.mxu0 0.0
        %4515 = vmatpush.msra.mxu0 0.0
        %4516 = vmatpush.msra.mxu0 0.0
        %4517 = vmatpush.msra.mxu0 %v4246
        %4518 = vmatpush.msra.mxu0 %v4239
        %4519 = vmatpush.msra.mxu0 %v4232
        %4520 = vmatpush.msra.mxu0 %v4225
        %4521 = vmatpush.msra.mxu0 %v4218
        %4522 = vmatpush.msra.mxu0 %v4211
        %4523 = vmatpush.msra.mxu0 %v4204
        %4524 = vmatpush.msra.mxu0 %v4197
        %4525 = vmatpush.msra.mxu0 %v4190
        %4526 = vmatpush.msra.mxu0 %v4183
        %4527 = vmatpush.msra.mxu0 %v4176
        %4528 = vmatpush.msra.mxu0 %v4169
        %4529 = vmatmul.f32.gmra.mxu0 %v4251
        %v4530 = vpop.f32.mrf.mxu0
        %v4531 = vadd.f32 %v4511, %v4530
        %4532 = vdwg.mxu0
        %v4533 = vadd.f32 %v3931, %v4291
        %v4534 = vadd.f32 %v3932, %v4331
        %v4535 = vadd.f32 %v3933, %v4371
        %v4536 = vadd.f32 %v3934, %v4411
        %v4537 = vadd.f32 %v3935, %v4451
        %v4538 = vadd.f32 %v3936, %v4491
        %v4539 = vadd.f32 %v3937, %v4531
        %v4546 = vrot.slane %v4534, 4
        %v4547 = vrot.slane %v4536, 4
        %v4548 = vrot.slane %v4538, 4
        %vm4549 = vcmask 1043456
        %v4550 = vsel %vm4549, %v4533, %v4546
        %v4551 = vsel %vm4549, %v4535, %v4547
        %v4552 = vsel %vm4549, %v4537, %v4548
        %4556 = vst [vmem:[%s521] sm:$0xff] %v4550
        %4557 = vst [vmem:[%s521 + $0x8] sm:$0xff] %v4551
        %4558 = vst [vmem:[%s521 + $0x10] sm:$0xff] %v4552
        %vm4559 = vcmask 125952
        %4560 = vst.msk [vmem:[%s521 + $0x18] sm:$0xf] %vm4559, %v4539
        %s4561 = sand.u32 %s291, 1
        %s4562 = scalar_lea.sflag [#allocation4], %s4561
        %s4563 = sand.u32 %s291, 1
        %s4564 = smul.addr %s4563, 28
        %s4565 = scalar_lea.vmem [#allocation16], %s4564
        // Predicated region
        $region101: #{tpu_custom_call.1} parent=67 // pred_check
          %p4566 = pneg %p301
        $region102: #{tpu_custom_call.1} parent=67 // pred_check_branch
          %4568 = sbr.rel (%p4566) target = $region104
        $region103: #{tpu_custom_call.1} parent=67 // pred_region
          %4570 = vsyncadd %s4562, 0
          %s4571 = smul.addr %s31, 7
          %s4572 = smul.addr %s4571, 4
          %s4573 = scalar_lea.hbm %s12, %s4572
          %s4575 = sshll.u32 %s4565, 4
          %s4576 = int_to_ptr.vmem [resolvable:$true] %s4575
          %s4577 = sshll.u32 %s4573, 4
          %s4578 = int_to_ptr.hbm [resolvable:$true] %s4577
          %4580 = dma.vmem_to_hbm [thread:$0]  %s4576, 448, %s4578, %s4562
        $region104: #{tpu_custom_call.1} parent=67 // pred_fallthru
          _
      $region68: #{tpu_custom_call.1} parent=5 // pred_fallthru
        _
      %p4581 = scmp.le.s32.totalorder 2, %s26
      // Predicated region
      $region105: #{tpu_custom_call.1} parent=5 // pred_check
        %p4582 = pneg %p4581
      $region106: #{tpu_custom_call.1} parent=5 // pred_check_branch
        %4584 = sbr.rel (%p4582) target = $region108
      $region107: #{tpu_custom_call.1} parent=5 // pred_region
        %s4585 = ssub.s32 %s26, 2
        // Predicated region
        $region109: #{tpu_custom_call.1} parent=107 // pred_check
          %p4586 = pneg %p307
        $region110: #{tpu_custom_call.1} parent=107 // pred_check_branch
          %4588 = sbr.rel (%p4586) target = $region112
        $region111: #{tpu_custom_call.1} parent=107 // pred_region
          %s4589 = sand.u32 %s292, 1
          %s4590 = scalar_lea.sflag [#allocation4], %s4589
          %s4591 = sand.u32 %s292, 1
          %s4592 = smul.addr %s4591, 28
          %s4593 = scalar_lea.vmem [#allocation16], %s4592
          %4595 = dma.done %s4590, 448
        $region112: #{tpu_custom_call.1} parent=107 // pred_fallthru
          _
      $region108: #{tpu_custom_call.1} parent=5 // pred_fallthru
        _
    $region6: #{tpu_custom_call.1} parent=1 // loop_footer
      %s30 = sadd.s32 1, %s26
    $region7: #{tpu_custom_call.1} parent=1 // loop_footer_branch
      %25 = sbr.rel target = $region3
    $region8: #{tpu_custom_call.1} parent=1 // loop_exit
      _
    %4596 = vsyncpa [#allocation3], 1
    %s4597 = scalar_lea.sflag [#allocation3], 1
    %4598 = vsyncpa %s4597, 1
    %4599 = vsyncpa [#allocation8], 1
    %4600 = vsyncpa [#allocation11], 1
    %4601 = vsyncpa [#allocation14], 1
    %4602 = vsyncpa [#allocation4], 1
    %s4603 = scalar_lea.sflag [#allocation4], 1
    %4604 = vsyncpa %s4603, 1
    %4605 = vsyncpa [#allocation5], 1
    %s4606 = scalar_lea.sflag [#allocation5], 1
    %4607 = vsyncpa %s4606, 1

</llo_original>
